<compile_context>
chip_gen: v5e
topology: v5e:2x2
jax: 0.10.0
libtpu: 0.0.40
codegen_flags: <defaults>
</compile_context>

<pallas_src>
import functools

import jax
import jax.numpy as jnp
from jax.experimental import pallas as pl
from jax.experimental.pallas import tpu as pltpu


def _convgru_kernel(c_ref, w3_ref, who_ref, b3_ref, mask_ref, o_ref,
                    im1_ref, im2_ref, *, H, W, K, P, Ch, Cc_pad, Ch_pad, Bt):
    """ConvGRU cell, one batch chunk (Bt images) per grid step.

    c_ref   : (Bt, Cc_pad, HW)    combined [h, x, 0-pad] image, f32, HW on lanes
    w3_ref  : (3*Ch, K*K*Cc_pad)  fused gate weights, bf16
                                  rows [0:Ch]=update, [Ch:2Ch]=reset,
                                  [2Ch:3Ch]=out-gate x-part (h columns zeroed)
    who_ref : (Ch, K*K*Ch_pad)    out-gate h-part weights, bf16
    b3_ref  : (3*Ch, 1)           fused gate biases, f32
    mask_ref: (K*K, 1, HW)        0/1 conv boundary masks per tap, f32
    o_ref   : (Bt, Ch, HW)        new hidden state (lane-dense)
    im1_ref : (K*K*Cc_pad, Bt*HW) bf16 im2col scratch for the gate GEMM
    im2_ref : (K*K*Ch_pad, Bt*HW) bf16 im2col scratch for the (h*reset) GEMM
    """
    f32, bf16 = jnp.float32, jnp.bfloat16
    HW = H * W
    KK = K * K

    # Hoisted per-tap boundary masks (bool, (1, HW)); broadcast over channels.
    valid = [mask_ref[i] > 0.5 for i in range(KK)]

    def stage(img, dst_ref, rows, b):
        # img: (rows, HW) f32.  For every tap, rotate the flattened image by
        # the tap's pixel offset (static-shift pltpu.roll on the lane axis),
        # zero the pixels whose receptive field falls outside the image, and
        # store the bf16 band into the im2col scratch.  `rows` and the band
        # offsets are multiples of 16 -> unmasked, tile-aligned stores.
        zero = jnp.zeros_like(img)
        for i in range(KK):
            oy, ox = i // K - P, i % K - P
            off = oy * W + ox                      # flattened tap offset
            shifted = img if off == 0 else pltpu.roll(img, (-off) % HW, axis=1)
            band = shifted if (oy == 0 and ox == 0) else jnp.where(
                valid[i], shifted, zero)
            dst_ref[i * rows:(i + 1) * rows, b * HW:(b + 1) * HW] = (
                band.astype(bf16))

    # ---- pass 1: fused {update, reset, out-gate x-part} GEMM ---------------
    for b in range(Bt):
        stage(c_ref[b], im1_ref, Cc_pad, b)
    acc = jnp.dot(w3_ref[...], im1_ref[...], preferred_element_type=f32)
    acc = acc + b3_ref[...]                        # (3*Ch, Bt*HW) + (3*Ch, 1)
    update = jax.nn.sigmoid(acc[:Ch, :])
    reset = jax.nn.sigmoid(acc[Ch:2 * Ch, :])
    out_x = acc[2 * Ch:, :]

    # ---- pass 2: out-gate (h * reset) contribution --------------------------
    for b in range(Bt):
        hr = c_ref[b, :Ch, :] * reset[:, b * HW:(b + 1) * HW]     # f32
        if Ch_pad != Ch:
            hr = jnp.concatenate(
                [hr, jnp.zeros((Ch_pad - Ch, HW), f32)], axis=0)
        stage(hr, im2_ref, Ch_pad, b)
    out = jnp.tanh(out_x + jnp.dot(who_ref[...], im2_ref[...],
                                   preferred_element_type=f32))

    # ---- GRU state update ----------------------------------------------------
    for b in range(Bt):
        h_b = c_ref[b, :Ch, :]
        u = update[:, b * HW:(b + 1) * HW]
        o = out[:, b * HW:(b + 1) * HW]
        o_ref[b] = (h_b * (1.0 - u) + o * u).astype(o_ref.dtype)


def _flatten_taps(w, c_pad):
    """(O, I, K, K) conv weight -> (O, K*K*c_pad) GEMM weight.

    The input-channel axis is zero-padded to c_pad; the flattened column index
    is tap-major: col = (dy*K + dx) * c_pad + input_channel, matching the row
    layout of the in-kernel im2col scratches.
    """
    o, i, k, _ = w.shape
    w = jnp.pad(w, ((0, 0), (0, c_pad - i), (0, 0), (0, 0)))
    return jnp.transpose(w, (0, 2, 3, 1)).reshape(o, k * k * c_pad)


def convgru_cell_pallas(x, h, wu, wr, wo, bu, br, bo, k, bt=None):
    """ConvGRU cell forward.  PyTorch layouts throughout:
    x: (B, Cin, H, W), h: (B, Ch, H, W),
    wu/wr/wo: (Ch, Cin+Ch, k, k) OIHW conv weights (input order [x, h]),
    bu/br/bo: (Ch,) biases.  Returns new hidden state (B, Ch, H, W)."""
    B, Cin, H, W = x.shape
    Ch = h.shape[1]
    Cc = Cin + Ch
    P = k // 2
    HW = H * W
    KK = k * k
    assert HW % 128 == 0 and Ch % 8 == 0, "demo-shape constraints"

    # Channel counts padded to multiples of 16 so the bf16 im2col band stores
    # in the kernel are tile-aligned.
    Cc_pad = -(-Cc // 16) * 16
    Ch_pad = -(-Ch // 16) * 16

    # Batch folding: Bt images per grid step (GEMM M = Bt*HW), but keep >= 2
    # grid steps when possible so both v7x TensorCores get work.
    if bt is None:
        bt = B // 2 if (B % 2 == 0 and B >= 2) else 1
    assert B % bt == 0
    grid_b = B // bt

    # Combined [h, x] image, channels zero-padded, pixels flattened to lanes.
    c = jnp.concatenate([h, x], axis=1).reshape(B, Cc, HW)
    c = jnp.pad(c, ((0, 0), (0, Cc_pad - Cc), (0, 0)))

    # Fused gate weights.  Input-channel order is [h, x] to match `c`.
    def reorder(w):                                # torch order [x, h] -> [h, x]
        return jnp.concatenate([w[:, Cin:], w[:, :Cin]], axis=1)
    wu_r, wr_r, wo_r = reorder(wu), reorder(wr), reorder(wo)
    wo_x = wo_r.at[:, :Ch].set(0.0)                # out gate: x columns only
    w3 = jnp.concatenate([_flatten_taps(wu_r, Cc_pad),
                          _flatten_taps(wr_r, Cc_pad),
                          _flatten_taps(wo_x, Cc_pad)],
                         axis=0).astype(jnp.bfloat16)             # (3Ch, KK*Cc_pad)
    who = _flatten_taps(wo_r[:, :Ch], Ch_pad).astype(jnp.bfloat16)  # (Ch, KK*Ch_pad)
    b3 = jnp.concatenate([bu, br, bo]).reshape(3 * Ch, 1).astype(jnp.float32)

    # Per-tap 0/1 boundary masks over the flattened pixel axis.
    yy = jnp.arange(H).reshape(H, 1)
    xx = jnp.arange(W).reshape(1, W)
    masks = []
    for i in range(KK):
        oy, ox = i // k - P, i % k - P
        m = ((yy + oy >= 0) & (yy + oy < H) & (xx + ox >= 0) & (xx + ox < W))
        masks.append(m.reshape(1, HW))
    mask = jnp.stack(masks).astype(jnp.float32)                   # (KK, 1, HW)

    kernel = functools.partial(_convgru_kernel, H=H, W=W, K=k, P=P, Ch=Ch,
                               Cc_pad=Cc_pad, Ch_pad=Ch_pad, Bt=bt)

    out = pl.pallas_call(
        kernel,
        out_shape=jax.ShapeDtypeStruct((B, Ch, HW), x.dtype),
        grid=(grid_b,),
        in_specs=[
            pl.BlockSpec((bt, Cc_pad, HW), lambda g: (g, 0, 0)),
            pl.BlockSpec((3 * Ch, KK * Cc_pad), lambda g: (0, 0)),
            pl.BlockSpec((Ch, KK * Ch_pad), lambda g: (0, 0)),
            pl.BlockSpec((3 * Ch, 1), lambda g: (0, 0)),
            pl.BlockSpec((KK, 1, HW), lambda g: (0, 0, 0)),
        ],
        out_specs=pl.BlockSpec((bt, Ch, HW), lambda g: (g, 0, 0)),
        scratch_shapes=[
            pltpu.VMEM((KK * Cc_pad, bt * HW), jnp.bfloat16),   # gate im2col
            pltpu.VMEM((KK * Ch_pad, bt * HW), jnp.bfloat16),   # h*reset im2col
        ],
        compiler_params=pltpu.CompilerParams(
            dimension_semantics=("parallel",)),
    )(c, w3, who, b3, mask)
    return out.reshape(B, Ch, H, W)


# ----------------------- pure-JAX reference (NCHW) -------------------------
def _conv_same(x, w, b):
    y = jax.lax.conv_general_dilated(
        x, w, window_strides=(1, 1), padding="SAME",
        dimension_numbers=("NCHW", "OIHW", "NCHW"))
    return y + b[None, :, None, None]


def convgru_cell_ref(x, h, wu, wr, wo, bu, br, bo):
    combined = jnp.concatenate([x, h], axis=1)
    update = jax.nn.sigmoid(_conv_same(combined, wu, bu))
    reset = jax.nn.sigmoid(_conv_same(combined, wr, br))
    out = jnp.tanh(_conv_same(jnp.concatenate([x, h * reset], axis=1), wo, bo))
    return h * (1.0 - update) + out * update


# ------------- deterministic orthogonal-ish init (nn.init.orthogonal_) -----
def orthogonal_conv(key, out_c, in_c, k):
    n = in_c * k * k
    rows, cols = max(n, out_c), min(n, out_c)
    a = jax.random.normal(key, (rows, cols), jnp.float32)
    q, r = jnp.linalg.qr(a)
    q = q * jnp.sign(jnp.diagonal(r))[None, :]
    w_flat = q.T if n >= out_c else q              # (out_c, in_c*k*k)
    return w_flat.reshape(out_c, in_c, k, k)


if __name__ == "__main__":
    B, Cin, H, W, Ch, K = 2, 4, 16, 16, 32, 3

    key = jax.random.PRNGKey(0)
    kx, kh, ku, kr, ko = jax.random.split(key, 5)

    # PyTorch-convention inputs (NCHW) and conv weights (OIHW, bias = 0).
    x = jax.random.normal(kx, (B, Cin, H, W), jnp.float32)
    h = jax.random.normal(kh, (B, Ch, H, W), jnp.float32)
    wu = orthogonal_conv(ku, Ch, Cin + Ch, K)      # update_gate.weight
    wr = orthogonal_conv(kr, Ch, Cin + Ch, K)      # reset_gate.weight
    wo = orthogonal_conv(ko, Ch, Cin + Ch, K)      # out_gate.weight
    bu = jnp.zeros((Ch,), jnp.float32)             # biases are constant-zero init
    br = jnp.zeros((Ch,), jnp.float32)
    bo = jnp.zeros((Ch,), jnp.float32)

    new_h = convgru_cell_pallas(x, h, wu, wr, wo, bu, br, bo, K)
    new_h = jax.block_until_ready(new_h)

    ref = convgru_cell_ref(x, h, wu, wr, wo, bu, br, bo)
    assert new_h.shape == (B, Ch, H, W)
    # bf16 matmul operands (f32 accumulation / elementwise) -> loosened tol.
    max_err = float(jnp.max(jnp.abs(new_h - ref)))
    assert jnp.allclose(new_h, ref, rtol=3e-2, atol=3e-2), max_err

    print("KERNEL_OK")
</pallas_src>

<mosaic_0001>
module attributes {stable_mosaic.version = 11 : i64} {
  func.func @_convgru_kernel(%arg0: i32, %arg1: memref<1x48x256xf32, #tpu.memory_space<vmem>>, %arg2: memref<96x432xbf16, #tpu.memory_space<vmem>>, %arg3: memref<32x288xbf16, #tpu.memory_space<vmem>>, %arg4: memref<96x1xf32, #tpu.memory_space<vmem>>, %arg5: memref<9x1x256xf32, #tpu.memory_space<vmem>>, %arg6: memref<1x32x256xf32, #tpu.memory_space<vmem>>, %arg7: memref<432x256xbf16, #tpu.memory_space<vmem>>, %arg8: memref<288x256xbf16, #tpu.memory_space<vmem>>) attributes {dimension_semantics = [#tpu.dimension_semantics<parallel>], iteration_bounds = array<i64: 2>, scalar_prefetch = 0 : i64, scratch_operands = 2 : i64, tpu.core_type = #tpu.core_type<tc>, window_params = [{transform_indices = @transform_0, window_bounds = array<i64: 1, 48, 256>}, {pipeline_mode = #tpu.pipeline_mode<synchronous>, transform_indices = @transform_1, window_bounds = array<i64: 96, 432>}, {pipeline_mode = #tpu.pipeline_mode<synchronous>, transform_indices = @transform_2, window_bounds = array<i64: 32, 288>}, {pipeline_mode = #tpu.pipeline_mode<synchronous>, transform_indices = @transform_3, window_bounds = array<i64: 96, 1>}, {pipeline_mode = #tpu.pipeline_mode<synchronous>, transform_indices = @transform_4, window_bounds = array<i64: 9, 1, 256>}, {transform_indices = @transform_5, window_bounds = array<i64: 1, 32, 256>}]} {
    %c0 = arith.constant 0 : index
    %c0_0 = arith.constant 0 : index
    %c0_1 = arith.constant 0 : index
    %0 = vector.load %arg5[%c0, %c0_0, %c0_1] : memref<9x1x256xf32, #tpu.memory_space<vmem>>, vector<1x1x256xf32>
    %1 = vector.shape_cast %0 : vector<1x1x256xf32> to vector<1x256xf32>
    %cst = arith.constant 5.000000e-01 : f32
    %2 = vector.broadcast %cst : f32 to vector<1x256xf32>
    %3 = arith.cmpf ogt, %1, %2 : vector<1x256xf32>
    %c1 = arith.constant 1 : index
    %c0_2 = arith.constant 0 : index
    %c0_3 = arith.constant 0 : index
    %4 = vector.load %arg5[%c1, %c0_2, %c0_3] : memref<9x1x256xf32, #tpu.memory_space<vmem>>, vector<1x1x256xf32>
    %5 = vector.shape_cast %4 : vector<1x1x256xf32> to vector<1x256xf32>
    %cst_4 = arith.constant 5.000000e-01 : f32
    %6 = vector.broadcast %cst_4 : f32 to vector<1x256xf32>
    %7 = arith.cmpf ogt, %5, %6 : vector<1x256xf32>
    %c2 = arith.constant 2 : index
    %c0_5 = arith.constant 0 : index
    %c0_6 = arith.constant 0 : index
    %8 = vector.load %arg5[%c2, %c0_5, %c0_6] : memref<9x1x256xf32, #tpu.memory_space<vmem>>, vector<1x1x256xf32>
    %9 = vector.shape_cast %8 : vector<1x1x256xf32> to vector<1x256xf32>
    %cst_7 = arith.constant 5.000000e-01 : f32
    %10 = vector.broadcast %cst_7 : f32 to vector<1x256xf32>
    %11 = arith.cmpf ogt, %9, %10 : vector<1x256xf32>
    %c3 = arith.constant 3 : index
    %c0_8 = arith.constant 0 : index
    %c0_9 = arith.constant 0 : index
    %12 = vector.load %arg5[%c3, %c0_8, %c0_9] : memref<9x1x256xf32, #tpu.memory_space<vmem>>, vector<1x1x256xf32>
    %13 = vector.shape_cast %12 : vector<1x1x256xf32> to vector<1x256xf32>
    %cst_10 = arith.constant 5.000000e-01 : f32
    %14 = vector.broadcast %cst_10 : f32 to vector<1x256xf32>
    %15 = arith.cmpf ogt, %13, %14 : vector<1x256xf32>
    %c5 = arith.constant 5 : index
    %c0_11 = arith.constant 0 : index
    %c0_12 = arith.constant 0 : index
    %16 = vector.load %arg5[%c5, %c0_11, %c0_12] : memref<9x1x256xf32, #tpu.memory_space<vmem>>, vector<1x1x256xf32>
    %17 = vector.shape_cast %16 : vector<1x1x256xf32> to vector<1x256xf32>
    %cst_13 = arith.constant 5.000000e-01 : f32
    %18 = vector.broadcast %cst_13 : f32 to vector<1x256xf32>
    %19 = arith.cmpf ogt, %17, %18 : vector<1x256xf32>
    %c6 = arith.constant 6 : index
    %c0_14 = arith.constant 0 : index
    %c0_15 = arith.constant 0 : index
    %20 = vector.load %arg5[%c6, %c0_14, %c0_15] : memref<9x1x256xf32, #tpu.memory_space<vmem>>, vector<1x1x256xf32>
    %21 = vector.shape_cast %20 : vector<1x1x256xf32> to vector<1x256xf32>
    %cst_16 = arith.constant 5.000000e-01 : f32
    %22 = vector.broadcast %cst_16 : f32 to vector<1x256xf32>
    %23 = arith.cmpf ogt, %21, %22 : vector<1x256xf32>
    %c7 = arith.constant 7 : index
    %c0_17 = arith.constant 0 : index
    %c0_18 = arith.constant 0 : index
    %24 = vector.load %arg5[%c7, %c0_17, %c0_18] : memref<9x1x256xf32, #tpu.memory_space<vmem>>, vector<1x1x256xf32>
    %25 = vector.shape_cast %24 : vector<1x1x256xf32> to vector<1x256xf32>
    %cst_19 = arith.constant 5.000000e-01 : f32
    %26 = vector.broadcast %cst_19 : f32 to vector<1x256xf32>
    %27 = arith.cmpf ogt, %25, %26 : vector<1x256xf32>
    %c8 = arith.constant 8 : index
    %c0_20 = arith.constant 0 : index
    %c0_21 = arith.constant 0 : index
    %28 = vector.load %arg5[%c8, %c0_20, %c0_21] : memref<9x1x256xf32, #tpu.memory_space<vmem>>, vector<1x1x256xf32>
    %29 = vector.shape_cast %28 : vector<1x1x256xf32> to vector<1x256xf32>
    %cst_22 = arith.constant 5.000000e-01 : f32
    %30 = vector.broadcast %cst_22 : f32 to vector<1x256xf32>
    %31 = arith.cmpf ogt, %29, %30 : vector<1x256xf32>
    %c0_23 = arith.constant 0 : index
    %c0_24 = arith.constant 0 : index
    %c0_25 = arith.constant 0 : index
    %32 = vector.load %arg1[%c0_23, %c0_24, %c0_25] : memref<1x48x256xf32, #tpu.memory_space<vmem>>, vector<1x48x256xf32>
    %33 = vector.shape_cast %32 : vector<1x48x256xf32> to vector<48x256xf32>
    %cst_26 = arith.constant 0.000000e+00 : f32
    %34 = vector.broadcast %cst_26 : f32 to vector<48x256xf32>
    %c17_i32 = arith.constant 17 : i32
    %35 = tpu.dynamic_rotate %33 by %c17_i32 dim 1 : vector<48x256xf32>, i32 -> vector<48x256xf32>
    %36 = vector.shape_cast %3 : vector<1x256xi1> to vector<1x256xi1>
    %37 = vector.broadcast %36 : vector<1x256xi1> to vector<48x256xi1>
    %38 = arith.select %37, %35, %34 : vector<48x256xi1>, vector<48x256xf32>
    %39 = arith.truncf %38 : vector<48x256xf32> to vector<48x256xbf16>
    %c0_27 = arith.constant 0 : index
    %c0_28 = arith.constant 0 : index
    %40 = vector.load %arg7[%c0_27, %c0_28] : memref<432x256xbf16, #tpu.memory_space<vmem>>, vector<48x256xbf16>
    tpu.vector_store %arg7[%c0_27, %c0_28], %39 {strides = array<i32>} : memref<432x256xbf16, #tpu.memory_space<vmem>>, vector<48x256xbf16>,
    %c16_i32 = arith.constant 16 : i32
    %41 = tpu.dynamic_rotate %33 by %c16_i32 dim 1 : vector<48x256xf32>, i32 -> vector<48x256xf32>
    %42 = vector.shape_cast %7 : vector<1x256xi1> to vector<1x256xi1>
    %43 = vector.broadcast %42 : vector<1x256xi1> to vector<48x256xi1>
    %44 = arith.select %43, %41, %34 : vector<48x256xi1>, vector<48x256xf32>
    %45 = arith.truncf %44 : vector<48x256xf32> to vector<48x256xbf16>
    %c48 = arith.constant 48 : index
    %c0_29 = arith.constant 0 : index
    %46 = vector.load %arg7[%c48, %c0_29] : memref<432x256xbf16, #tpu.memory_space<vmem>>, vector<48x256xbf16>
    tpu.vector_store %arg7[%c48, %c0_29], %45 {strides = array<i32>} : memref<432x256xbf16, #tpu.memory_space<vmem>>, vector<48x256xbf16>,
    %c15_i32 = arith.constant 15 : i32
    %47 = tpu.dynamic_rotate %33 by %c15_i32 dim 1 : vector<48x256xf32>, i32 -> vector<48x256xf32>
    %48 = vector.shape_cast %11 : vector<1x256xi1> to vector<1x256xi1>
    %49 = vector.broadcast %48 : vector<1x256xi1> to vector<48x256xi1>
    %50 = arith.select %49, %47, %34 : vector<48x256xi1>, vector<48x256xf32>
    %51 = arith.truncf %50 : vector<48x256xf32> to vector<48x256xbf16>
    %c96 = arith.constant 96 : index
    %c0_30 = arith.constant 0 : index
    %52 = vector.load %arg7[%c96, %c0_30] : memref<432x256xbf16, #tpu.memory_space<vmem>>, vector<48x256xbf16>
    tpu.vector_store %arg7[%c96, %c0_30], %51 {strides = array<i32>} : memref<432x256xbf16, #tpu.memory_space<vmem>>, vector<48x256xbf16>,
    %c1_i32 = arith.constant 1 : i32
    %53 = tpu.dynamic_rotate %33 by %c1_i32 dim 1 : vector<48x256xf32>, i32 -> vector<48x256xf32>
    %54 = vector.shape_cast %15 : vector<1x256xi1> to vector<1x256xi1>
    %55 = vector.broadcast %54 : vector<1x256xi1> to vector<48x256xi1>
    %56 = arith.select %55, %53, %34 : vector<48x256xi1>, vector<48x256xf32>
    %57 = arith.truncf %56 : vector<48x256xf32> to vector<48x256xbf16>
    %c144 = arith.constant 144 : index
    %c0_31 = arith.constant 0 : index
    %58 = vector.load %arg7[%c144, %c0_31] : memref<432x256xbf16, #tpu.memory_space<vmem>>, vector<48x256xbf16>
    tpu.vector_store %arg7[%c144, %c0_31], %57 {strides = array<i32>} : memref<432x256xbf16, #tpu.memory_space<vmem>>, vector<48x256xbf16>,
    %59 = arith.truncf %33 : vector<48x256xf32> to vector<48x256xbf16>
    %c192 = arith.constant 192 : index
    %c0_32 = arith.constant 0 : index
    %60 = vector.load %arg7[%c192, %c0_32] : memref<432x256xbf16, #tpu.memory_space<vmem>>, vector<48x256xbf16>
    tpu.vector_store %arg7[%c192, %c0_32], %59 {strides = array<i32>} : memref<432x256xbf16, #tpu.memory_space<vmem>>, vector<48x256xbf16>,
    %c255_i32 = arith.constant 255 : i32
    %61 = tpu.dynamic_rotate %33 by %c255_i32 dim 1 : vector<48x256xf32>, i32 -> vector<48x256xf32>
    %62 = vector.shape_cast %19 : vector<1x256xi1> to vector<1x256xi1>
    %63 = vector.broadcast %62 : vector<1x256xi1> to vector<48x256xi1>
    %64 = arith.select %63, %61, %34 : vector<48x256xi1>, vector<48x256xf32>
    %65 = arith.truncf %64 : vector<48x256xf32> to vector<48x256xbf16>
    %c240 = arith.constant 240 : index
    %c0_33 = arith.constant 0 : index
    %66 = vector.load %arg7[%c240, %c0_33] : memref<432x256xbf16, #tpu.memory_space<vmem>>, vector<48x256xbf16>
    tpu.vector_store %arg7[%c240, %c0_33], %65 {strides = array<i32>} : memref<432x256xbf16, #tpu.memory_space<vmem>>, vector<48x256xbf16>,
    %c241_i32 = arith.constant 241 : i32
    %67 = tpu.dynamic_rotate %33 by %c241_i32 dim 1 : vector<48x256xf32>, i32 -> vector<48x256xf32>
    %68 = vector.shape_cast %23 : vector<1x256xi1> to vector<1x256xi1>
    %69 = vector.broadcast %68 : vector<1x256xi1> to vector<48x256xi1>
    %70 = arith.select %69, %67, %34 : vector<48x256xi1>, vector<48x256xf32>
    %71 = arith.truncf %70 : vector<48x256xf32> to vector<48x256xbf16>
    %c288 = arith.constant 288 : index
    %c0_34 = arith.constant 0 : index
    %72 = vector.load %arg7[%c288, %c0_34] : memref<432x256xbf16, #tpu.memory_space<vmem>>, vector<48x256xbf16>
    tpu.vector_store %arg7[%c288, %c0_34], %71 {strides = array<i32>} : memref<432x256xbf16, #tpu.memory_space<vmem>>, vector<48x256xbf16>,
    %c240_i32 = arith.constant 240 : i32
    %73 = tpu.dynamic_rotate %33 by %c240_i32 dim 1 : vector<48x256xf32>, i32 -> vector<48x256xf32>
    %74 = vector.shape_cast %27 : vector<1x256xi1> to vector<1x256xi1>
    %75 = vector.broadcast %74 : vector<1x256xi1> to vector<48x256xi1>
    %76 = arith.select %75, %73, %34 : vector<48x256xi1>, vector<48x256xf32>
    %77 = arith.truncf %76 : vector<48x256xf32> to vector<48x256xbf16>
    %c336 = arith.constant 336 : index
    %c0_35 = arith.constant 0 : index
    %78 = vector.load %arg7[%c336, %c0_35] : memref<432x256xbf16, #tpu.memory_space<vmem>>, vector<48x256xbf16>
    tpu.vector_store %arg7[%c336, %c0_35], %77 {strides = array<i32>} : memref<432x256xbf16, #tpu.memory_space<vmem>>, vector<48x256xbf16>,
    %c239_i32 = arith.constant 239 : i32
    %79 = tpu.dynamic_rotate %33 by %c239_i32 dim 1 : vector<48x256xf32>, i32 -> vector<48x256xf32>
    %80 = vector.shape_cast %31 : vector<1x256xi1> to vector<1x256xi1>
    %81 = vector.broadcast %80 : vector<1x256xi1> to vector<48x256xi1>
    %82 = arith.select %81, %79, %34 : vector<48x256xi1>, vector<48x256xf32>
    %83 = arith.truncf %82 : vector<48x256xf32> to vector<48x256xbf16>
    %c384 = arith.constant 384 : index
    %c0_36 = arith.constant 0 : index
    %84 = vector.load %arg7[%c384, %c0_36] : memref<432x256xbf16, #tpu.memory_space<vmem>>, vector<48x256xbf16>
    tpu.vector_store %arg7[%c384, %c0_36], %83 {strides = array<i32>} : memref<432x256xbf16, #tpu.memory_space<vmem>>, vector<48x256xbf16>,
    %c0_37 = arith.constant 0 : index
    %c0_38 = arith.constant 0 : index
    %85 = vector.load %arg2[%c0_37, %c0_38] : memref<96x432xbf16, #tpu.memory_space<vmem>>, vector<96x432xbf16>
    %c0_39 = arith.constant 0 : index
    %c0_40 = arith.constant 0 : index
    %86 = vector.load %arg7[%c0_39, %c0_40] : memref<432x256xbf16, #tpu.memory_space<vmem>>, vector<432x256xbf16>
    %cst_41 = arith.constant dense<0.000000e+00> : vector<96x256xf32>
    %87 = tpu.matmul %85, %86, %cst_41 {dimension_numbers = #tpu.dot_dimension_numbers<[1], [0], [0], [1], [0, 0, 1, 1], [], []>} : vector<96x432xbf16>, vector<432x256xbf16>, vector<96x256xf32> -> vector<96x256xf32>
    %c0_42 = arith.constant 0 : index
    %c0_43 = arith.constant 0 : index
    %88 = vector.load %arg4[%c0_42, %c0_43] : memref<96x1xf32, #tpu.memory_space<vmem>>, vector<96x1xf32>
    %89 = vector.broadcast %88 : vector<96x1xf32> to vector<96x256xf32>
    %90 = arith.addf %87, %89 : vector<96x256xf32>
    %91 = vector.extract_strided_slice %90 {offsets = [0, 0], sizes = [32, 256], strides = [1, 1]} : vector<96x256xf32> to vector<32x256xf32>
    %92 = arith.negf %91 : vector<32x256xf32>
    %93 = math.exp %92 : vector<32x256xf32>
    %cst_44 = arith.constant 1.000000e+00 : f32
    %94 = vector.broadcast %cst_44 : f32 to vector<32x256xf32>
    %95 = arith.addf %94, %93 : vector<32x256xf32>
    %96 = arith.divf %94, %95 : vector<32x256xf32>
    %97 = vector.extract_strided_slice %90 {offsets = [32, 0], sizes = [32, 256], strides = [1, 1]} : vector<96x256xf32> to vector<32x256xf32>
    %98 = arith.negf %97 : vector<32x256xf32>
    %99 = math.exp %98 : vector<32x256xf32>
    %cst_45 = arith.constant 1.000000e+00 : f32
    %100 = vector.broadcast %cst_45 : f32 to vector<32x256xf32>
    %101 = arith.addf %100, %99 : vector<32x256xf32>
    %102 = arith.divf %100, %101 : vector<32x256xf32>
    %103 = vector.extract_strided_slice %90 {offsets = [64, 0], sizes = [32, 256], strides = [1, 1]} : vector<96x256xf32> to vector<32x256xf32>
    %c0_46 = arith.constant 0 : index
    %c0_47 = arith.constant 0 : index
    %c0_48 = arith.constant 0 : index
    %104 = vector.load %arg1[%c0_46, %c0_47, %c0_48] : memref<1x48x256xf32, #tpu.memory_space<vmem>>, vector<1x32x256xf32>
    %105 = vector.shape_cast %104 : vector<1x32x256xf32> to vector<32x256xf32>
    %106 = arith.mulf %105, %102 : vector<32x256xf32>
    %cst_49 = arith.constant 0.000000e+00 : f32
    %107 = vector.broadcast %cst_49 : f32 to vector<32x256xf32>
    %c17_i32_50 = arith.constant 17 : i32
    %108 = tpu.dynamic_rotate %106 by %c17_i32_50 dim 1 : vector<32x256xf32>, i32 -> vector<32x256xf32>
    %109 = vector.shape_cast %3 : vector<1x256xi1> to vector<1x256xi1>
    %110 = vector.broadcast %109 : vector<1x256xi1> to vector<32x256xi1>
    %111 = arith.select %110, %108, %107 : vector<32x256xi1>, vector<32x256xf32>
    %112 = arith.truncf %111 : vector<32x256xf32> to vector<32x256xbf16>
    %c0_51 = arith.constant 0 : index
    %c0_52 = arith.constant 0 : index
    %113 = vector.load %arg8[%c0_51, %c0_52] : memref<288x256xbf16, #tpu.memory_space<vmem>>, vector<32x256xbf16>
    tpu.vector_store %arg8[%c0_51, %c0_52], %112 {strides = array<i32>} : memref<288x256xbf16, #tpu.memory_space<vmem>>, vector<32x256xbf16>,
    %c16_i32_53 = arith.constant 16 : i32
    %114 = tpu.dynamic_rotate %106 by %c16_i32_53 dim 1 : vector<32x256xf32>, i32 -> vector<32x256xf32>
    %115 = vector.shape_cast %7 : vector<1x256xi1> to vector<1x256xi1>
    %116 = vector.broadcast %115 : vector<1x256xi1> to vector<32x256xi1>
    %117 = arith.select %116, %114, %107 : vector<32x256xi1>, vector<32x256xf32>
    %118 = arith.truncf %117 : vector<32x256xf32> to vector<32x256xbf16>
    %c32 = arith.constant 32 : index
    %c0_54 = arith.constant 0 : index
    %119 = vector.load %arg8[%c32, %c0_54] : memref<288x256xbf16, #tpu.memory_space<vmem>>, vector<32x256xbf16>
    tpu.vector_store %arg8[%c32, %c0_54], %118 {strides = array<i32>} : memref<288x256xbf16, #tpu.memory_space<vmem>>, vector<32x256xbf16>,
    %c15_i32_55 = arith.constant 15 : i32
    %120 = tpu.dynamic_rotate %106 by %c15_i32_55 dim 1 : vector<32x256xf32>, i32 -> vector<32x256xf32>
    %121 = vector.shape_cast %11 : vector<1x256xi1> to vector<1x256xi1>
    %122 = vector.broadcast %121 : vector<1x256xi1> to vector<32x256xi1>
    %123 = arith.select %122, %120, %107 : vector<32x256xi1>, vector<32x256xf32>
    %124 = arith.truncf %123 : vector<32x256xf32> to vector<32x256xbf16>
    %c64 = arith.constant 64 : index
    %c0_56 = arith.constant 0 : index
    %125 = vector.load %arg8[%c64, %c0_56] : memref<288x256xbf16, #tpu.memory_space<vmem>>, vector<32x256xbf16>
    tpu.vector_store %arg8[%c64, %c0_56], %124 {strides = array<i32>} : memref<288x256xbf16, #tpu.memory_space<vmem>>, vector<32x256xbf16>,
    %c1_i32_57 = arith.constant 1 : i32
    %126 = tpu.dynamic_rotate %106 by %c1_i32_57 dim 1 : vector<32x256xf32>, i32 -> vector<32x256xf32>
    %127 = vector.shape_cast %15 : vector<1x256xi1> to vector<1x256xi1>
    %128 = vector.broadcast %127 : vector<1x256xi1> to vector<32x256xi1>
    %129 = arith.select %128, %126, %107 : vector<32x256xi1>, vector<32x256xf32>
    %130 = arith.truncf %129 : vector<32x256xf32> to vector<32x256xbf16>
    %c96_58 = arith.constant 96 : index
    %c0_59 = arith.constant 0 : index
    %131 = vector.load %arg8[%c96_58, %c0_59] : memref<288x256xbf16, #tpu.memory_space<vmem>>, vector<32x256xbf16>
    tpu.vector_store %arg8[%c96_58, %c0_59], %130 {strides = array<i32>} : memref<288x256xbf16, #tpu.memory_space<vmem>>, vector<32x256xbf16>,
    %132 = arith.truncf %106 : vector<32x256xf32> to vector<32x256xbf16>
    %c128 = arith.constant 128 : index
    %c0_60 = arith.constant 0 : index
    %133 = vector.load %arg8[%c128, %c0_60] : memref<288x256xbf16, #tpu.memory_space<vmem>>, vector<32x256xbf16>
    tpu.vector_store %arg8[%c128, %c0_60], %132 {strides = array<i32>} : memref<288x256xbf16, #tpu.memory_space<vmem>>, vector<32x256xbf16>,
    %c255_i32_61 = arith.constant 255 : i32
    %134 = tpu.dynamic_rotate %106 by %c255_i32_61 dim 1 : vector<32x256xf32>, i32 -> vector<32x256xf32>
    %135 = vector.shape_cast %19 : vector<1x256xi1> to vector<1x256xi1>
    %136 = vector.broadcast %135 : vector<1x256xi1> to vector<32x256xi1>
    %137 = arith.select %136, %134, %107 : vector<32x256xi1>, vector<32x256xf32>
    %138 = arith.truncf %137 : vector<32x256xf32> to vector<32x256xbf16>
    %c160 = arith.constant 160 : index
    %c0_62 = arith.constant 0 : index
    %139 = vector.load %arg8[%c160, %c0_62] : memref<288x256xbf16, #tpu.memory_space<vmem>>, vector<32x256xbf16>
    tpu.vector_store %arg8[%c160, %c0_62], %138 {strides = array<i32>} : memref<288x256xbf16, #tpu.memory_space<vmem>>, vector<32x256xbf16>,
    %c241_i32_63 = arith.constant 241 : i32
    %140 = tpu.dynamic_rotate %106 by %c241_i32_63 dim 1 : vector<32x256xf32>, i32 -> vector<32x256xf32>
    %141 = vector.shape_cast %23 : vector<1x256xi1> to vector<1x256xi1>
    %142 = vector.broadcast %141 : vector<1x256xi1> to vector<32x256xi1>
    %143 = arith.select %142, %140, %107 : vector<32x256xi1>, vector<32x256xf32>
    %144 = arith.truncf %143 : vector<32x256xf32> to vector<32x256xbf16>
    %c192_64 = arith.constant 192 : index
    %c0_65 = arith.constant 0 : index
    %145 = vector.load %arg8[%c192_64, %c0_65] : memref<288x256xbf16, #tpu.memory_space<vmem>>, vector<32x256xbf16>
    tpu.vector_store %arg8[%c192_64, %c0_65], %144 {strides = array<i32>} : memref<288x256xbf16, #tpu.memory_space<vmem>>, vector<32x256xbf16>,
    %c240_i32_66 = arith.constant 240 : i32
    %146 = tpu.dynamic_rotate %106 by %c240_i32_66 dim 1 : vector<32x256xf32>, i32 -> vector<32x256xf32>
    %147 = vector.shape_cast %27 : vector<1x256xi1> to vector<1x256xi1>
    %148 = vector.broadcast %147 : vector<1x256xi1> to vector<32x256xi1>
    %149 = arith.select %148, %146, %107 : vector<32x256xi1>, vector<32x256xf32>
    %150 = arith.truncf %149 : vector<32x256xf32> to vector<32x256xbf16>
    %c224 = arith.constant 224 : index
    %c0_67 = arith.constant 0 : index
    %151 = vector.load %arg8[%c224, %c0_67] : memref<288x256xbf16, #tpu.memory_space<vmem>>, vector<32x256xbf16>
    tpu.vector_store %arg8[%c224, %c0_67], %150 {strides = array<i32>} : memref<288x256xbf16, #tpu.memory_space<vmem>>, vector<32x256xbf16>,
    %c239_i32_68 = arith.constant 239 : i32
    %152 = tpu.dynamic_rotate %106 by %c239_i32_68 dim 1 : vector<32x256xf32>, i32 -> vector<32x256xf32>
    %153 = vector.shape_cast %31 : vector<1x256xi1> to vector<1x256xi1>
    %154 = vector.broadcast %153 : vector<1x256xi1> to vector<32x256xi1>
    %155 = arith.select %154, %152, %107 : vector<32x256xi1>, vector<32x256xf32>
    %156 = arith.truncf %155 : vector<32x256xf32> to vector<32x256xbf16>
    %c256 = arith.constant 256 : index
    %c0_69 = arith.constant 0 : index
    %157 = vector.load %arg8[%c256, %c0_69] : memref<288x256xbf16, #tpu.memory_space<vmem>>, vector<32x256xbf16>
    tpu.vector_store %arg8[%c256, %c0_69], %156 {strides = array<i32>} : memref<288x256xbf16, #tpu.memory_space<vmem>>, vector<32x256xbf16>,
    %c0_70 = arith.constant 0 : index
    %c0_71 = arith.constant 0 : index
    %158 = vector.load %arg3[%c0_70, %c0_71] : memref<32x288xbf16, #tpu.memory_space<vmem>>, vector<32x288xbf16>
    %c0_72 = arith.constant 0 : index
    %c0_73 = arith.constant 0 : index
    %159 = vector.load %arg8[%c0_72, %c0_73] : memref<288x256xbf16, #tpu.memory_space<vmem>>, vector<288x256xbf16>
    %cst_74 = arith.constant dense<0.000000e+00> : vector<32x256xf32>
    %160 = tpu.matmul %158, %159, %cst_74 {dimension_numbers = #tpu.dot_dimension_numbers<[1], [0], [0], [1], [0, 0, 1, 1], [], []>} : vector<32x288xbf16>, vector<288x256xbf16>, vector<32x256xf32> -> vector<32x256xf32>
    %161 = arith.addf %103, %160 : vector<32x256xf32>
    %162 = math.tanh %161 : vector<32x256xf32>
    %c0_75 = arith.constant 0 : index
    %c0_76 = arith.constant 0 : index
    %c0_77 = arith.constant 0 : index
    %163 = vector.load %arg1[%c0_75, %c0_76, %c0_77] : memref<1x48x256xf32, #tpu.memory_space<vmem>>, vector<1x32x256xf32>
    %164 = vector.shape_cast %163 : vector<1x32x256xf32> to vector<32x256xf32>
    %cst_78 = arith.constant 1.000000e+00 : f32
    %165 = vector.broadcast %cst_78 : f32 to vector<32x256xf32>
    %166 = arith.subf %165, %96 : vector<32x256xf32>
    %167 = arith.mulf %164, %166 : vector<32x256xf32>
    %168 = arith.mulf %162, %96 : vector<32x256xf32>
    %169 = arith.addf %167, %168 : vector<32x256xf32>
    %c0_79 = arith.constant 0 : index
    %c0_80 = arith.constant 0 : index
    %c0_81 = arith.constant 0 : index
    %170 = vector.load %arg6[%c0_79, %c0_80, %c0_81] : memref<1x32x256xf32, #tpu.memory_space<vmem>>, vector<1x32x256xf32>
    %171 = vector.shape_cast %170 : vector<1x32x256xf32> to vector<32x256xf32>
    %172 = vector.shape_cast %169 : vector<32x256xf32> to vector<1x32x256xf32>
    tpu.vector_store %arg6[%c0_79, %c0_80, %c0_81], %172 {strides = array<i32>} : memref<1x32x256xf32, #tpu.memory_space<vmem>>, vector<1x32x256xf32>,
    return
  }
  func.func @transform_0(%arg0: i32) -> (i32, i32, i32) {
    %c0_i32 = arith.constant 0 : i32
    %c0_i32_0 = arith.constant 0 : i32
    %c0_i32_1 = arith.constant 0 : i32
    return %arg0, %c0_i32, %c0_i32_0 : i32, i32, i32
  }
  func.func @transform_1(%arg0: i32) -> (i32, i32) {
    %c0_i32 = arith.constant 0 : i32
    %c0_i32_0 = arith.constant 0 : i32
    %c0_i32_1 = arith.constant 0 : i32
    return %c0_i32, %c0_i32_0 : i32, i32
  }
  func.func @transform_2(%arg0: i32) -> (i32, i32) {
    %c0_i32 = arith.constant 0 : i32
    %c0_i32_0 = arith.constant 0 : i32
    %c0_i32_1 = arith.constant 0 : i32
    return %c0_i32, %c0_i32_0 : i32, i32
  }
  func.func @transform_3(%arg0: i32) -> (i32, i32) {
    %c0_i32 = arith.constant 0 : i32
    %c0_i32_0 = arith.constant 0 : i32
    %c0_i32_1 = arith.constant 0 : i32
    return %c0_i32, %c0_i32_0 : i32, i32
  }
  func.func @transform_4(%arg0: i32) -> (i32, i32, i32) {
    %c0_i32 = arith.constant 0 : i32
    %c0_i32_0 = arith.constant 0 : i32
    %c0_i32_1 = arith.constant 0 : i32
    %c0_i32_2 = arith.constant 0 : i32
    return %c0_i32, %c0_i32_0, %c0_i32_1 : i32, i32, i32
  }
  func.func @transform_5(%arg0: i32) -> (i32, i32, i32) {
    %c0_i32 = arith.constant 0 : i32
    %c0_i32_0 = arith.constant 0 : i32
    %c0_i32_1 = arith.constant 0 : i32
    return %arg0, %c0_i32, %c0_i32_0 : i32, i32, i32
  }
}

</mosaic_0001>

<llo_original>
// kernel: tpu_custom_call.1
$region0: #{tpu_custom_call.1}
  #allocation0 [shape = 'u32[]', space=smem, size = 0x4, offset = 0x4, fixed_abs, tag = 'smem constant byte address 0x4 - core index']
  #allocation1 [shape = 'u32[72,128]{1,0:T(1,128)}', space=vmem, size = 0x9000, scoped, tag = 'internal scratch']
  #allocation2 [shape = 'bf16[432,256]{1,0:T(8,128)(2,1)}', space=vmem, size = 0x36000, scoped, tag = 'scratch operand']
  #allocation3 [shape = 'bf16[288,256]{1,0:T(8,128)(2,1)}', space=vmem, size = 0x24000, scoped, tag = 'scratch operand']
  %s0 = inlined_call_operand.hbm [shape: f32[2,48,256], index: 0, kind: input, shape index: {}]
  %s1 = inlined_call_operand.hbm [shape: bf16[96,432], index: 1, kind: input, shape index: {}]
  %s2 = inlined_call_operand.vmem [shape: bf16[32,288], index: 2, kind: input, shape index: {}]
  %s3 = inlined_call_operand.vmem [shape: f32[96,1], index: 3, kind: input, shape index: {}]
  %s4 = inlined_call_operand.vmem [shape: f32[9,1,256], index: 4, kind: input, shape index: {}]
  %s5 = inlined_call_operand.hbm [shape: f32[2,32,256], index: 5, kind: output, shape index: {}]
  %s6 = sld [smem:[#allocation0]]
  $region61: #{tpu_custom_call.1} parent=0
    _
  %s8 = ssub.s32 1, %s6
  %s9 = scalar_select 0, %s8, %s6
  $region1: #{tpu_custom_call.1} parent=0
    #allocation4 [shape = 'u8[98304]{0}', space=vmem, size = 0x18000, scoped, tag = 'input window, operand 0']
    #allocation5 [shape = 's32[2]{0}', space=sflag, size = 0x8, scoped, tag = 'scoped memory for tpu_custom_call.1']
    #allocation6 [shape = 's32[2]{0}', space=sflag, size = 0x8, scoped, tag = 'scoped memory for tpu_custom_call.1']
    #allocation7 [shape = 'u8[98304]{0}', space=vmem, size = 0x18000, scoped, tag = 'input window, operand 1, single buffered']
    #allocation8 [shape = 's32[1]{0}', space=sflag, size = 0x4, scoped, tag = 'scoped memory for tpu_custom_call.1']
    #allocation9 [shape = 'u8[65536]{0}', space=vmem, size = 0x10000, scoped, tag = 'output window, operand 0']
    %10 = vsyncpa [#allocation5], 0
    %s11 = scalar_lea.sflag [#allocation5], 1
    %12 = vsyncpa %s11, 0
    %13 = vsyncpa [#allocation8], 0
    %14 = vsyncpa [#allocation6], 0
    %s15 = scalar_lea.sflag [#allocation6], 1
    %16 = vsyncpa %s15, 0
    loop: start=0, step=1, limit=4
    $region2: #{tpu_custom_call.1} parent=1 // loop_pre_header
      _
    $region3: #{tpu_custom_call.1} parent=1 // loop_header
      %s18 = sphi 0, %s22
      %p19 = scmp.ge.s32.totalorder %s18, 4
      %s28 = sphi 0, %s30
      %s31 = sphi 0, %s28
      %s32 = sphi 0, %s31
      %s48 = sphi 0, %s32
      %s52 = sphi 0, %s52
      %s54 = sphi 0, %s52
      %s55 = sphi 0, %s54
      %s69 = sphi 0, %s55
      %s73 = sphi 0, %s73
      %s75 = sphi 0, %s73
      %s76 = sphi 0, %s75
      %s90 = sphi 0, %s76
      %s94 = sphi 0, %s94
      %s96 = sphi 0, %s94
      %s97 = sphi 0, %s96
      %s111 = sphi 0, %s97
      %s115 = sphi 0, %s115
      %s117 = sphi 0, %s115
      %s118 = sphi 0, %s117
      %s132 = sphi 0, %s118
      %s138 = sphi 0, %s140
      %s141 = sphi 0, %s138
      %s142 = sphi 0, %s141
      %s158 = sphi 0, %s142
    $region4: #{tpu_custom_call.1} parent=1 // loop_header_branch
      %21 = sbr.rel (%p19) target = $region8
    $region5: #{tpu_custom_call.1} parent=1 // loop_body
      %s23 = ssub.s32 %s18, 1
      %s24 = ssub.s32 %s18, 2
      %s25 = sadd.s32 %s18, 1
      %s26 = ssub.s32 %s18, %s25
      %p27 = scmp.eq.s32.totalorder %s26, 0
      %s29 = sadd.s32 %s28, 1
      %s30 = scalar_select %p27, %s28, %s29
      %p33 = pneg %p27
      %p34 = scmp.eq.s32.totalorder %s18, 1
      %p35 = por %p33, %p34
      %p36 = scmp.ne.s32.totalorder %s28, %s31
      %p37 = scmp.eq.s32.totalorder %s18, 0
      %p38 = por %p36, %p37
      %p39 = scmp.ne.s32.totalorder %s28, %s31
      %p40 = scmp.eq.s32.totalorder %s23, 1
      %p41 = por %p39, %p40
      %p42 = scmp.ne.s32.totalorder %s31, %s32
      %p43 = scmp.eq.s32.totalorder %s23, 0
      %p44 = por %p42, %p43
      %p45 = scmp.ne.s32.totalorder %s31, %s32
      %p46 = scmp.eq.s32.totalorder %s24, 1
      %p47 = por %p45, %p46
      %p49 = scmp.ne.s32.totalorder %s32, %s48
      %p50 = scmp.eq.s32.totalorder %s24, 0
      %p51 = por %p49, %p50
      %s53 = sadd.s32 %s52, 1
      %p56 = scmp.eq.s32.totalorder %s18, 1
      %p57 = scmp.ne.s32.totalorder %s52, %s54
      %p58 = scmp.eq.s32.totalorder %s18, 0
      %p59 = por %p57, %p58
      %p60 = scmp.ne.s32.totalorder %s52, %s54
      %p61 = scmp.eq.s32.totalorder %s23, 1
      %p62 = por %p60, %p61
      %p63 = scmp.ne.s32.totalorder %s54, %s55
      %p64 = scmp.eq.s32.totalorder %s23, 0
      %p65 = por %p63, %p64
      %p66 = scmp.ne.s32.totalorder %s54, %s55
      %p67 = scmp.eq.s32.totalorder %s24, 1
      %p68 = por %p66, %p67
      %p70 = scmp.ne.s32.totalorder %s55, %s69
      %p71 = scmp.eq.s32.totalorder %s24, 0
      %p72 = por %p70, %p71
      %s74 = sadd.s32 %s73, 1
      %p77 = scmp.eq.s32.totalorder %s18, 1
      %p78 = scmp.ne.s32.totalorder %s73, %s75
      %p79 = scmp.eq.s32.totalorder %s18, 0
      %p80 = por %p78, %p79
      %p81 = scmp.ne.s32.totalorder %s73, %s75
      %p82 = scmp.eq.s32.totalorder %s23, 1
      %p83 = por %p81, %p82
      %p84 = scmp.ne.s32.totalorder %s75, %s76
      %p85 = scmp.eq.s32.totalorder %s23, 0
      %p86 = por %p84, %p85
      %p87 = scmp.ne.s32.totalorder %s75, %s76
      %p88 = scmp.eq.s32.totalorder %s24, 1
      %p89 = por %p87, %p88
      %p91 = scmp.ne.s32.totalorder %s76, %s90
      %p92 = scmp.eq.s32.totalorder %s24, 0
      %p93 = por %p91, %p92
      %s95 = sadd.s32 %s94, 1
      %p98 = scmp.eq.s32.totalorder %s18, 1
      %p99 = scmp.ne.s32.totalorder %s94, %s96
      %p100 = scmp.eq.s32.totalorder %s18, 0
      %p101 = por %p99, %p100
      %p102 = scmp.ne.s32.totalorder %s94, %s96
      %p103 = scmp.eq.s32.totalorder %s23, 1
      %p104 = por %p102, %p103
      %p105 = scmp.ne.s32.totalorder %s96, %s97
      %p106 = scmp.eq.s32.totalorder %s23, 0
      %p107 = por %p105, %p106
      %p108 = scmp.ne.s32.totalorder %s96, %s97
      %p109 = scmp.eq.s32.totalorder %s24, 1
      %p110 = por %p108, %p109
      %p112 = scmp.ne.s32.totalorder %s97, %s111
      %p113 = scmp.eq.s32.totalorder %s24, 0
      %p114 = por %p112, %p113
      %s116 = sadd.s32 %s115, 1
      %p119 = scmp.eq.s32.totalorder %s18, 1
      %p120 = scmp.ne.s32.totalorder %s115, %s117
      %p121 = scmp.eq.s32.totalorder %s18, 0
      %p122 = por %p120, %p121
      %p123 = scmp.ne.s32.totalorder %s115, %s117
      %p124 = scmp.eq.s32.totalorder %s23, 1
      %p125 = por %p123, %p124
      %p126 = scmp.ne.s32.totalorder %s117, %s118
      %p127 = scmp.eq.s32.totalorder %s23, 0
      %p128 = por %p126, %p127
      %p129 = scmp.ne.s32.totalorder %s117, %s118
      %p130 = scmp.eq.s32.totalorder %s24, 1
      %p131 = por %p129, %p130
      %p133 = scmp.ne.s32.totalorder %s118, %s132
      %p134 = scmp.eq.s32.totalorder %s24, 0
      %p135 = por %p133, %p134
      %s136 = ssub.s32 %s18, %s25
      %p137 = scmp.eq.s32.totalorder %s136, 0
      %s139 = sadd.s32 %s138, 1
      %s140 = scalar_select %p137, %s138, %s139
      %p143 = pneg %p137
      %p144 = scmp.eq.s32.totalorder %s18, 1
      %p145 = por %p143, %p144
      %p146 = scmp.ne.s32.totalorder %s138, %s141
      %p147 = scmp.eq.s32.totalorder %s18, 0
      %p148 = por %p146, %p147
      %p149 = scmp.ne.s32.totalorder %s138, %s141
      %p150 = scmp.eq.s32.totalorder %s23, 1
      %p151 = por %p149, %p150
      %p152 = scmp.ne.s32.totalorder %s141, %s142
      %p153 = scmp.eq.s32.totalorder %s23, 0
      %p154 = por %p152, %p153
      %p155 = scmp.ne.s32.totalorder %s141, %s142
      %p156 = scmp.eq.s32.totalorder %s24, 1
      %p157 = por %p155, %p156
      %p159 = scmp.ne.s32.totalorder %s142, %s158
      %p160 = scmp.eq.s32.totalorder %s24, 0
      %p161 = por %p159, %p160
      %p162 = scmp.le.s32.totalorder 1, %s18
      %p163 = scmp.lt.s32.totalorder %s18, 3
      %p164 = pnand %p162, %p163
      %p165 = pneg %p164
      // Predicated region
      $region9: #{tpu_custom_call.1} parent=5 // pred_check
        _
      $region10: #{tpu_custom_call.1} parent=5 // pred_check_branch
        %167 = sbr.rel (%p164) target = $region12
      $region11: #{tpu_custom_call.1} parent=5 // pred_region
        %s168 = ssub.s32 %s18, 1
        // Predicated region
        $region13: #{tpu_custom_call.1} parent=11 // pred_check
          %p169 = pneg %p65
        $region14: #{tpu_custom_call.1} parent=11 // pred_check_branch
          %171 = sbr.rel (%p169) target = $region16
        $region15: #{tpu_custom_call.1} parent=11 // pred_region
          %173 = vsyncadd [#allocation8], 0
          %s174 = sshll.u32 %s1, 4
          %s175 = int_to_ptr.hbm [resolvable:$true] %s174
          %s176 = sshll.u32 [#allocation7], 4
          %s177 = int_to_ptr.vmem [resolvable:$true] %s176
          %182 = dma.hbm_to_vmem [thread:$0]  %s175, 3072, %s177, [#allocation8], 256, 256, 16
        $region16: #{tpu_custom_call.1} parent=11 // pred_fallthru
          _
        // Predicated region
        $region17: #{tpu_custom_call.1} parent=11 // pred_check
          %p183 = pneg %p86
        $region18: #{tpu_custom_call.1} parent=11 // pred_check_branch
          %185 = sbr.rel (%p183) target = $region20
        $region19: #{tpu_custom_call.1} parent=11 // pred_region
          _
        $region20: #{tpu_custom_call.1} parent=11 // pred_fallthru
          _
        // Predicated region
        $region21: #{tpu_custom_call.1} parent=11 // pred_check
          %p186 = pneg %p107
        $region22: #{tpu_custom_call.1} parent=11 // pred_check_branch
          %188 = sbr.rel (%p186) target = $region24
        $region23: #{tpu_custom_call.1} parent=11 // pred_region
          _
        $region24: #{tpu_custom_call.1} parent=11 // pred_fallthru
          _
        // Predicated region
        $region25: #{tpu_custom_call.1} parent=11 // pred_check
          %p189 = pneg %p128
        $region26: #{tpu_custom_call.1} parent=11 // pred_check_branch
          %191 = sbr.rel (%p189) target = $region28
        $region27: #{tpu_custom_call.1} parent=11 // pred_region
          _
        $region28: #{tpu_custom_call.1} parent=11 // pred_fallthru
          _
      $region12: #{tpu_custom_call.1} parent=5 // pred_fallthru
        _
      %p192 = scmp.lt.s32.totalorder %s18, 2
      // Predicated region
      $region29: #{tpu_custom_call.1} parent=5 // pred_check
        %p193 = pneg %p192
      $region30: #{tpu_custom_call.1} parent=5 // pred_check_branch
        %195 = sbr.rel (%p193) target = $region32
      $region31: #{tpu_custom_call.1} parent=5 // pred_region
        // Predicated region
        $region33: #{tpu_custom_call.1} parent=31 // pred_check
          %p196 = pneg %p38
        $region34: #{tpu_custom_call.1} parent=31 // pred_check_branch
          %198 = sbr.rel (%p196) target = $region36
        $region35: #{tpu_custom_call.1} parent=31 // pred_region
          %s199 = sand.u32 %s28, 1
          %s200 = scalar_lea.sflag [#allocation5], %s199
          %s201 = sand.u32 %s28, 1
          %s202 = smul.addr %s201, 96
          %s203 = scalar_lea.vmem [#allocation4], %s202
          %205 = vsyncadd %s200, 0
          %s206 = smul.addr %s18, 12
          %s207 = smul.addr %s206, 8
          %s208 = scalar_lea.hbm %s0, %s207
          %s209 = sshll.u32 %s208, 4
          %s210 = int_to_ptr.hbm [resolvable:$true] %s209
          %s211 = sshll.u32 %s203, 4
          %s212 = int_to_ptr.vmem [resolvable:$true] %s211
          %217 = dma.hbm_to_vmem [thread:$0]  %s210, 1536, %s212, %s200, 256, 256, 16
        $region36: #{tpu_custom_call.1} parent=31 // pred_fallthru
          _
      $region32: #{tpu_custom_call.1} parent=5 // pred_fallthru
        _
      %p218 = scmp.le.s32.totalorder 1, %s18
      %p219 = scmp.lt.s32.totalorder %s18, 3
      %p220 = pnand %p218, %p219
      %p221 = pneg %p220
      // Predicated region
      $region37: #{tpu_custom_call.1} parent=5 // pred_check
        _
      $region38: #{tpu_custom_call.1} parent=5 // pred_check_branch
        %223 = sbr.rel (%p220) target = $region40
      $region39: #{tpu_custom_call.1} parent=5 // pred_region
        %s224 = ssub.s32 %s18, 1
        %s225 = sand.u32 %s31, 1
        %s226 = scalar_lea.sflag [#allocation5], %s225
        %s227 = sand.u32 %s31, 1
        %s228 = smul.addr %s227, 96
        %s229 = scalar_lea.vmem [#allocation4], %s228
        // Predicated region
        $region41: #{tpu_custom_call.1} parent=39 // pred_check
          %p230 = pneg %p44
        $region42: #{tpu_custom_call.1} parent=39 // pred_check_branch
          %232 = sbr.rel (%p230) target = $region44
        $region43: #{tpu_custom_call.1} parent=39 // pred_region
          %234 = dma.done %s226, 1536
        $region44: #{tpu_custom_call.1} parent=39 // pred_fallthru
          _
        // Predicated region
        $region45: #{tpu_custom_call.1} parent=39 // pred_check
          %p235 = pneg %p65
        $region46: #{tpu_custom_call.1} parent=39 // pred_check_branch
          %237 = sbr.rel (%p235) target = $region48
        $region47: #{tpu_custom_call.1} parent=39 // pred_region
          %239 = dma.done [#allocation8], 3072
        $region48: #{tpu_custom_call.1} parent=39 // pred_fallthru
          _
        %s240 = sand.u32 %s31, 1
        %s241 = scalar_lea.sflag [#allocation5], %s240
        %s242 = sand.u32 %s31, 1
        %s243 = smul.addr %s242, 96
        %s244 = scalar_lea.vmem [#allocation4], %s243
        %p245 = pneg %p44
        %p246 = pneg %p41
        %p247 = pneg %p65
        %p248 = pneg %p62
        %p249 = pneg %p86
        %p250 = pneg %p83
        %p251 = pneg %p107
        %p252 = pneg %p104
        %p253 = pneg %p128
        %p254 = pneg %p125
        %p255 = pneg %p154
        %p256 = pneg %p151
        %s257 = sand.u32 %s141, 1
        %s258 = scalar_lea.sflag [#allocation6], %s257
        %s259 = sand.u32 %s141, 1
        %s260 = smul.addr %s259, 64
        %s261 = scalar_lea.vmem [#allocation9], %s260
        %v263 = vld [vmem:[%s4] sm:$0x3]
        %vm264 = vcmp.gt.f32.partialorder %v263, 0.5
        %s265 = scalar_lea.vmem %s4, 2
        %v266 = vld [vmem:[%s265] sm:$0x3]
        %vm267 = vcmp.gt.f32.partialorder %v266, 0.5
        %s268 = scalar_lea.vmem %s4, 4
        %v269 = vld [vmem:[%s268] sm:$0x3]
        %vm270 = vcmp.gt.f32.partialorder %v269, 0.5
        %s271 = scalar_lea.vmem %s4, 6
        %v272 = vld [vmem:[%s271] sm:$0x3]
        %vm273 = vcmp.gt.f32.partialorder %v272, 0.5
        %s274 = scalar_lea.vmem %s4, 10
        %v275 = vld [vmem:[%s274] sm:$0x3]
        %vm276 = vcmp.gt.f32.partialorder %v275, 0.5
        %s277 = scalar_lea.vmem %s4, 12
        %v278 = vld [vmem:[%s277] sm:$0x3]
        %vm279 = vcmp.gt.f32.partialorder %v278, 0.5
        %s280 = scalar_lea.vmem %s4, 14
        %v281 = vld [vmem:[%s280] sm:$0x3]
        %vm282 = vcmp.gt.f32.partialorder %v281, 0.5
        %s283 = scalar_lea.vmem %s4, 16
        %v284 = vld [vmem:[%s283] sm:$0x3]
        %vm285 = vcmp.gt.f32.partialorder %v284, 0.5
        %v286 = vld [vmem:[%s229] sm:$0xff]
        %v287 = vld [vmem:[%s229 + $0x8] sm:$0xff]
        %v288 = vld [vmem:[%s229 + $0x10] sm:$0xff]
        %v289 = vld [vmem:[%s229 + $0x18] sm:$0xff]
        %v290 = vld [vmem:[%s229 + $0x20] sm:$0xff]
        %v291 = vld [vmem:[%s229 + $0x28] sm:$0xff]
        %v292 = vld [vmem:[%s229 + $0x30] sm:$0xff]
        %v293 = vld [vmem:[%s229 + $0x38] sm:$0xff]
        %v294 = vld [vmem:[%s229 + $0x40] sm:$0xff]
        %v295 = vld [vmem:[%s229 + $0x48] sm:$0xff]
        %v296 = vld [vmem:[%s229 + $0x50] sm:$0xff]
        %v297 = vld [vmem:[%s229 + $0x58] sm:$0xff]
        %298 = vrot.lane.b32.xlu0 %v286, 17
        %v299 = vpop.permute.xlu0 %298
        %300 = vrot.lane.b32.xlu0 %v288, 17
        %v301 = vpop.permute.xlu0 %300
        %302 = vrot.lane.b32.xlu0 %v290, 17
        %v303 = vpop.permute.xlu0 %302
        %304 = vrot.lane.b32.xlu0 %v292, 17
        %v305 = vpop.permute.xlu0 %304
        %306 = vrot.lane.b32.xlu0 %v294, 17
        %v307 = vpop.permute.xlu0 %306
        %308 = vrot.lane.b32.xlu0 %v296, 17
        %v309 = vpop.permute.xlu0 %308
        %310 = vrot.lane.b32.xlu0 %v287, 17
        %v311 = vpop.permute.xlu0 %310
        %312 = vrot.lane.b32.xlu0 %v289, 17
        %v313 = vpop.permute.xlu0 %312
        %314 = vrot.lane.b32.xlu0 %v291, 17
        %v315 = vpop.permute.xlu0 %314
        %316 = vrot.lane.b32.xlu0 %v293, 17
        %v317 = vpop.permute.xlu0 %316
        %318 = vrot.lane.b32.xlu0 %v295, 17
        %v319 = vpop.permute.xlu0 %318
        %320 = vrot.lane.b32.xlu0 %v297, 17
        %v321 = vpop.permute.xlu0 %320
        %v322 = vlaneseq
        %v323 = vand.u32 %v322, 127
        %vm324 = vcmp.lt.s32.totalorder %v323, 17
        %v325 = vsel %vm324, %v299, %v311
        %v326 = vsel %vm324, %v301, %v313
        %v327 = vsel %vm324, %v303, %v315
        %v328 = vsel %vm324, %v305, %v317
        %v329 = vsel %vm324, %v307, %v319
        %v330 = vsel %vm324, %v309, %v321
        %v331 = vsel %vm324, %v311, %v299
        %v332 = vsel %vm324, %v313, %v301
        %v333 = vsel %vm324, %v315, %v303
        %v334 = vsel %vm324, %v317, %v305
        %v335 = vsel %vm324, %v319, %v307
        %v336 = vsel %vm324, %v321, %v309
        %v337 = vsel %vm264, 1, 0
        %v338 = vperm.slane %v337, 0
        %v339 = vperm.slane %v337, 1
        %vm340 = vcmp.eq.s32.totalorder %v338, 1
        %vm341 = vcmp.eq.s32.totalorder %v339, 1
        %v342 = vsel %vm340, %v331, 0.0
        %v343 = vsel %vm341, %v325, 0.0
        %v344 = vsel %vm340, %v332, 0.0
        %v345 = vsel %vm341, %v326, 0.0
        %v346 = vsel %vm340, %v333, 0.0
        %v347 = vsel %vm341, %v327, 0.0
        %v348 = vsel %vm340, %v334, 0.0
        %v349 = vsel %vm341, %v328, 0.0
        %v350 = vsel %vm340, %v335, 0.0
        %v351 = vsel %vm341, %v329, 0.0
        %v352 = vsel %vm340, %v336, 0.0
        %v353 = vsel %vm341, %v330, 0.0
        %v354 = vpack.c.bf16 %v343, %v342
        %v355 = vpack.c.bf16 %v345, %v344
        %v356 = vpack.c.bf16 %v347, %v346
        %v357 = vpack.c.bf16 %v349, %v348
        %v358 = vpack.c.bf16 %v351, %v350
        %v359 = vpack.c.bf16 %v353, %v352
        %360 = vst [vmem:[#allocation2] sm:$0xff] %v354
        %361 = vst [vmem:[#allocation2 + $0x8] sm:$0xff] %v355
        %362 = vst [vmem:[#allocation2 + $0x10] sm:$0xff] %v356
        %363 = vst [vmem:[#allocation2 + $0x18] sm:$0xff] %v357
        %364 = vst [vmem:[#allocation2 + $0x20] sm:$0xff] %v358
        %365 = vst [vmem:[#allocation2 + $0x28] sm:$0xff] %v359
        %366 = vrot.lane.b32.xlu0 %v286, 16
        %v367 = vpop.permute.xlu0 %366
        %368 = vrot.lane.b32.xlu0 %v288, 16
        %v369 = vpop.permute.xlu0 %368
        %370 = vrot.lane.b32.xlu0 %v290, 16
        %v371 = vpop.permute.xlu0 %370
        %372 = vrot.lane.b32.xlu0 %v292, 16
        %v373 = vpop.permute.xlu0 %372
        %374 = vrot.lane.b32.xlu0 %v294, 16
        %v375 = vpop.permute.xlu0 %374
        %376 = vrot.lane.b32.xlu0 %v296, 16
        %v377 = vpop.permute.xlu0 %376
        %378 = vrot.lane.b32.xlu0 %v287, 16
        %v379 = vpop.permute.xlu0 %378
        %380 = vrot.lane.b32.xlu0 %v289, 16
        %v381 = vpop.permute.xlu0 %380
        %382 = vrot.lane.b32.xlu0 %v291, 16
        %v383 = vpop.permute.xlu0 %382
        %384 = vrot.lane.b32.xlu0 %v293, 16
        %v385 = vpop.permute.xlu0 %384
        %386 = vrot.lane.b32.xlu0 %v295, 16
        %v387 = vpop.permute.xlu0 %386
        %388 = vrot.lane.b32.xlu0 %v297, 16
        %v389 = vpop.permute.xlu0 %388
        %vm390 = vcmp.lt.s32.totalorder %v323, 16
        %v391 = vsel %vm390, %v367, %v379
        %v392 = vsel %vm390, %v369, %v381
        %v393 = vsel %vm390, %v371, %v383
        %v394 = vsel %vm390, %v373, %v385
        %v395 = vsel %vm390, %v375, %v387
        %v396 = vsel %vm390, %v377, %v389
        %v397 = vsel %vm390, %v379, %v367
        %v398 = vsel %vm390, %v381, %v369
        %v399 = vsel %vm390, %v383, %v371
        %v400 = vsel %vm390, %v385, %v373
        %v401 = vsel %vm390, %v387, %v375
        %v402 = vsel %vm390, %v389, %v377
        %v403 = vsel %vm267, 1, 0
        %v404 = vperm.slane %v403, 0
        %v405 = vperm.slane %v403, 1
        %vm406 = vcmp.eq.s32.totalorder %v404, 1
        %vm407 = vcmp.eq.s32.totalorder %v405, 1
        %v408 = vsel %vm406, %v397, 0.0
        %v409 = vsel %vm407, %v391, 0.0
        %v410 = vsel %vm406, %v398, 0.0
        %v411 = vsel %vm407, %v392, 0.0
        %v412 = vsel %vm406, %v399, 0.0
        %v413 = vsel %vm407, %v393, 0.0
        %v414 = vsel %vm406, %v400, 0.0
        %v415 = vsel %vm407, %v394, 0.0
        %v416 = vsel %vm406, %v401, 0.0
        %v417 = vsel %vm407, %v395, 0.0
        %v418 = vsel %vm406, %v402, 0.0
        %v419 = vsel %vm407, %v396, 0.0
        %v420 = vpack.c.bf16 %v409, %v408
        %v421 = vpack.c.bf16 %v411, %v410
        %v422 = vpack.c.bf16 %v413, %v412
        %v423 = vpack.c.bf16 %v415, %v414
        %v424 = vpack.c.bf16 %v417, %v416
        %v425 = vpack.c.bf16 %v419, %v418
        %426 = vst [vmem:[#allocation2 + $0x30] sm:$0xff] %v420
        %427 = vst [vmem:[#allocation2 + $0x38] sm:$0xff] %v421
        %428 = vst [vmem:[#allocation2 + $0x40] sm:$0xff] %v422
        %429 = vst [vmem:[#allocation2 + $0x48] sm:$0xff] %v423
        %430 = vst [vmem:[#allocation2 + $0x50] sm:$0xff] %v424
        %431 = vst [vmem:[#allocation2 + $0x58] sm:$0xff] %v425
        %432 = vrot.lane.b32.xlu0 %v286, 15
        %v433 = vpop.permute.xlu0 %432
        %434 = vrot.lane.b32.xlu0 %v288, 15
        %v435 = vpop.permute.xlu0 %434
        %436 = vrot.lane.b32.xlu0 %v290, 15
        %v437 = vpop.permute.xlu0 %436
        %438 = vrot.lane.b32.xlu0 %v292, 15
        %v439 = vpop.permute.xlu0 %438
        %440 = vrot.lane.b32.xlu0 %v294, 15
        %v441 = vpop.permute.xlu0 %440
        %442 = vrot.lane.b32.xlu0 %v296, 15
        %v443 = vpop.permute.xlu0 %442
        %444 = vrot.lane.b32.xlu0 %v287, 15
        %v445 = vpop.permute.xlu0 %444
        %446 = vrot.lane.b32.xlu0 %v289, 15
        %v447 = vpop.permute.xlu0 %446
        %448 = vrot.lane.b32.xlu0 %v291, 15
        %v449 = vpop.permute.xlu0 %448
        %450 = vrot.lane.b32.xlu0 %v293, 15
        %v451 = vpop.permute.xlu0 %450
        %452 = vrot.lane.b32.xlu0 %v295, 15
        %v453 = vpop.permute.xlu0 %452
        %454 = vrot.lane.b32.xlu0 %v297, 15
        %v455 = vpop.permute.xlu0 %454
        %vm456 = vcmp.lt.s32.totalorder %v323, 15
        %v457 = vsel %vm456, %v433, %v445
        %v458 = vsel %vm456, %v435, %v447
        %v459 = vsel %vm456, %v437, %v449
        %v460 = vsel %vm456, %v439, %v451
        %v461 = vsel %vm456, %v441, %v453
        %v462 = vsel %vm456, %v443, %v455
        %v463 = vsel %vm456, %v445, %v433
        %v464 = vsel %vm456, %v447, %v435
        %v465 = vsel %vm456, %v449, %v437
        %v466 = vsel %vm456, %v451, %v439
        %v467 = vsel %vm456, %v453, %v441
        %v468 = vsel %vm456, %v455, %v443
        %v469 = vsel %vm270, 1, 0
        %v470 = vperm.slane %v469, 0
        %v471 = vperm.slane %v469, 1
        %vm472 = vcmp.eq.s32.totalorder %v470, 1
        %vm473 = vcmp.eq.s32.totalorder %v471, 1
        %v474 = vsel %vm472, %v463, 0.0
        %v475 = vsel %vm473, %v457, 0.0
        %v476 = vsel %vm472, %v464, 0.0
        %v477 = vsel %vm473, %v458, 0.0
        %v478 = vsel %vm472, %v465, 0.0
        %v479 = vsel %vm473, %v459, 0.0
        %v480 = vsel %vm472, %v466, 0.0
        %v481 = vsel %vm473, %v460, 0.0
        %v482 = vsel %vm472, %v467, 0.0
        %v483 = vsel %vm473, %v461, 0.0
        %v484 = vsel %vm472, %v468, 0.0
        %v485 = vsel %vm473, %v462, 0.0
        %v486 = vpack.c.bf16 %v475, %v474
        %v487 = vpack.c.bf16 %v477, %v476
        %v488 = vpack.c.bf16 %v479, %v478
        %v489 = vpack.c.bf16 %v481, %v480
        %v490 = vpack.c.bf16 %v483, %v482
        %v491 = vpack.c.bf16 %v485, %v484
        %492 = vst [vmem:[#allocation2 + $0x60] sm:$0xff] %v486
        %493 = vst [vmem:[#allocation2 + $0x68] sm:$0xff] %v487
        %494 = vst [vmem:[#allocation2 + $0x70] sm:$0xff] %v488
        %495 = vst [vmem:[#allocation2 + $0x78] sm:$0xff] %v489
        %496 = vst [vmem:[#allocation2 + $0x80] sm:$0xff] %v490
        %497 = vst [vmem:[#allocation2 + $0x88] sm:$0xff] %v491
        %498 = vrot.lane.b32.xlu0 %v286, 1
        %v499 = vpop.permute.xlu0 %498
        %500 = vrot.lane.b32.xlu0 %v288, 1
        %v501 = vpop.permute.xlu0 %500
        %502 = vrot.lane.b32.xlu0 %v290, 1
        %v503 = vpop.permute.xlu0 %502
        %504 = vrot.lane.b32.xlu0 %v292, 1
        %v505 = vpop.permute.xlu0 %504
        %506 = vrot.lane.b32.xlu0 %v294, 1
        %v507 = vpop.permute.xlu0 %506
        %508 = vrot.lane.b32.xlu0 %v296, 1
        %v509 = vpop.permute.xlu0 %508
        %510 = vrot.lane.b32.xlu0 %v287, 1
        %v511 = vpop.permute.xlu0 %510
        %512 = vrot.lane.b32.xlu0 %v289, 1
        %v513 = vpop.permute.xlu0 %512
        %514 = vrot.lane.b32.xlu0 %v291, 1
        %v515 = vpop.permute.xlu0 %514
        %516 = vrot.lane.b32.xlu0 %v293, 1
        %v517 = vpop.permute.xlu0 %516
        %518 = vrot.lane.b32.xlu0 %v295, 1
        %v519 = vpop.permute.xlu0 %518
        %520 = vrot.lane.b32.xlu0 %v297, 1
        %v521 = vpop.permute.xlu0 %520
        %vm522 = vcmp.lt.s32.totalorder %v323, 1
        %v523 = vsel %vm522, %v499, %v511
        %v524 = vsel %vm522, %v501, %v513
        %v525 = vsel %vm522, %v503, %v515
        %v526 = vsel %vm522, %v505, %v517
        %v527 = vsel %vm522, %v507, %v519
        %v528 = vsel %vm522, %v509, %v521
        %v529 = vsel %vm522, %v511, %v499
        %v530 = vsel %vm522, %v513, %v501
        %v531 = vsel %vm522, %v515, %v503
        %v532 = vsel %vm522, %v517, %v505
        %v533 = vsel %vm522, %v519, %v507
        %v534 = vsel %vm522, %v521, %v509
        %v535 = vsel %vm273, 1, 0
        %v536 = vperm.slane %v535, 0
        %v537 = vperm.slane %v535, 1
        %vm538 = vcmp.eq.s32.totalorder %v536, 1
        %vm539 = vcmp.eq.s32.totalorder %v537, 1
        %v540 = vsel %vm538, %v529, 0.0
        %v541 = vsel %vm539, %v523, 0.0
        %v542 = vsel %vm538, %v530, 0.0
        %v543 = vsel %vm539, %v524, 0.0
        %v544 = vsel %vm538, %v531, 0.0
        %v545 = vsel %vm539, %v525, 0.0
        %v546 = vsel %vm538, %v532, 0.0
        %v547 = vsel %vm539, %v526, 0.0
        %v548 = vsel %vm538, %v533, 0.0
        %v549 = vsel %vm539, %v527, 0.0
        %v550 = vsel %vm538, %v534, 0.0
        %v551 = vsel %vm539, %v528, 0.0
        %v552 = vpack.c.bf16 %v541, %v540
        %v553 = vpack.c.bf16 %v543, %v542
        %v554 = vpack.c.bf16 %v545, %v544
        %v555 = vpack.c.bf16 %v547, %v546
        %v556 = vpack.c.bf16 %v549, %v548
        %v557 = vpack.c.bf16 %v551, %v550
        %558 = vst [vmem:[#allocation2 + $0x90] sm:$0xff] %v552
        %559 = vst [vmem:[#allocation2 + $0x98] sm:$0xff] %v553
        %560 = vst [vmem:[#allocation2 + $0xa0] sm:$0xff] %v554
        %561 = vst [vmem:[#allocation2 + $0xa8] sm:$0xff] %v555
        %562 = vst [vmem:[#allocation2 + $0xb0] sm:$0xff] %v556
        %563 = vst [vmem:[#allocation2 + $0xb8] sm:$0xff] %v557
        %v564 = vpack.c.bf16 %v287, %v286
        %v565 = vpack.c.bf16 %v289, %v288
        %v566 = vpack.c.bf16 %v291, %v290
        %v567 = vpack.c.bf16 %v293, %v292
        %v568 = vpack.c.bf16 %v295, %v294
        %v569 = vpack.c.bf16 %v297, %v296
        %570 = vst [vmem:[#allocation2 + $0xc0] sm:$0xff] %v564
        %571 = vst [vmem:[#allocation2 + $0xc8] sm:$0xff] %v565
        %572 = vst [vmem:[#allocation2 + $0xd0] sm:$0xff] %v566
        %573 = vst [vmem:[#allocation2 + $0xd8] sm:$0xff] %v567
        %574 = vst [vmem:[#allocation2 + $0xe0] sm:$0xff] %v568
        %575 = vst [vmem:[#allocation2 + $0xe8] sm:$0xff] %v569
        %576 = vrot.lane.b32.xlu0 %v286, 127
        %v577 = vpop.permute.xlu0 %576
        %578 = vrot.lane.b32.xlu0 %v288, 127
        %v579 = vpop.permute.xlu0 %578
        %580 = vrot.lane.b32.xlu0 %v290, 127
        %v581 = vpop.permute.xlu0 %580
        %582 = vrot.lane.b32.xlu0 %v292, 127
        %v583 = vpop.permute.xlu0 %582
        %584 = vrot.lane.b32.xlu0 %v294, 127
        %v585 = vpop.permute.xlu0 %584
        %586 = vrot.lane.b32.xlu0 %v296, 127
        %v587 = vpop.permute.xlu0 %586
        %588 = vrot.lane.b32.xlu0 %v287, 127
        %v589 = vpop.permute.xlu0 %588
        %590 = vrot.lane.b32.xlu0 %v289, 127
        %v591 = vpop.permute.xlu0 %590
        %592 = vrot.lane.b32.xlu0 %v291, 127
        %v593 = vpop.permute.xlu0 %592
        %594 = vrot.lane.b32.xlu0 %v293, 127
        %v595 = vpop.permute.xlu0 %594
        %596 = vrot.lane.b32.xlu0 %v295, 127
        %v597 = vpop.permute.xlu0 %596
        %598 = vrot.lane.b32.xlu0 %v297, 127
        %v599 = vpop.permute.xlu0 %598
        %vm600 = vcmp.lt.s32.totalorder %v323, 127
        %v601 = vsel %vm600, %v577, %v589
        %v602 = vsel %vm600, %v579, %v591
        %v603 = vsel %vm600, %v581, %v593
        %v604 = vsel %vm600, %v583, %v595
        %v605 = vsel %vm600, %v585, %v597
        %v606 = vsel %vm600, %v587, %v599
        %v607 = vsel %vm600, %v589, %v577
        %v608 = vsel %vm600, %v591, %v579
        %v609 = vsel %vm600, %v593, %v581
        %v610 = vsel %vm600, %v595, %v583
        %v611 = vsel %vm600, %v597, %v585
        %v612 = vsel %vm600, %v599, %v587
        %v613 = vsel %vm276, 1, 0
        %v614 = vperm.slane %v613, 0
        %v615 = vperm.slane %v613, 1
        %vm616 = vcmp.eq.s32.totalorder %v614, 1
        %vm617 = vcmp.eq.s32.totalorder %v615, 1
        %v618 = vsel %vm616, %v601, 0.0
        %v619 = vsel %vm617, %v607, 0.0
        %v620 = vsel %vm616, %v602, 0.0
        %v621 = vsel %vm617, %v608, 0.0
        %v622 = vsel %vm616, %v603, 0.0
        %v623 = vsel %vm617, %v609, 0.0
        %v624 = vsel %vm616, %v604, 0.0
        %v625 = vsel %vm617, %v610, 0.0
        %v626 = vsel %vm616, %v605, 0.0
        %v627 = vsel %vm617, %v611, 0.0
        %v628 = vsel %vm616, %v606, 0.0
        %v629 = vsel %vm617, %v612, 0.0
        %v630 = vpack.c.bf16 %v619, %v618
        %v631 = vpack.c.bf16 %v621, %v620
        %v632 = vpack.c.bf16 %v623, %v622
        %v633 = vpack.c.bf16 %v625, %v624
        %v634 = vpack.c.bf16 %v627, %v626
        %v635 = vpack.c.bf16 %v629, %v628
        %636 = vst [vmem:[#allocation2 + $0xf0] sm:$0xff] %v630
        %637 = vst [vmem:[#allocation2 + $0xf8] sm:$0xff] %v631
        %638 = vst [vmem:[#allocation2 + $0x100] sm:$0xff] %v632
        %639 = vst [vmem:[#allocation2 + $0x108] sm:$0xff] %v633
        %640 = vst [vmem:[#allocation2 + $0x110] sm:$0xff] %v634
        %641 = vst [vmem:[#allocation2 + $0x118] sm:$0xff] %v635
        %642 = vrot.lane.b32.xlu0 %v286, 113
        %v643 = vpop.permute.xlu0 %642
        %644 = vrot.lane.b32.xlu0 %v288, 113
        %v645 = vpop.permute.xlu0 %644
        %646 = vrot.lane.b32.xlu0 %v290, 113
        %v647 = vpop.permute.xlu0 %646
        %648 = vrot.lane.b32.xlu0 %v292, 113
        %v649 = vpop.permute.xlu0 %648
        %650 = vrot.lane.b32.xlu0 %v294, 113
        %v651 = vpop.permute.xlu0 %650
        %652 = vrot.lane.b32.xlu0 %v296, 113
        %v653 = vpop.permute.xlu0 %652
        %654 = vrot.lane.b32.xlu0 %v287, 113
        %v655 = vpop.permute.xlu0 %654
        %656 = vrot.lane.b32.xlu0 %v289, 113
        %v657 = vpop.permute.xlu0 %656
        %658 = vrot.lane.b32.xlu0 %v291, 113
        %v659 = vpop.permute.xlu0 %658
        %660 = vrot.lane.b32.xlu0 %v293, 113
        %v661 = vpop.permute.xlu0 %660
        %662 = vrot.lane.b32.xlu0 %v295, 113
        %v663 = vpop.permute.xlu0 %662
        %664 = vrot.lane.b32.xlu0 %v297, 113
        %v665 = vpop.permute.xlu0 %664
        %vm666 = vcmp.lt.s32.totalorder %v323, 113
        %v667 = vsel %vm666, %v643, %v655
        %v668 = vsel %vm666, %v645, %v657
        %v669 = vsel %vm666, %v647, %v659
        %v670 = vsel %vm666, %v649, %v661
        %v671 = vsel %vm666, %v651, %v663
        %v672 = vsel %vm666, %v653, %v665
        %v673 = vsel %vm666, %v655, %v643
        %v674 = vsel %vm666, %v657, %v645
        %v675 = vsel %vm666, %v659, %v647
        %v676 = vsel %vm666, %v661, %v649
        %v677 = vsel %vm666, %v663, %v651
        %v678 = vsel %vm666, %v665, %v653
        %v679 = vsel %vm279, 1, 0
        %v680 = vperm.slane %v679, 0
        %v681 = vperm.slane %v679, 1
        %vm682 = vcmp.eq.s32.totalorder %v680, 1
        %vm683 = vcmp.eq.s32.totalorder %v681, 1
        %v684 = vsel %vm682, %v667, 0.0
        %v685 = vsel %vm683, %v673, 0.0
        %v686 = vsel %vm682, %v668, 0.0
        %v687 = vsel %vm683, %v674, 0.0
        %v688 = vsel %vm682, %v669, 0.0
        %v689 = vsel %vm683, %v675, 0.0
        %v690 = vsel %vm682, %v670, 0.0
        %v691 = vsel %vm683, %v676, 0.0
        %v692 = vsel %vm682, %v671, 0.0
        %v693 = vsel %vm683, %v677, 0.0
        %v694 = vsel %vm682, %v672, 0.0
        %v695 = vsel %vm683, %v678, 0.0
        %v696 = vpack.c.bf16 %v685, %v684
        %v697 = vpack.c.bf16 %v687, %v686
        %v698 = vpack.c.bf16 %v689, %v688
        %v699 = vpack.c.bf16 %v691, %v690
        %v700 = vpack.c.bf16 %v693, %v692
        %v701 = vpack.c.bf16 %v695, %v694
        %702 = vst [vmem:[#allocation2 + $0x120] sm:$0xff] %v696
        %703 = vst [vmem:[#allocation2 + $0x128] sm:$0xff] %v697
        %704 = vst [vmem:[#allocation2 + $0x130] sm:$0xff] %v698
        %705 = vst [vmem:[#allocation2 + $0x138] sm:$0xff] %v699
        %706 = vst [vmem:[#allocation2 + $0x140] sm:$0xff] %v700
        %707 = vst [vmem:[#allocation2 + $0x148] sm:$0xff] %v701
        %708 = vrot.lane.b32.xlu0 %v286, 112
        %v709 = vpop.permute.xlu0 %708
        %710 = vrot.lane.b32.xlu0 %v288, 112
        %v711 = vpop.permute.xlu0 %710
        %712 = vrot.lane.b32.xlu0 %v290, 112
        %v713 = vpop.permute.xlu0 %712
        %714 = vrot.lane.b32.xlu0 %v292, 112
        %v715 = vpop.permute.xlu0 %714
        %716 = vrot.lane.b32.xlu0 %v294, 112
        %v717 = vpop.permute.xlu0 %716
        %718 = vrot.lane.b32.xlu0 %v296, 112
        %v719 = vpop.permute.xlu0 %718
        %720 = vrot.lane.b32.xlu0 %v287, 112
        %v721 = vpop.permute.xlu0 %720
        %722 = vrot.lane.b32.xlu0 %v289, 112
        %v723 = vpop.permute.xlu0 %722
        %724 = vrot.lane.b32.xlu0 %v291, 112
        %v725 = vpop.permute.xlu0 %724
        %726 = vrot.lane.b32.xlu0 %v293, 112
        %v727 = vpop.permute.xlu0 %726
        %728 = vrot.lane.b32.xlu0 %v295, 112
        %v729 = vpop.permute.xlu0 %728
        %730 = vrot.lane.b32.xlu0 %v297, 112
        %v731 = vpop.permute.xlu0 %730
        %vm732 = vcmp.lt.s32.totalorder %v323, 112
        %v733 = vsel %vm732, %v709, %v721
        %v734 = vsel %vm732, %v711, %v723
        %v735 = vsel %vm732, %v713, %v725
        %v736 = vsel %vm732, %v715, %v727
        %v737 = vsel %vm732, %v717, %v729
        %v738 = vsel %vm732, %v719, %v731
        %v739 = vsel %vm732, %v721, %v709
        %v740 = vsel %vm732, %v723, %v711
        %v741 = vsel %vm732, %v725, %v713
        %v742 = vsel %vm732, %v727, %v715
        %v743 = vsel %vm732, %v729, %v717
        %v744 = vsel %vm732, %v731, %v719
        %v745 = vsel %vm282, 1, 0
        %v746 = vperm.slane %v745, 0
        %v747 = vperm.slane %v745, 1
        %vm748 = vcmp.eq.s32.totalorder %v746, 1
        %vm749 = vcmp.eq.s32.totalorder %v747, 1
        %v750 = vsel %vm748, %v733, 0.0
        %v751 = vsel %vm749, %v739, 0.0
        %v752 = vsel %vm748, %v734, 0.0
        %v753 = vsel %vm749, %v740, 0.0
        %v754 = vsel %vm748, %v735, 0.0
        %v755 = vsel %vm749, %v741, 0.0
        %v756 = vsel %vm748, %v736, 0.0
        %v757 = vsel %vm749, %v742, 0.0
        %v758 = vsel %vm748, %v737, 0.0
        %v759 = vsel %vm749, %v743, 0.0
        %v760 = vsel %vm748, %v738, 0.0
        %v761 = vsel %vm749, %v744, 0.0
        %v762 = vpack.c.bf16 %v751, %v750
        %v763 = vpack.c.bf16 %v753, %v752
        %v764 = vpack.c.bf16 %v755, %v754
        %v765 = vpack.c.bf16 %v757, %v756
        %v766 = vpack.c.bf16 %v759, %v758
        %v767 = vpack.c.bf16 %v761, %v760
        %768 = vst [vmem:[#allocation2 + $0x150] sm:$0xff] %v762
        %769 = vst [vmem:[#allocation2 + $0x158] sm:$0xff] %v763
        %770 = vst [vmem:[#allocation2 + $0x160] sm:$0xff] %v764
        %771 = vst [vmem:[#allocation2 + $0x168] sm:$0xff] %v765
        %772 = vst [vmem:[#allocation2 + $0x170] sm:$0xff] %v766
        %773 = vst [vmem:[#allocation2 + $0x178] sm:$0xff] %v767
        %774 = vrot.lane.b32.xlu0 %v286, 111
        %v775 = vpop.permute.xlu0 %774
        %776 = vrot.lane.b32.xlu0 %v288, 111
        %v777 = vpop.permute.xlu0 %776
        %778 = vrot.lane.b32.xlu0 %v290, 111
        %v779 = vpop.permute.xlu0 %778
        %780 = vrot.lane.b32.xlu0 %v292, 111
        %v781 = vpop.permute.xlu0 %780
        %782 = vrot.lane.b32.xlu0 %v294, 111
        %v783 = vpop.permute.xlu0 %782
        %784 = vrot.lane.b32.xlu0 %v296, 111
        %v785 = vpop.permute.xlu0 %784
        %786 = vrot.lane.b32.xlu0 %v287, 111
        %v787 = vpop.permute.xlu0 %786
        %788 = vrot.lane.b32.xlu0 %v289, 111
        %v789 = vpop.permute.xlu0 %788
        %790 = vrot.lane.b32.xlu0 %v291, 111
        %v791 = vpop.permute.xlu0 %790
        %792 = vrot.lane.b32.xlu0 %v293, 111
        %v793 = vpop.permute.xlu0 %792
        %794 = vrot.lane.b32.xlu0 %v295, 111
        %v795 = vpop.permute.xlu0 %794
        %796 = vrot.lane.b32.xlu0 %v297, 111
        %v797 = vpop.permute.xlu0 %796
        %vm798 = vcmp.lt.s32.totalorder %v323, 111
        %v799 = vsel %vm798, %v775, %v787
        %v800 = vsel %vm798, %v777, %v789
        %v801 = vsel %vm798, %v779, %v791
        %v802 = vsel %vm798, %v781, %v793
        %v803 = vsel %vm798, %v783, %v795
        %v804 = vsel %vm798, %v785, %v797
        %v805 = vsel %vm798, %v787, %v775
        %v806 = vsel %vm798, %v789, %v777
        %v807 = vsel %vm798, %v791, %v779
        %v808 = vsel %vm798, %v793, %v781
        %v809 = vsel %vm798, %v795, %v783
        %v810 = vsel %vm798, %v797, %v785
        %v811 = vsel %vm285, 1, 0
        %v812 = vperm.slane %v811, 0
        %v813 = vperm.slane %v811, 1
        %vm814 = vcmp.eq.s32.totalorder %v812, 1
        %vm815 = vcmp.eq.s32.totalorder %v813, 1
        %v816 = vsel %vm814, %v799, 0.0
        %v817 = vsel %vm815, %v805, 0.0
        %v818 = vsel %vm814, %v800, 0.0
        %v819 = vsel %vm815, %v806, 0.0
        %v820 = vsel %vm814, %v801, 0.0
        %v821 = vsel %vm815, %v807, 0.0
        %v822 = vsel %vm814, %v802, 0.0
        %v823 = vsel %vm815, %v808, 0.0
        %v824 = vsel %vm814, %v803, 0.0
        %v825 = vsel %vm815, %v809, 0.0
        %v826 = vsel %vm814, %v804, 0.0
        %v827 = vsel %vm815, %v810, 0.0
        %v828 = vpack.c.bf16 %v817, %v816
        %v829 = vpack.c.bf16 %v819, %v818
        %v830 = vpack.c.bf16 %v821, %v820
        %v831 = vpack.c.bf16 %v823, %v822
        %v832 = vpack.c.bf16 %v825, %v824
        %v833 = vpack.c.bf16 %v827, %v826
        %834 = vst [vmem:[#allocation2 + $0x180] sm:$0xff] %v828
        %835 = vst [vmem:[#allocation2 + $0x188] sm:$0xff] %v829
        %836 = vst [vmem:[#allocation2 + $0x190] sm:$0xff] %v830
        %837 = vst [vmem:[#allocation2 + $0x198] sm:$0xff] %v831
        %838 = vst [vmem:[#allocation2 + $0x1a0] sm:$0xff] %v832
        %839 = vst [vmem:[#allocation2 + $0x1a8] sm:$0xff] %v833
        %v840 = vld [vmem:[#allocation7] sm:$0xff]
        %v841 = vld [vmem:[#allocation7 + $0x8] sm:$0xff]
        %v842 = vld [vmem:[#allocation7 + $0x10] sm:$0xff]
        %v843 = vld [vmem:[#allocation7 + $0x18] sm:$0xff]
        %v844 = vld [vmem:[#allocation7 + $0x20] sm:$0xff]
        %v845 = vld [vmem:[#allocation7 + $0x28] sm:$0xff]
        %v846 = vld [vmem:[#allocation7 + $0x30] sm:$0xff]
        %v847 = vld [vmem:[#allocation7 + $0x38] sm:$0xff]
        %v848 = vld [vmem:[#allocation7 + $0x40] sm:$0xff]
        %v849 = vld [vmem:[#allocation7 + $0x48] sm:$0xff]
        %v850 = vld [vmem:[#allocation7 + $0x50] sm:$0xff]
        %v851 = vld [vmem:[#allocation7 + $0x58] sm:$0xff]
        %v852 = vld [vmem:[#allocation7 + $0x60] sm:$0xff]
        %v853 = vld [vmem:[#allocation7 + $0x68] sm:$0xff]
        %v854 = vld [vmem:[#allocation7 + $0x70] sm:$0xff]
        %v855 = vld [vmem:[#allocation7 + $0x78] sm:$0xff]
        %v856 = vld [vmem:[#allocation7 + $0x80] sm:$0xff]
        %v857 = vld [vmem:[#allocation7 + $0x88] sm:$0xff]
        %v858 = vld [vmem:[#allocation7 + $0x90] sm:$0xff]
        %v859 = vld [vmem:[#allocation7 + $0x98] sm:$0xff]
        %v860 = vld [vmem:[#allocation7 + $0xa0] sm:$0xff]
        %v861 = vld [vmem:[#allocation7 + $0xa8] sm:$0xff]
        %v862 = vld [vmem:[#allocation7 + $0xb0] sm:$0xff]
        %v863 = vld [vmem:[#allocation7 + $0xb8] sm:$0xff]
        %v864 = vld [vmem:[#allocation2] sm:$0xff]
        %v865 = vld [vmem:[#allocation2 + $0x8] sm:$0xff]
        %v866 = vld [vmem:[#allocation2 + $0x10] sm:$0xff]
        %v867 = vld [vmem:[#allocation2 + $0x18] sm:$0xff]
        %v868 = vld [vmem:[#allocation2 + $0x20] sm:$0xff]
        %v869 = vld [vmem:[#allocation2 + $0x28] sm:$0xff]
        %v870 = vld [vmem:[#allocation2 + $0x30] sm:$0xff]
        %v871 = vld [vmem:[#allocation2 + $0x38] sm:$0xff]
        %v872 = vld [vmem:[#allocation2 + $0x40] sm:$0xff]
        %v873 = vld [vmem:[#allocation2 + $0x48] sm:$0xff]
        %v874 = vld [vmem:[#allocation2 + $0x50] sm:$0xff]
        %v875 = vld [vmem:[#allocation2 + $0x58] sm:$0xff]
        %v876 = vld [vmem:[#allocation2 + $0x60] sm:$0xff]
        %v877 = vld [vmem:[#allocation2 + $0x68] sm:$0xff]
        %v878 = vld [vmem:[#allocation2 + $0x70] sm:$0xff]
        %v879 = vld [vmem:[#allocation2 + $0x78] sm:$0xff]
        %v880 = vld [vmem:[#allocation2 + $0x80] sm:$0xff]
        %v881 = vld [vmem:[#allocation2 + $0x88] sm:$0xff]
        %v882 = vld [vmem:[#allocation2 + $0x90] sm:$0xff]
        %v883 = vld [vmem:[#allocation2 + $0x98] sm:$0xff]
        %v884 = vld [vmem:[#allocation2 + $0xa0] sm:$0xff]
        %v885 = vld [vmem:[#allocation2 + $0xa8] sm:$0xff]
        %v886 = vld [vmem:[#allocation2 + $0xb0] sm:$0xff]
        %v887 = vld [vmem:[#allocation2 + $0xb8] sm:$0xff]
        %v888 = vld [vmem:[#allocation2 + $0xc0] sm:$0xff]
        %v889 = vld [vmem:[#allocation2 + $0xc8] sm:$0xff]
        %v890 = vld [vmem:[#allocation2 + $0xd0] sm:$0xff]
        %v891 = vld [vmem:[#allocation2 + $0xd8] sm:$0xff]
        %v892 = vld [vmem:[#allocation2 + $0xe0] sm:$0xff]
        %v893 = vld [vmem:[#allocation2 + $0xe8] sm:$0xff]
        %v894 = vld [vmem:[#allocation2 + $0xf0] sm:$0xff]
        %v895 = vld [vmem:[#allocation2 + $0xf8] sm:$0xff]
        %v896 = vld [vmem:[#allocation2 + $0x100] sm:$0xff]
        %v897 = vld [vmem:[#allocation2 + $0x108] sm:$0xff]
        %v898 = vld [vmem:[#allocation2 + $0x110] sm:$0xff]
        %v899 = vld [vmem:[#allocation2 + $0x118] sm:$0xff]
        %v900 = vld [vmem:[#allocation2 + $0x120] sm:$0xff]
        %v901 = vld [vmem:[#allocation2 + $0x128] sm:$0xff]
        %v902 = vld [vmem:[#allocation2 + $0x130] sm:$0xff]
        %v903 = vld [vmem:[#allocation2 + $0x138] sm:$0xff]
        %v904 = vld [vmem:[#allocation2 + $0x140] sm:$0xff]
        %v905 = vld [vmem:[#allocation2 + $0x148] sm:$0xff]
        %v906 = vld [vmem:[#allocation2 + $0x150] sm:$0xff]
        %v907 = vld [vmem:[#allocation2 + $0x158] sm:$0xff]
        %v908 = vld [vmem:[#allocation2 + $0x160] sm:$0xff]
        %v909 = vld [vmem:[#allocation2 + $0x168] sm:$0xff]
        %v910 = vld [vmem:[#allocation2 + $0x170] sm:$0xff]
        %v911 = vld [vmem:[#allocation2 + $0x178] sm:$0xff]
        %v912 = vld [vmem:[#allocation2 + $0x180] sm:$0xff]
        %v913 = vld [vmem:[#allocation2 + $0x188] sm:$0xff]
        %v914 = vld [vmem:[#allocation2 + $0x190] sm:$0xff]
        %v915 = vld [vmem:[#allocation2 + $0x198] sm:$0xff]
        %v916 = vld [vmem:[#allocation2 + $0x1a0] sm:$0xff]
        %v917 = vld [vmem:[#allocation2 + $0x1a8] sm:$0xff]
        %v918 = vld [vmem:[%s3] sm:$0xff]
        %v919 = vld [vmem:[%s3 + $0x8] sm:$0xff]
        %v920 = vld [vmem:[%s3 + $0x10] sm:$0xff]
        %v921 = vld [vmem:[%s3 + $0x18] sm:$0xff]
        %v922 = vld [vmem:[%s3 + $0x20] sm:$0xff]
        %v923 = vld [vmem:[%s3 + $0x28] sm:$0xff]
        %v924 = vld [vmem:[%s3 + $0x30] sm:$0xff]
        %v925 = vld [vmem:[%s3 + $0x38] sm:$0xff]
        %v926 = vld [vmem:[%s3 + $0x40] sm:$0xff]
        %v927 = vld [vmem:[%s3 + $0x48] sm:$0xff]
        %v928 = vld [vmem:[%s3 + $0x50] sm:$0xff]
        %v929 = vld [vmem:[%s3 + $0x58] sm:$0xff]
        %931 = vset.pattern.permute.xlu0 0
        %932 = vperm.xlu0 %931, %v918
        %v933 = vpop.permute.xlu0 %932
        %936 = vset.pattern.permute.xlu0 0
        %937 = vperm.xlu0 %936, %v919
        %v938 = vpop.permute.xlu0 %937
        %941 = vset.pattern.permute.xlu0 0
        %942 = vperm.xlu0 %941, %v920
        %v943 = vpop.permute.xlu0 %942
        %946 = vset.pattern.permute.xlu0 0
        %947 = vperm.xlu0 %946, %v921
        %v948 = vpop.permute.xlu0 %947
        %951 = vset.pattern.permute.xlu0 0
        %952 = vperm.xlu0 %951, %v922
        %v953 = vpop.permute.xlu0 %952
        %956 = vset.pattern.permute.xlu0 0
        %957 = vperm.xlu0 %956, %v923
        %v958 = vpop.permute.xlu0 %957
        %961 = vset.pattern.permute.xlu0 0
        %962 = vperm.xlu0 %961, %v924
        %v963 = vpop.permute.xlu0 %962
        %966 = vset.pattern.permute.xlu0 0
        %967 = vperm.xlu0 %966, %v925
        %v968 = vpop.permute.xlu0 %967
        %971 = vset.pattern.permute.xlu0 0
        %972 = vperm.xlu0 %971, %v926
        %v973 = vpop.permute.xlu0 %972
        %976 = vset.pattern.permute.xlu0 0
        %977 = vperm.xlu0 %976, %v927
        %v978 = vpop.permute.xlu0 %977
        %981 = vset.pattern.permute.xlu0 0
        %982 = vperm.xlu0 %981, %v928
        %v983 = vpop.permute.xlu0 %982
        %986 = vset.pattern.permute.xlu0 0
        %987 = vperm.xlu0 %986, %v929
        %v988 = vpop.permute.xlu0 %987
        %v1014 = vunpack.c.l.b16 %v840
        %v1015 = vunpack.c.h.b16 %v840
        %v1016 = vunpack.c.l.b16 %v841
        %v1017 = vunpack.c.h.b16 %v841
        %v1018 = vunpack.c.l.b16 %v842
        %v1019 = vunpack.c.h.b16 %v842
        %v1020 = vunpack.c.l.b16 %v843
        %v1021 = vunpack.c.h.b16 %v843
        %v1022 = vunpack.c.l.b16 %v844
        %v1023 = vunpack.c.h.b16 %v844
        %v1024 = vunpack.c.l.b16 %v845
        %v1025 = vunpack.c.h.b16 %v845
        %v1026 = vunpack.c.l.b16 %v846
        %v1027 = vunpack.c.h.b16 %v846
        %v1028 = vunpack.c.l.b16 %v847
        %v1029 = vunpack.c.h.b16 %v847
        %v1030 = vunpack.c.l.b16 %v848
        %v1031 = vunpack.c.h.b16 %v848
        %v1032 = vunpack.c.l.b16 %v849
        %v1033 = vunpack.c.h.b16 %v849
        %v1034 = vunpack.c.l.b16 %v850
        %v1035 = vunpack.c.h.b16 %v850
        %v1036 = vunpack.c.l.b16 %v851
        %v1037 = vunpack.c.h.b16 %v851
        %v1038 = vunpack.c.l.b16 %v852
        %v1039 = vunpack.c.h.b16 %v852
        %v1040 = vunpack.c.l.b16 %v853
        %v1041 = vunpack.c.h.b16 %v853
        %v1042 = vunpack.c.l.b16 %v854
        %v1043 = vunpack.c.h.b16 %v854
        %v1044 = vunpack.c.l.b16 %v855
        %v1045 = vunpack.c.h.b16 %v855
        %v1046 = vunpack.c.l.b16 %v856
        %v1047 = vunpack.c.h.b16 %v856
        %v1048 = vunpack.c.l.b16 %v857
        %v1049 = vunpack.c.h.b16 %v857
        %v1050 = vunpack.c.l.b16 %v858
        %v1051 = vunpack.c.h.b16 %v858
        %v1052 = vunpack.c.l.b16 %v859
        %v1053 = vunpack.c.h.b16 %v859
        %v1054 = vunpack.c.l.b16 %v860
        %v1055 = vunpack.c.h.b16 %v860
        %v1056 = vunpack.c.l.b16 %v861
        %v1057 = vunpack.c.h.b16 %v861
        %v1058 = vunpack.c.l.b16 %v862
        %v1059 = vunpack.c.h.b16 %v862
        %v1060 = vunpack.c.l.b16 %v863
        %v1061 = vunpack.c.h.b16 %v863
        %v1062 = vpack.c.b16 %v1018, %v1014
        %v1063 = vpack.c.b16 %v1019, %v1015
        %v1064 = vpack.c.b16 %v1020, %v1016
        %v1065 = vpack.c.b16 %v1021, %v1017
        %v1066 = vpack.c.b16 %v1026, %v1022
        %v1067 = vpack.c.b16 %v1027, %v1023
        %v1068 = vpack.c.b16 %v1028, %v1024
        %v1069 = vpack.c.b16 %v1029, %v1025
        %v1070 = vpack.c.b16 %v1034, %v1030
        %v1071 = vpack.c.b16 %v1035, %v1031
        %v1072 = vpack.c.b16 %v1036, %v1032
        %v1073 = vpack.c.b16 %v1037, %v1033
        %v1074 = vpack.c.b16 %v1042, %v1038
        %v1075 = vpack.c.b16 %v1043, %v1039
        %v1076 = vpack.c.b16 %v1044, %v1040
        %v1077 = vpack.c.b16 %v1045, %v1041
        %v1078 = vpack.c.b16 %v1050, %v1046
        %v1079 = vpack.c.b16 %v1051, %v1047
        %v1080 = vpack.c.b16 %v1052, %v1048
        %v1081 = vpack.c.b16 %v1053, %v1049
        %v1082 = vpack.c.b16 %v1058, %v1054
        %v1083 = vpack.c.b16 %v1059, %v1055
        %v1084 = vpack.c.b16 %v1060, %v1056
        %v1085 = vpack.c.b16 %v1061, %v1057
        %v1158 = vunpack.c.l.b16 %v864
        %v1159 = vunpack.c.h.b16 %v864
        %v1160 = vunpack.c.l.b16 %v865
        %v1161 = vunpack.c.h.b16 %v865
        %v1162 = vunpack.c.l.b16 %v866
        %v1163 = vunpack.c.h.b16 %v866
        %v1164 = vunpack.c.l.b16 %v867
        %v1165 = vunpack.c.h.b16 %v867
        %v1166 = vunpack.c.l.b16 %v868
        %v1167 = vunpack.c.h.b16 %v868
        %v1168 = vunpack.c.l.b16 %v869
        %v1169 = vunpack.c.h.b16 %v869
        %v1170 = vunpack.c.l.b16 %v870
        %v1171 = vunpack.c.h.b16 %v870
        %v1172 = vunpack.c.l.b16 %v871
        %v1173 = vunpack.c.h.b16 %v871
        %v1174 = vunpack.c.l.b16 %v872
        %v1175 = vunpack.c.h.b16 %v872
        %v1176 = vunpack.c.l.b16 %v873
        %v1177 = vunpack.c.h.b16 %v873
        %v1178 = vunpack.c.l.b16 %v874
        %v1179 = vunpack.c.h.b16 %v874
        %v1180 = vunpack.c.l.b16 %v875
        %v1181 = vunpack.c.h.b16 %v875
        %v1182 = vunpack.c.l.b16 %v876
        %v1183 = vunpack.c.h.b16 %v876
        %v1184 = vunpack.c.l.b16 %v877
        %v1185 = vunpack.c.h.b16 %v877
        %v1186 = vunpack.c.l.b16 %v878
        %v1187 = vunpack.c.h.b16 %v878
        %v1188 = vunpack.c.l.b16 %v879
        %v1189 = vunpack.c.h.b16 %v879
        %v1190 = vunpack.c.l.b16 %v880
        %v1191 = vunpack.c.h.b16 %v880
        %v1192 = vunpack.c.l.b16 %v881
        %v1193 = vunpack.c.h.b16 %v881
        %v1194 = vunpack.c.l.b16 %v882
        %v1195 = vunpack.c.h.b16 %v882
        %v1196 = vunpack.c.l.b16 %v883
        %v1197 = vunpack.c.h.b16 %v883
        %v1198 = vunpack.c.l.b16 %v884
        %v1199 = vunpack.c.h.b16 %v884
        %v1200 = vunpack.c.l.b16 %v885
        %v1201 = vunpack.c.h.b16 %v885
        %v1202 = vunpack.c.l.b16 %v886
        %v1203 = vunpack.c.h.b16 %v886
        %v1204 = vunpack.c.l.b16 %v887
        %v1205 = vunpack.c.h.b16 %v887
        %v1206 = vunpack.c.l.b16 %v888
        %v1207 = vunpack.c.h.b16 %v888
        %v1208 = vunpack.c.l.b16 %v889
        %v1209 = vunpack.c.h.b16 %v889
        %v1210 = vunpack.c.l.b16 %v890
        %v1211 = vunpack.c.h.b16 %v890
        %v1212 = vunpack.c.l.b16 %v891
        %v1213 = vunpack.c.h.b16 %v891
        %v1214 = vunpack.c.l.b16 %v892
        %v1215 = vunpack.c.h.b16 %v892
        %v1216 = vunpack.c.l.b16 %v893
        %v1217 = vunpack.c.h.b16 %v893
        %v1218 = vunpack.c.l.b16 %v894
        %v1219 = vunpack.c.h.b16 %v894
        %v1220 = vunpack.c.l.b16 %v895
        %v1221 = vunpack.c.h.b16 %v895
        %v1222 = vunpack.c.l.b16 %v896
        %v1223 = vunpack.c.h.b16 %v896
        %v1224 = vunpack.c.l.b16 %v897
        %v1225 = vunpack.c.h.b16 %v897
        %v1226 = vunpack.c.l.b16 %v898
        %v1227 = vunpack.c.h.b16 %v898
        %v1228 = vunpack.c.l.b16 %v899
        %v1229 = vunpack.c.h.b16 %v899
        %v1230 = vunpack.c.l.b16 %v900
        %v1231 = vunpack.c.h.b16 %v900
        %v1232 = vunpack.c.l.b16 %v901
        %v1233 = vunpack.c.h.b16 %v901
        %v1234 = vunpack.c.l.b16 %v902
        %v1235 = vunpack.c.h.b16 %v902
        %v1236 = vunpack.c.l.b16 %v903
        %v1237 = vunpack.c.h.b16 %v903
        %v1238 = vunpack.c.l.b16 %v904
        %v1239 = vunpack.c.h.b16 %v904
        %v1240 = vunpack.c.l.b16 %v905
        %v1241 = vunpack.c.h.b16 %v905
        %v1242 = vunpack.c.l.b16 %v906
        %v1243 = vunpack.c.h.b16 %v906
        %v1244 = vunpack.c.l.b16 %v907
        %v1245 = vunpack.c.h.b16 %v907
        %v1246 = vunpack.c.l.b16 %v908
        %v1247 = vunpack.c.h.b16 %v908
        %v1248 = vunpack.c.l.b16 %v909
        %v1249 = vunpack.c.h.b16 %v909
        %v1250 = vunpack.c.l.b16 %v910
        %v1251 = vunpack.c.h.b16 %v910
        %v1252 = vunpack.c.l.b16 %v911
        %v1253 = vunpack.c.h.b16 %v911
        %v1254 = vunpack.c.l.b16 %v912
        %v1255 = vunpack.c.h.b16 %v912
        %v1256 = vunpack.c.l.b16 %v913
        %v1257 = vunpack.c.h.b16 %v913
        %v1258 = vunpack.c.l.b16 %v914
        %v1259 = vunpack.c.h.b16 %v914
        %v1260 = vunpack.c.l.b16 %v915
        %v1261 = vunpack.c.h.b16 %v915
        %v1262 = vunpack.c.l.b16 %v916
        %v1263 = vunpack.c.h.b16 %v916
        %v1264 = vunpack.c.l.b16 %v917
        %v1265 = vunpack.c.h.b16 %v917
        %v1266 = vpack.c.b16 %v1160, %v1158
        %v1267 = vpack.c.b16 %v1161, %v1159
        %v1268 = vpack.c.b16 %v1164, %v1162
        %v1269 = vpack.c.b16 %v1165, %v1163
        %v1270 = vpack.c.b16 %v1168, %v1166
        %v1271 = vpack.c.b16 %v1169, %v1167
        %v1272 = vpack.c.b16 %v1172, %v1170
        %v1273 = vpack.c.b16 %v1173, %v1171
        %v1274 = vpack.c.b16 %v1176, %v1174
        %v1275 = vpack.c.b16 %v1177, %v1175
        %v1276 = vpack.c.b16 %v1180, %v1178
        %v1277 = vpack.c.b16 %v1181, %v1179
        %v1278 = vpack.c.b16 %v1184, %v1182
        %v1279 = vpack.c.b16 %v1185, %v1183
        %v1280 = vpack.c.b16 %v1188, %v1186
        %v1281 = vpack.c.b16 %v1189, %v1187
        %v1282 = vpack.c.b16 %v1192, %v1190
        %v1283 = vpack.c.b16 %v1193, %v1191
        %v1284 = vpack.c.b16 %v1196, %v1194
        %v1285 = vpack.c.b16 %v1197, %v1195
        %v1286 = vpack.c.b16 %v1200, %v1198
        %v1287 = vpack.c.b16 %v1201, %v1199
        %v1288 = vpack.c.b16 %v1204, %v1202
        %v1289 = vpack.c.b16 %v1205, %v1203
        %v1290 = vpack.c.b16 %v1208, %v1206
        %v1291 = vpack.c.b16 %v1209, %v1207
        %v1292 = vpack.c.b16 %v1212, %v1210
        %v1293 = vpack.c.b16 %v1213, %v1211
        %v1294 = vpack.c.b16 %v1216, %v1214
        %v1295 = vpack.c.b16 %v1217, %v1215
        %v1296 = vpack.c.b16 %v1220, %v1218
        %v1297 = vpack.c.b16 %v1221, %v1219
        %v1298 = vpack.c.b16 %v1224, %v1222
        %v1299 = vpack.c.b16 %v1225, %v1223
        %v1300 = vpack.c.b16 %v1228, %v1226
        %v1301 = vpack.c.b16 %v1229, %v1227
        %v1302 = vpack.c.b16 %v1232, %v1230
        %v1303 = vpack.c.b16 %v1233, %v1231
        %v1304 = vpack.c.b16 %v1236, %v1234
        %v1305 = vpack.c.b16 %v1237, %v1235
        %v1306 = vpack.c.b16 %v1240, %v1238
        %v1307 = vpack.c.b16 %v1241, %v1239
        %v1308 = vpack.c.b16 %v1244, %v1242
        %v1309 = vpack.c.b16 %v1245, %v1243
        %v1310 = vpack.c.b16 %v1248, %v1246
        %v1311 = vpack.c.b16 %v1249, %v1247
        %v1312 = vpack.c.b16 %v1252, %v1250
        %v1313 = vpack.c.b16 %v1253, %v1251
        %v1314 = vpack.c.b16 %v1256, %v1254
        %v1315 = vpack.c.b16 %v1257, %v1255
        %v1316 = vpack.c.b16 %v1260, %v1258
        %v1317 = vpack.c.b16 %v1261, %v1259
        %v1318 = vpack.c.b16 %v1264, %v1262
        %v1319 = vpack.c.b16 %v1265, %v1263
        %vm1374 = vcmask 392192
        %v1376 = vsel %vm1374, %v1065, 0
        %v1379 = vsel %vm1374, %v1069, 0
        %v1382 = vsel %vm1374, %v1073, 0
        %v1385 = vsel %vm1374, %v1077, 0
        %v1388 = vsel %vm1374, %v1081, 0
        %v1391 = vsel %vm1374, %v1085, 0
        %1393 = vmatpush.bf16.msra.mxu0 %v1280
        %1394 = vmatpush.bf16.msra.mxu0 %v1278
        %1395 = vmatpush.bf16.msra.mxu0 %v1276
        %1396 = vmatpush.bf16.msra.mxu0 %v1274
        %1397 = vmatpush.bf16.msra.mxu0 %v1272
        %1398 = vmatpush.bf16.msra.mxu0 %v1270
        %1399 = vmatpush.bf16.msra.mxu0 %v1268
        %1400 = vmatpush.bf16.msra.mxu0 %v1266
        %1401 = vmatmul.bf16.gmra.mxu0 %v1062
        %v1402 = vpop.f32.mrf.mxu0
        %v1403 = vadd.f32 %v933, %v1402
        %v1404 = vpop.f32.mrf.mxu0
        %v1405 = vadd.f32 %v938, %v1404
        %1406 = vmatmul.bf16.gmra.mxu0 %v1066
        %v1407 = vpop.f32.mrf.mxu0
        %v1408 = vadd.f32 %v943, %v1407
        %v1409 = vpop.f32.mrf.mxu0
        %v1410 = vadd.f32 %v948, %v1409
        %1411 = vmatmul.bf16.gmra.mxu0 %v1070
        %v1412 = vpop.f32.mrf.mxu0
        %v1413 = vadd.f32 %v953, %v1412
        %v1414 = vpop.f32.mrf.mxu0
        %v1415 = vadd.f32 %v958, %v1414
        %1416 = vmatmul.bf16.gmra.mxu0 %v1074
        %v1417 = vpop.f32.mrf.mxu0
        %v1418 = vadd.f32 %v963, %v1417
        %v1419 = vpop.f32.mrf.mxu0
        %v1420 = vadd.f32 %v968, %v1419
        %1421 = vmatmul.bf16.gmra.mxu0 %v1078
        %v1422 = vpop.f32.mrf.mxu0
        %v1423 = vadd.f32 %v973, %v1422
        %v1424 = vpop.f32.mrf.mxu0
        %v1425 = vadd.f32 %v978, %v1424
        %1426 = vmatmul.bf16.gmra.mxu0 %v1082
        %v1427 = vpop.f32.mrf.mxu0
        %v1428 = vadd.f32 %v983, %v1427
        %v1429 = vpop.f32.mrf.mxu0
        %v1430 = vadd.f32 %v988, %v1429
        %1431 = vdwg.mxu0
        %1432 = vmatpush.bf16.msra.mxu0 %v1296
        %1433 = vmatpush.bf16.msra.mxu0 %v1294
        %1434 = vmatpush.bf16.msra.mxu0 %v1292
        %1435 = vmatpush.bf16.msra.mxu0 %v1290
        %1436 = vmatpush.bf16.msra.mxu0 %v1288
        %1437 = vmatpush.bf16.msra.mxu0 %v1286
        %1438 = vmatpush.bf16.msra.mxu0 %v1284
        %1439 = vmatpush.bf16.msra.mxu0 %v1282
        %1440 = vmatmul.bf16.gmra.mxu0 %v1063
        %v1441 = vpop.f32.mrf.mxu0
        %v1442 = vadd.f32 %v1403, %v1441
        %v1443 = vpop.f32.mrf.mxu0
        %v1444 = vadd.f32 %v1405, %v1443
        %1445 = vmatmul.bf16.gmra.mxu0 %v1067
        %v1446 = vpop.f32.mrf.mxu0
        %v1447 = vadd.f32 %v1408, %v1446
        %v1448 = vpop.f32.mrf.mxu0
        %v1449 = vadd.f32 %v1410, %v1448
        %1450 = vmatmul.bf16.gmra.mxu0 %v1071
        %v1451 = vpop.f32.mrf.mxu0
        %v1452 = vadd.f32 %v1413, %v1451
        %v1453 = vpop.f32.mrf.mxu0
        %v1454 = vadd.f32 %v1415, %v1453
        %1455 = vmatmul.bf16.gmra.mxu0 %v1075
        %v1456 = vpop.f32.mrf.mxu0
        %v1457 = vadd.f32 %v1418, %v1456
        %v1458 = vpop.f32.mrf.mxu0
        %v1459 = vadd.f32 %v1420, %v1458
        %1460 = vmatmul.bf16.gmra.mxu0 %v1079
        %v1461 = vpop.f32.mrf.mxu0
        %v1462 = vadd.f32 %v1423, %v1461
        %v1463 = vpop.f32.mrf.mxu0
        %v1464 = vadd.f32 %v1425, %v1463
        %1465 = vmatmul.bf16.gmra.mxu0 %v1083
        %v1466 = vpop.f32.mrf.mxu0
        %v1467 = vadd.f32 %v1428, %v1466
        %v1468 = vpop.f32.mrf.mxu0
        %v1469 = vadd.f32 %v1430, %v1468
        %1470 = vdwg.mxu0
        %1471 = vmatpush.bf16.msra.mxu0 %v1312
        %1472 = vmatpush.bf16.msra.mxu0 %v1310
        %1473 = vmatpush.bf16.msra.mxu0 %v1308
        %1474 = vmatpush.bf16.msra.mxu0 %v1306
        %1475 = vmatpush.bf16.msra.mxu0 %v1304
        %1476 = vmatpush.bf16.msra.mxu0 %v1302
        %1477 = vmatpush.bf16.msra.mxu0 %v1300
        %1478 = vmatpush.bf16.msra.mxu0 %v1298
        %1479 = vmatmul.bf16.gmra.mxu0 %v1064
        %v1480 = vpop.f32.mrf.mxu0
        %v1481 = vadd.f32 %v1442, %v1480
        %v1482 = vpop.f32.mrf.mxu0
        %v1483 = vadd.f32 %v1444, %v1482
        %1484 = vmatmul.bf16.gmra.mxu0 %v1068
        %v1485 = vpop.f32.mrf.mxu0
        %v1486 = vadd.f32 %v1447, %v1485
        %v1487 = vpop.f32.mrf.mxu0
        %v1488 = vadd.f32 %v1449, %v1487
        %1489 = vmatmul.bf16.gmra.mxu0 %v1072
        %v1490 = vpop.f32.mrf.mxu0
        %v1491 = vadd.f32 %v1452, %v1490
        %v1492 = vpop.f32.mrf.mxu0
        %v1493 = vadd.f32 %v1454, %v1492
        %1494 = vmatmul.bf16.gmra.mxu0 %v1076
        %v1495 = vpop.f32.mrf.mxu0
        %v1496 = vadd.f32 %v1457, %v1495
        %v1497 = vpop.f32.mrf.mxu0
        %v1498 = vadd.f32 %v1459, %v1497
        %1499 = vmatmul.bf16.gmra.mxu0 %v1080
        %v1500 = vpop.f32.mrf.mxu0
        %v1501 = vadd.f32 %v1462, %v1500
        %v1502 = vpop.f32.mrf.mxu0
        %v1503 = vadd.f32 %v1464, %v1502
        %1504 = vmatmul.bf16.gmra.mxu0 %v1084
        %v1505 = vpop.f32.mrf.mxu0
        %v1506 = vadd.f32 %v1467, %v1505
        %v1507 = vpop.f32.mrf.mxu0
        %v1508 = vadd.f32 %v1469, %v1507
        %1509 = vdwg.mxu0
        %1510 = vmatpush.bf16.msra.mxu0 0
        %1511 = vmatpush.bf16.msra.mxu0 0
        %1512 = vmatpush.bf16.msra.mxu0 0
        %1513 = vmatpush.bf16.msra.mxu0 0
        %1514 = vmatpush.bf16.msra.mxu0 0
        %1515 = vmatpush.bf16.msra.mxu0 %v1318
        %1516 = vmatpush.bf16.msra.mxu0 %v1316
        %1517 = vmatpush.bf16.msra.mxu0 %v1314
        %1518 = vmatmul.bf16.gmra.mxu0 %v1376
        %v1519 = vpop.f32.mrf.mxu0
        %v1520 = vadd.f32 %v1481, %v1519
        %v1521 = vpop.f32.mrf.mxu0
        %v1522 = vadd.f32 %v1483, %v1521
        %1523 = vmatmul.bf16.gmra.mxu0 %v1379
        %v1524 = vpop.f32.mrf.mxu0
        %v1525 = vadd.f32 %v1486, %v1524
        %v1526 = vpop.f32.mrf.mxu0
        %v1527 = vadd.f32 %v1488, %v1526
        %1528 = vmatmul.bf16.gmra.mxu0 %v1382
        %v1529 = vpop.f32.mrf.mxu0
        %v1530 = vadd.f32 %v1491, %v1529
        %v1531 = vpop.f32.mrf.mxu0
        %v1532 = vadd.f32 %v1493, %v1531
        %1533 = vmatmul.bf16.gmra.mxu0 %v1385
        %v1534 = vpop.f32.mrf.mxu0
        %v1535 = vadd.f32 %v1496, %v1534
        %v1536 = vpop.f32.mrf.mxu0
        %v1537 = vadd.f32 %v1498, %v1536
        %1538 = vmatmul.bf16.gmra.mxu0 %v1388
        %v1539 = vpop.f32.mrf.mxu0
        %v1540 = vadd.f32 %v1501, %v1539
        %v1541 = vpop.f32.mrf.mxu0
        %v1542 = vadd.f32 %v1503, %v1541
        %1543 = vmatmul.bf16.gmra.mxu0 %v1391
        %v1544 = vpop.f32.mrf.mxu0
        %v1545 = vadd.f32 %v1506, %v1544
        %v1546 = vpop.f32.mrf.mxu0
        %v1547 = vadd.f32 %v1508, %v1546
        %1548 = vdwg.mxu0
        %1549 = vmatpush.bf16.msra.mxu0 %v1281
        %1550 = vmatpush.bf16.msra.mxu0 %v1279
        %1551 = vmatpush.bf16.msra.mxu0 %v1277
        %1552 = vmatpush.bf16.msra.mxu0 %v1275
        %1553 = vmatpush.bf16.msra.mxu0 %v1273
        %1554 = vmatpush.bf16.msra.mxu0 %v1271
        %1555 = vmatpush.bf16.msra.mxu0 %v1269
        %1556 = vmatpush.bf16.msra.mxu0 %v1267
        %1557 = vmatmul.bf16.gmra.mxu0 %v1062
        %v1558 = vpop.f32.mrf.mxu0
        %v1559 = vadd.f32 %v933, %v1558
        %v1560 = vpop.f32.mrf.mxu0
        %v1561 = vadd.f32 %v938, %v1560
        %1562 = vmatmul.bf16.gmra.mxu0 %v1066
        %v1563 = vpop.f32.mrf.mxu0
        %v1564 = vadd.f32 %v943, %v1563
        %v1565 = vpop.f32.mrf.mxu0
        %v1566 = vadd.f32 %v948, %v1565
        %1567 = vmatmul.bf16.gmra.mxu0 %v1070
        %v1568 = vpop.f32.mrf.mxu0
        %v1569 = vadd.f32 %v953, %v1568
        %v1570 = vpop.f32.mrf.mxu0
        %v1571 = vadd.f32 %v958, %v1570
        %1572 = vmatmul.bf16.gmra.mxu0 %v1074
        %v1573 = vpop.f32.mrf.mxu0
        %v1574 = vadd.f32 %v963, %v1573
        %v1575 = vpop.f32.mrf.mxu0
        %v1576 = vadd.f32 %v968, %v1575
        %1577 = vmatmul.bf16.gmra.mxu0 %v1078
        %v1578 = vpop.f32.mrf.mxu0
        %v1579 = vadd.f32 %v973, %v1578
        %v1580 = vpop.f32.mrf.mxu0
        %v1581 = vadd.f32 %v978, %v1580
        %1582 = vmatmul.bf16.gmra.mxu0 %v1082
        %v1583 = vpop.f32.mrf.mxu0
        %v1584 = vadd.f32 %v983, %v1583
        %v1585 = vpop.f32.mrf.mxu0
        %v1586 = vadd.f32 %v988, %v1585
        %1587 = vdwg.mxu0
        %1588 = vmatpush.bf16.msra.mxu0 %v1297
        %1589 = vmatpush.bf16.msra.mxu0 %v1295
        %1590 = vmatpush.bf16.msra.mxu0 %v1293
        %1591 = vmatpush.bf16.msra.mxu0 %v1291
        %1592 = vmatpush.bf16.msra.mxu0 %v1289
        %1593 = vmatpush.bf16.msra.mxu0 %v1287
        %1594 = vmatpush.bf16.msra.mxu0 %v1285
        %1595 = vmatpush.bf16.msra.mxu0 %v1283
        %1596 = vmatmul.bf16.gmra.mxu0 %v1063
        %v1597 = vpop.f32.mrf.mxu0
        %v1598 = vadd.f32 %v1559, %v1597
        %v1599 = vpop.f32.mrf.mxu0
        %v1600 = vadd.f32 %v1561, %v1599
        %1601 = vmatmul.bf16.gmra.mxu0 %v1067
        %v1602 = vpop.f32.mrf.mxu0
        %v1603 = vadd.f32 %v1564, %v1602
        %v1604 = vpop.f32.mrf.mxu0
        %v1605 = vadd.f32 %v1566, %v1604
        %1606 = vmatmul.bf16.gmra.mxu0 %v1071
        %v1607 = vpop.f32.mrf.mxu0
        %v1608 = vadd.f32 %v1569, %v1607
        %v1609 = vpop.f32.mrf.mxu0
        %v1610 = vadd.f32 %v1571, %v1609
        %1611 = vmatmul.bf16.gmra.mxu0 %v1075
        %v1612 = vpop.f32.mrf.mxu0
        %v1613 = vadd.f32 %v1574, %v1612
        %v1614 = vpop.f32.mrf.mxu0
        %v1615 = vadd.f32 %v1576, %v1614
        %1616 = vmatmul.bf16.gmra.mxu0 %v1079
        %v1617 = vpop.f32.mrf.mxu0
        %v1618 = vadd.f32 %v1579, %v1617
        %v1619 = vpop.f32.mrf.mxu0
        %v1620 = vadd.f32 %v1581, %v1619
        %1621 = vmatmul.bf16.gmra.mxu0 %v1083
        %v1622 = vpop.f32.mrf.mxu0
        %v1623 = vadd.f32 %v1584, %v1622
        %v1624 = vpop.f32.mrf.mxu0
        %v1625 = vadd.f32 %v1586, %v1624
        %1626 = vdwg.mxu0
        %1627 = vmatpush.bf16.msra.mxu0 %v1313
        %1628 = vmatpush.bf16.msra.mxu0 %v1311
        %1629 = vmatpush.bf16.msra.mxu0 %v1309
        %1630 = vmatpush.bf16.msra.mxu0 %v1307
        %1631 = vmatpush.bf16.msra.mxu0 %v1305
        %1632 = vmatpush.bf16.msra.mxu0 %v1303
        %1633 = vmatpush.bf16.msra.mxu0 %v1301
        %1634 = vmatpush.bf16.msra.mxu0 %v1299
        %1635 = vmatmul.bf16.gmra.mxu0 %v1064
        %v1636 = vpop.f32.mrf.mxu0
        %v1637 = vadd.f32 %v1598, %v1636
        %v1638 = vpop.f32.mrf.mxu0
        %v1639 = vadd.f32 %v1600, %v1638
        %1640 = vmatmul.bf16.gmra.mxu0 %v1068
        %v1641 = vpop.f32.mrf.mxu0
        %v1642 = vadd.f32 %v1603, %v1641
        %v1643 = vpop.f32.mrf.mxu0
        %v1644 = vadd.f32 %v1605, %v1643
        %1645 = vmatmul.bf16.gmra.mxu0 %v1072
        %v1646 = vpop.f32.mrf.mxu0
        %v1647 = vadd.f32 %v1608, %v1646
        %v1648 = vpop.f32.mrf.mxu0
        %v1649 = vadd.f32 %v1610, %v1648
        %1650 = vmatmul.bf16.gmra.mxu0 %v1076
        %v1651 = vpop.f32.mrf.mxu0
        %v1652 = vadd.f32 %v1613, %v1651
        %v1653 = vpop.f32.mrf.mxu0
        %v1654 = vadd.f32 %v1615, %v1653
        %1655 = vmatmul.bf16.gmra.mxu0 %v1080
        %v1656 = vpop.f32.mrf.mxu0
        %v1657 = vadd.f32 %v1618, %v1656
        %v1658 = vpop.f32.mrf.mxu0
        %v1659 = vadd.f32 %v1620, %v1658
        %1660 = vmatmul.bf16.gmra.mxu0 %v1084
        %v1661 = vpop.f32.mrf.mxu0
        %v1662 = vadd.f32 %v1623, %v1661
        %v1663 = vpop.f32.mrf.mxu0
        %v1664 = vadd.f32 %v1625, %v1663
        %1665 = vdwg.mxu0
        %1666 = vmatpush.bf16.msra.mxu0 0
        %1667 = vmatpush.bf16.msra.mxu0 0
        %1668 = vmatpush.bf16.msra.mxu0 0
        %1669 = vmatpush.bf16.msra.mxu0 0
        %1670 = vmatpush.bf16.msra.mxu0 0
        %1671 = vmatpush.bf16.msra.mxu0 %v1319
        %1672 = vmatpush.bf16.msra.mxu0 %v1317
        %1673 = vmatpush.bf16.msra.mxu0 %v1315
        %1674 = vmatmul.bf16.gmra.mxu0 %v1376
        %v1675 = vpop.f32.mrf.mxu0
        %v1676 = vadd.f32 %v1637, %v1675
        %v1677 = vpop.f32.mrf.mxu0
        %v1678 = vadd.f32 %v1639, %v1677
        %1679 = vmatmul.bf16.gmra.mxu0 %v1379
        %v1680 = vpop.f32.mrf.mxu0
        %v1681 = vadd.f32 %v1642, %v1680
        %v1682 = vpop.f32.mrf.mxu0
        %v1683 = vadd.f32 %v1644, %v1682
        %1684 = vmatmul.bf16.gmra.mxu0 %v1382
        %v1685 = vpop.f32.mrf.mxu0
        %v1686 = vadd.f32 %v1647, %v1685
        %v1687 = vpop.f32.mrf.mxu0
        %v1688 = vadd.f32 %v1649, %v1687
        %1689 = vmatmul.bf16.gmra.mxu0 %v1385
        %v1690 = vpop.f32.mrf.mxu0
        %v1691 = vadd.f32 %v1652, %v1690
        %v1692 = vpop.f32.mrf.mxu0
        %v1693 = vadd.f32 %v1654, %v1692
        %1694 = vmatmul.bf16.gmra.mxu0 %v1388
        %v1695 = vpop.f32.mrf.mxu0
        %v1696 = vadd.f32 %v1657, %v1695
        %v1697 = vpop.f32.mrf.mxu0
        %v1698 = vadd.f32 %v1659, %v1697
        %1699 = vmatmul.bf16.gmra.mxu0 %v1391
        %v1700 = vpop.f32.mrf.mxu0
        %v1701 = vadd.f32 %v1662, %v1700
        %v1702 = vpop.f32.mrf.mxu0
        %v1703 = vadd.f32 %v1664, %v1702
        %1704 = vdwg.mxu0
        %v1705 = vxor.u32 %v1520, 2147483648
        %v1706 = vxor.u32 %v1676, 2147483648
        %v1707 = vxor.u32 %v1522, 2147483648
        %v1708 = vxor.u32 %v1678, 2147483648
        %v1709 = vxor.u32 %v1525, 2147483648
        %v1710 = vxor.u32 %v1681, 2147483648
        %v1711 = vxor.u32 %v1527, 2147483648
        %v1712 = vxor.u32 %v1683, 2147483648
        %v1713 = vmul.f32 %v1705, 1.442695
        %v1714 = vpow.pop %v1713
        %v1715 = vmul.f32 %v1706, 1.442695
        %v1716 = vpow.pop %v1715
        %v1717 = vmul.f32 %v1707, 1.442695
        %v1718 = vpow.pop %v1717
        %v1719 = vmul.f32 %v1708, 1.442695
        %v1720 = vpow.pop %v1719
        %v1721 = vmul.f32 %v1709, 1.442695
        %v1722 = vpow.pop %v1721
        %v1723 = vmul.f32 %v1710, 1.442695
        %v1724 = vpow.pop %v1723
        %v1725 = vmul.f32 %v1711, 1.442695
        %v1726 = vpow.pop %v1725
        %v1727 = vmul.f32 %v1712, 1.442695
        %v1728 = vpow.pop %v1727
        %v1729 = vadd.f32 %v1714, 1.0
        %v1730 = vadd.f32 %v1716, 1.0
        %v1731 = vadd.f32 %v1718, 1.0
        %v1732 = vadd.f32 %v1720, 1.0
        %v1733 = vadd.f32 %v1722, 1.0
        %v1734 = vadd.f32 %v1724, 1.0
        %v1735 = vadd.f32 %v1726, 1.0
        %v1736 = vadd.f32 %v1728, 1.0
        %v1737 = vrcp.pop %v1729
        %v1738 = vmul.f32 %v1729, %v1737
        %v1739 = vsub.f32 1.0, %v1738
        %v1740 = vmul.f32 %v1737, %v1739
        %v1741 = vadd.f32 %v1737, %v1740
        %vm1742 = vweird.f32 %v1729
        %vm1743 = vweird.f32 %v1737
        %vm1744 = vmor %vm1742, %vm1743
        %v1745 = vsel %vm1744, %v1737, %v1741
        %v1746 = vand.u32 2147483647, %v1729
        %vm1747 = vcmp.eq.f32.partialorder %v1746, 8.507059e+37
        %v1748 = vand.u32 %v1729, 2147483648
        %v1749 = vor.u32 1.1754944e-38, %v1748
        %v1750 = vsel %vm1747, %v1749, %v1745
        %v1751 = vmul.f32 1.0, %v1750
        %v1752 = vrcp.pop %v1730
        %v1753 = vmul.f32 %v1730, %v1752
        %v1754 = vsub.f32 1.0, %v1753
        %v1755 = vmul.f32 %v1752, %v1754
        %v1756 = vadd.f32 %v1752, %v1755
        %vm1757 = vweird.f32 %v1730
        %vm1758 = vweird.f32 %v1752
        %vm1759 = vmor %vm1757, %vm1758
        %v1760 = vsel %vm1759, %v1752, %v1756
        %v1761 = vand.u32 2147483647, %v1730
        %vm1762 = vcmp.eq.f32.partialorder %v1761, 8.507059e+37
        %v1763 = vand.u32 %v1730, 2147483648
        %v1764 = vor.u32 1.1754944e-38, %v1763
        %v1765 = vsel %vm1762, %v1764, %v1760
        %v1766 = vmul.f32 1.0, %v1765
        %v1767 = vrcp.pop %v1731
        %v1768 = vmul.f32 %v1731, %v1767
        %v1769 = vsub.f32 1.0, %v1768
        %v1770 = vmul.f32 %v1767, %v1769
        %v1771 = vadd.f32 %v1767, %v1770
        %vm1772 = vweird.f32 %v1731
        %vm1773 = vweird.f32 %v1767
        %vm1774 = vmor %vm1772, %vm1773
        %v1775 = vsel %vm1774, %v1767, %v1771
        %v1776 = vand.u32 2147483647, %v1731
        %vm1777 = vcmp.eq.f32.partialorder %v1776, 8.507059e+37
        %v1778 = vand.u32 %v1731, 2147483648
        %v1779 = vor.u32 1.1754944e-38, %v1778
        %v1780 = vsel %vm1777, %v1779, %v1775
        %v1781 = vmul.f32 1.0, %v1780
        %v1782 = vrcp.pop %v1732
        %v1783 = vmul.f32 %v1732, %v1782
        %v1784 = vsub.f32 1.0, %v1783
        %v1785 = vmul.f32 %v1782, %v1784
        %v1786 = vadd.f32 %v1782, %v1785
        %vm1787 = vweird.f32 %v1732
        %vm1788 = vweird.f32 %v1782
        %vm1789 = vmor %vm1787, %vm1788
        %v1790 = vsel %vm1789, %v1782, %v1786
        %v1791 = vand.u32 2147483647, %v1732
        %vm1792 = vcmp.eq.f32.partialorder %v1791, 8.507059e+37
        %v1793 = vand.u32 %v1732, 2147483648
        %v1794 = vor.u32 1.1754944e-38, %v1793
        %v1795 = vsel %vm1792, %v1794, %v1790
        %v1796 = vmul.f32 1.0, %v1795
        %v1797 = vrcp.pop %v1733
        %v1798 = vmul.f32 %v1733, %v1797
        %v1799 = vsub.f32 1.0, %v1798
        %v1800 = vmul.f32 %v1797, %v1799
        %v1801 = vadd.f32 %v1797, %v1800
        %vm1802 = vweird.f32 %v1733
        %vm1803 = vweird.f32 %v1797
        %vm1804 = vmor %vm1802, %vm1803
        %v1805 = vsel %vm1804, %v1797, %v1801
        %v1806 = vand.u32 2147483647, %v1733
        %vm1807 = vcmp.eq.f32.partialorder %v1806, 8.507059e+37
        %v1808 = vand.u32 %v1733, 2147483648
        %v1809 = vor.u32 1.1754944e-38, %v1808
        %v1810 = vsel %vm1807, %v1809, %v1805
        %v1811 = vmul.f32 1.0, %v1810
        %v1812 = vrcp.pop %v1734
        %v1813 = vmul.f32 %v1734, %v1812
        %v1814 = vsub.f32 1.0, %v1813
        %v1815 = vmul.f32 %v1812, %v1814
        %v1816 = vadd.f32 %v1812, %v1815
        %vm1817 = vweird.f32 %v1734
        %vm1818 = vweird.f32 %v1812
        %vm1819 = vmor %vm1817, %vm1818
        %v1820 = vsel %vm1819, %v1812, %v1816
        %v1821 = vand.u32 2147483647, %v1734
        %vm1822 = vcmp.eq.f32.partialorder %v1821, 8.507059e+37
        %v1823 = vand.u32 %v1734, 2147483648
        %v1824 = vor.u32 1.1754944e-38, %v1823
        %v1825 = vsel %vm1822, %v1824, %v1820
        %v1826 = vmul.f32 1.0, %v1825
        %v1827 = vrcp.pop %v1735
        %v1828 = vmul.f32 %v1735, %v1827
        %v1829 = vsub.f32 1.0, %v1828
        %v1830 = vmul.f32 %v1827, %v1829
        %v1831 = vadd.f32 %v1827, %v1830
        %vm1832 = vweird.f32 %v1735
        %vm1833 = vweird.f32 %v1827
        %vm1834 = vmor %vm1832, %vm1833
        %v1835 = vsel %vm1834, %v1827, %v1831
        %v1836 = vand.u32 2147483647, %v1735
        %vm1837 = vcmp.eq.f32.partialorder %v1836, 8.507059e+37
        %v1838 = vand.u32 %v1735, 2147483648
        %v1839 = vor.u32 1.1754944e-38, %v1838
        %v1840 = vsel %vm1837, %v1839, %v1835
        %v1841 = vmul.f32 1.0, %v1840
        %v1842 = vrcp.pop %v1736
        %v1843 = vmul.f32 %v1736, %v1842
        %v1844 = vsub.f32 1.0, %v1843
        %v1845 = vmul.f32 %v1842, %v1844
        %v1846 = vadd.f32 %v1842, %v1845
        %vm1847 = vweird.f32 %v1736
        %vm1848 = vweird.f32 %v1842
        %vm1849 = vmor %vm1847, %vm1848
        %v1850 = vsel %vm1849, %v1842, %v1846
        %v1851 = vand.u32 2147483647, %v1736
        %vm1852 = vcmp.eq.f32.partialorder %v1851, 8.507059e+37
        %v1853 = vand.u32 %v1736, 2147483648
        %v1854 = vor.u32 1.1754944e-38, %v1853
        %v1855 = vsel %vm1852, %v1854, %v1850
        %v1856 = vmul.f32 1.0, %v1855
        %v1857 = vxor.u32 %v1530, 2147483648
        %v1858 = vxor.u32 %v1686, 2147483648
        %v1859 = vxor.u32 %v1532, 2147483648
        %v1860 = vxor.u32 %v1688, 2147483648
        %v1861 = vxor.u32 %v1535, 2147483648
        %v1862 = vxor.u32 %v1691, 2147483648
        %v1863 = vxor.u32 %v1537, 2147483648
        %v1864 = vxor.u32 %v1693, 2147483648
        %v1865 = vmul.f32 %v1857, 1.442695
        %v1866 = vpow.pop %v1865
        %v1867 = vmul.f32 %v1858, 1.442695
        %v1868 = vpow.pop %v1867
        %v1869 = vmul.f32 %v1859, 1.442695
        %v1870 = vpow.pop %v1869
        %v1871 = vmul.f32 %v1860, 1.442695
        %v1872 = vpow.pop %v1871
        %v1873 = vmul.f32 %v1861, 1.442695
        %v1874 = vpow.pop %v1873
        %v1875 = vmul.f32 %v1862, 1.442695
        %v1876 = vpow.pop %v1875
        %v1877 = vmul.f32 %v1863, 1.442695
        %v1878 = vpow.pop %v1877
        %v1879 = vmul.f32 %v1864, 1.442695
        %v1880 = vpow.pop %v1879
        %v1881 = vadd.f32 %v1866, 1.0
        %v1882 = vadd.f32 %v1868, 1.0
        %v1883 = vadd.f32 %v1870, 1.0
        %v1884 = vadd.f32 %v1872, 1.0
        %v1885 = vadd.f32 %v1874, 1.0
        %v1886 = vadd.f32 %v1876, 1.0
        %v1887 = vadd.f32 %v1878, 1.0
        %v1888 = vadd.f32 %v1880, 1.0
        %v1889 = vrcp.pop %v1881
        %v1890 = vmul.f32 %v1881, %v1889
        %v1891 = vsub.f32 1.0, %v1890
        %v1892 = vmul.f32 %v1889, %v1891
        %v1893 = vadd.f32 %v1889, %v1892
        %vm1894 = vweird.f32 %v1881
        %vm1895 = vweird.f32 %v1889
        %vm1896 = vmor %vm1894, %vm1895
        %v1897 = vsel %vm1896, %v1889, %v1893
        %v1898 = vand.u32 2147483647, %v1881
        %vm1899 = vcmp.eq.f32.partialorder %v1898, 8.507059e+37
        %v1900 = vand.u32 %v1881, 2147483648
        %v1901 = vor.u32 1.1754944e-38, %v1900
        %v1902 = vsel %vm1899, %v1901, %v1897
        %v1903 = vmul.f32 1.0, %v1902
        %v1904 = vrcp.pop %v1882
        %v1905 = vmul.f32 %v1882, %v1904
        %v1906 = vsub.f32 1.0, %v1905
        %v1907 = vmul.f32 %v1904, %v1906
        %v1908 = vadd.f32 %v1904, %v1907
        %vm1909 = vweird.f32 %v1882
        %vm1910 = vweird.f32 %v1904
        %vm1911 = vmor %vm1909, %vm1910
        %v1912 = vsel %vm1911, %v1904, %v1908
        %v1913 = vand.u32 2147483647, %v1882
        %vm1914 = vcmp.eq.f32.partialorder %v1913, 8.507059e+37
        %v1915 = vand.u32 %v1882, 2147483648
        %v1916 = vor.u32 1.1754944e-38, %v1915
        %v1917 = vsel %vm1914, %v1916, %v1912
        %v1918 = vmul.f32 1.0, %v1917
        %v1919 = vrcp.pop %v1883
        %v1920 = vmul.f32 %v1883, %v1919
        %v1921 = vsub.f32 1.0, %v1920
        %v1922 = vmul.f32 %v1919, %v1921
        %v1923 = vadd.f32 %v1919, %v1922
        %vm1924 = vweird.f32 %v1883
        %vm1925 = vweird.f32 %v1919
        %vm1926 = vmor %vm1924, %vm1925
        %v1927 = vsel %vm1926, %v1919, %v1923
        %v1928 = vand.u32 2147483647, %v1883
        %vm1929 = vcmp.eq.f32.partialorder %v1928, 8.507059e+37
        %v1930 = vand.u32 %v1883, 2147483648
        %v1931 = vor.u32 1.1754944e-38, %v1930
        %v1932 = vsel %vm1929, %v1931, %v1927
        %v1933 = vmul.f32 1.0, %v1932
        %v1934 = vrcp.pop %v1884
        %v1935 = vmul.f32 %v1884, %v1934
        %v1936 = vsub.f32 1.0, %v1935
        %v1937 = vmul.f32 %v1934, %v1936
        %v1938 = vadd.f32 %v1934, %v1937
        %vm1939 = vweird.f32 %v1884
        %vm1940 = vweird.f32 %v1934
        %vm1941 = vmor %vm1939, %vm1940
        %v1942 = vsel %vm1941, %v1934, %v1938
        %v1943 = vand.u32 2147483647, %v1884
        %vm1944 = vcmp.eq.f32.partialorder %v1943, 8.507059e+37
        %v1945 = vand.u32 %v1884, 2147483648
        %v1946 = vor.u32 1.1754944e-38, %v1945
        %v1947 = vsel %vm1944, %v1946, %v1942
        %v1948 = vmul.f32 1.0, %v1947
        %v1949 = vrcp.pop %v1885
        %v1950 = vmul.f32 %v1885, %v1949
        %v1951 = vsub.f32 1.0, %v1950
        %v1952 = vmul.f32 %v1949, %v1951
        %v1953 = vadd.f32 %v1949, %v1952
        %vm1954 = vweird.f32 %v1885
        %vm1955 = vweird.f32 %v1949
        %vm1956 = vmor %vm1954, %vm1955
        %v1957 = vsel %vm1956, %v1949, %v1953
        %v1958 = vand.u32 2147483647, %v1885
        %vm1959 = vcmp.eq.f32.partialorder %v1958, 8.507059e+37
        %v1960 = vand.u32 %v1885, 2147483648
        %v1961 = vor.u32 1.1754944e-38, %v1960
        %v1962 = vsel %vm1959, %v1961, %v1957
        %v1963 = vmul.f32 1.0, %v1962
        %v1964 = vrcp.pop %v1886
        %v1965 = vmul.f32 %v1886, %v1964
        %v1966 = vsub.f32 1.0, %v1965
        %v1967 = vmul.f32 %v1964, %v1966
        %v1968 = vadd.f32 %v1964, %v1967
        %vm1969 = vweird.f32 %v1886
        %vm1970 = vweird.f32 %v1964
        %vm1971 = vmor %vm1969, %vm1970
        %v1972 = vsel %vm1971, %v1964, %v1968
        %v1973 = vand.u32 2147483647, %v1886
        %vm1974 = vcmp.eq.f32.partialorder %v1973, 8.507059e+37
        %v1975 = vand.u32 %v1886, 2147483648
        %v1976 = vor.u32 1.1754944e-38, %v1975
        %v1977 = vsel %vm1974, %v1976, %v1972
        %v1978 = vmul.f32 1.0, %v1977
        %v1979 = vrcp.pop %v1887
        %v1980 = vmul.f32 %v1887, %v1979
        %v1981 = vsub.f32 1.0, %v1980
        %v1982 = vmul.f32 %v1979, %v1981
        %v1983 = vadd.f32 %v1979, %v1982
        %vm1984 = vweird.f32 %v1887
        %vm1985 = vweird.f32 %v1979
        %vm1986 = vmor %vm1984, %vm1985
        %v1987 = vsel %vm1986, %v1979, %v1983
        %v1988 = vand.u32 2147483647, %v1887
        %vm1989 = vcmp.eq.f32.partialorder %v1988, 8.507059e+37
        %v1990 = vand.u32 %v1887, 2147483648
        %v1991 = vor.u32 1.1754944e-38, %v1990
        %v1992 = vsel %vm1989, %v1991, %v1987
        %v1993 = vmul.f32 1.0, %v1992
        %v1994 = vrcp.pop %v1888
        %v1995 = vmul.f32 %v1888, %v1994
        %v1996 = vsub.f32 1.0, %v1995
        %v1997 = vmul.f32 %v1994, %v1996
        %v1998 = vadd.f32 %v1994, %v1997
        %vm1999 = vweird.f32 %v1888
        %vm2000 = vweird.f32 %v1994
        %vm2001 = vmor %vm1999, %vm2000
        %v2002 = vsel %vm2001, %v1994, %v1998
        %v2003 = vand.u32 2147483647, %v1888
        %vm2004 = vcmp.eq.f32.partialorder %v2003, 8.507059e+37
        %v2005 = vand.u32 %v1888, 2147483648
        %v2006 = vor.u32 1.1754944e-38, %v2005
        %v2007 = vsel %vm2004, %v2006, %v2002
        %v2008 = vmul.f32 1.0, %v2007
        %v2009 = vld [vmem:[%s229] sm:$0xff]
        %v2010 = vld [vmem:[%s229 + $0x8] sm:$0xff]
        %v2011 = vld [vmem:[%s229 + $0x10] sm:$0xff]
        %v2012 = vld [vmem:[%s229 + $0x18] sm:$0xff]
        %v2013 = vld [vmem:[%s229 + $0x20] sm:$0xff]
        %v2014 = vld [vmem:[%s229 + $0x28] sm:$0xff]
        %v2015 = vld [vmem:[%s229 + $0x30] sm:$0xff]
        %v2016 = vld [vmem:[%s229 + $0x38] sm:$0xff]
        %v2017 = vmul.f32 %v2009, %v1903
        %v2018 = vmul.f32 %v2010, %v1918
        %v2019 = vmul.f32 %v2011, %v1933
        %v2020 = vmul.f32 %v2012, %v1948
        %v2021 = vmul.f32 %v2013, %v1963
        %v2022 = vmul.f32 %v2014, %v1978
        %v2023 = vmul.f32 %v2015, %v1993
        %v2024 = vmul.f32 %v2016, %v2008
        %2025 = vrot.lane.b32.xlu0 %v2017, 17
        %v2026 = vpop.permute.xlu0 %2025
        %2027 = vrot.lane.b32.xlu0 %v2019, 17
        %v2028 = vpop.permute.xlu0 %2027
        %2029 = vrot.lane.b32.xlu0 %v2021, 17
        %v2030 = vpop.permute.xlu0 %2029
        %2031 = vrot.lane.b32.xlu0 %v2023, 17
        %v2032 = vpop.permute.xlu0 %2031
        %2033 = vrot.lane.b32.xlu0 %v2018, 17
        %v2034 = vpop.permute.xlu0 %2033
        %2035 = vrot.lane.b32.xlu0 %v2020, 17
        %v2036 = vpop.permute.xlu0 %2035
        %2037 = vrot.lane.b32.xlu0 %v2022, 17
        %v2038 = vpop.permute.xlu0 %2037
        %2039 = vrot.lane.b32.xlu0 %v2024, 17
        %v2040 = vpop.permute.xlu0 %2039
        %v2041 = vsel %vm324, %v2026, %v2034
        %v2042 = vsel %vm324, %v2028, %v2036
        %v2043 = vsel %vm324, %v2030, %v2038
        %v2044 = vsel %vm324, %v2032, %v2040
        %v2045 = vsel %vm324, %v2034, %v2026
        %v2046 = vsel %vm324, %v2036, %v2028
        %v2047 = vsel %vm324, %v2038, %v2030
        %v2048 = vsel %vm324, %v2040, %v2032
        %v2049 = vsel %vm340, %v2045, 0.0
        %v2050 = vsel %vm341, %v2041, 0.0
        %v2051 = vsel %vm340, %v2046, 0.0
        %v2052 = vsel %vm341, %v2042, 0.0
        %v2053 = vsel %vm340, %v2047, 0.0
        %v2054 = vsel %vm341, %v2043, 0.0
        %v2055 = vsel %vm340, %v2048, 0.0
        %v2056 = vsel %vm341, %v2044, 0.0
        %v2057 = vpack.c.bf16 %v2050, %v2049
        %v2058 = vpack.c.bf16 %v2052, %v2051
        %v2059 = vpack.c.bf16 %v2054, %v2053
        %v2060 = vpack.c.bf16 %v2056, %v2055
        %2061 = vst [vmem:[#allocation3] sm:$0xff] %v2057
        %2062 = vst [vmem:[#allocation3 + $0x8] sm:$0xff] %v2058
        %2063 = vst [vmem:[#allocation3 + $0x10] sm:$0xff] %v2059
        %2064 = vst [vmem:[#allocation3 + $0x18] sm:$0xff] %v2060
        %2065 = vrot.lane.b32.xlu0 %v2017, 16
        %v2066 = vpop.permute.xlu0 %2065
        %2067 = vrot.lane.b32.xlu0 %v2019, 16
        %v2068 = vpop.permute.xlu0 %2067
        %2069 = vrot.lane.b32.xlu0 %v2021, 16
        %v2070 = vpop.permute.xlu0 %2069
        %2071 = vrot.lane.b32.xlu0 %v2023, 16
        %v2072 = vpop.permute.xlu0 %2071
        %2073 = vrot.lane.b32.xlu0 %v2018, 16
        %v2074 = vpop.permute.xlu0 %2073
        %2075 = vrot.lane.b32.xlu0 %v2020, 16
        %v2076 = vpop.permute.xlu0 %2075
        %2077 = vrot.lane.b32.xlu0 %v2022, 16
        %v2078 = vpop.permute.xlu0 %2077
        %2079 = vrot.lane.b32.xlu0 %v2024, 16
        %v2080 = vpop.permute.xlu0 %2079
        %v2081 = vsel %vm390, %v2066, %v2074
        %v2082 = vsel %vm390, %v2068, %v2076
        %v2083 = vsel %vm390, %v2070, %v2078
        %v2084 = vsel %vm390, %v2072, %v2080
        %v2085 = vsel %vm390, %v2074, %v2066
        %v2086 = vsel %vm390, %v2076, %v2068
        %v2087 = vsel %vm390, %v2078, %v2070
        %v2088 = vsel %vm390, %v2080, %v2072
        %v2089 = vsel %vm406, %v2085, 0.0
        %v2090 = vsel %vm407, %v2081, 0.0
        %v2091 = vsel %vm406, %v2086, 0.0
        %v2092 = vsel %vm407, %v2082, 0.0
        %v2093 = vsel %vm406, %v2087, 0.0
        %v2094 = vsel %vm407, %v2083, 0.0
        %v2095 = vsel %vm406, %v2088, 0.0
        %v2096 = vsel %vm407, %v2084, 0.0
        %v2097 = vpack.c.bf16 %v2090, %v2089
        %v2098 = vpack.c.bf16 %v2092, %v2091
        %v2099 = vpack.c.bf16 %v2094, %v2093
        %v2100 = vpack.c.bf16 %v2096, %v2095
        %2101 = vst [vmem:[#allocation3 + $0x20] sm:$0xff] %v2097
        %2102 = vst [vmem:[#allocation3 + $0x28] sm:$0xff] %v2098
        %2103 = vst [vmem:[#allocation3 + $0x30] sm:$0xff] %v2099
        %2104 = vst [vmem:[#allocation3 + $0x38] sm:$0xff] %v2100
        %2105 = vrot.lane.b32.xlu0 %v2017, 15
        %v2106 = vpop.permute.xlu0 %2105
        %2107 = vrot.lane.b32.xlu0 %v2019, 15
        %v2108 = vpop.permute.xlu0 %2107
        %2109 = vrot.lane.b32.xlu0 %v2021, 15
        %v2110 = vpop.permute.xlu0 %2109
        %2111 = vrot.lane.b32.xlu0 %v2023, 15
        %v2112 = vpop.permute.xlu0 %2111
        %2113 = vrot.lane.b32.xlu0 %v2018, 15
        %v2114 = vpop.permute.xlu0 %2113
        %2115 = vrot.lane.b32.xlu0 %v2020, 15
        %v2116 = vpop.permute.xlu0 %2115
        %2117 = vrot.lane.b32.xlu0 %v2022, 15
        %v2118 = vpop.permute.xlu0 %2117
        %2119 = vrot.lane.b32.xlu0 %v2024, 15
        %v2120 = vpop.permute.xlu0 %2119
        %v2121 = vsel %vm456, %v2106, %v2114
        %v2122 = vsel %vm456, %v2108, %v2116
        %v2123 = vsel %vm456, %v2110, %v2118
        %v2124 = vsel %vm456, %v2112, %v2120
        %v2125 = vsel %vm456, %v2114, %v2106
        %v2126 = vsel %vm456, %v2116, %v2108
        %v2127 = vsel %vm456, %v2118, %v2110
        %v2128 = vsel %vm456, %v2120, %v2112
        %v2129 = vsel %vm472, %v2125, 0.0
        %v2130 = vsel %vm473, %v2121, 0.0
        %v2131 = vsel %vm472, %v2126, 0.0
        %v2132 = vsel %vm473, %v2122, 0.0
        %v2133 = vsel %vm472, %v2127, 0.0
        %v2134 = vsel %vm473, %v2123, 0.0
        %v2135 = vsel %vm472, %v2128, 0.0
        %v2136 = vsel %vm473, %v2124, 0.0
        %v2137 = vpack.c.bf16 %v2130, %v2129
        %v2138 = vpack.c.bf16 %v2132, %v2131
        %v2139 = vpack.c.bf16 %v2134, %v2133
        %v2140 = vpack.c.bf16 %v2136, %v2135
        %2141 = vst [vmem:[#allocation3 + $0x40] sm:$0xff] %v2137
        %2142 = vst [vmem:[#allocation3 + $0x48] sm:$0xff] %v2138
        %2143 = vst [vmem:[#allocation3 + $0x50] sm:$0xff] %v2139
        %2144 = vst [vmem:[#allocation3 + $0x58] sm:$0xff] %v2140
        %2145 = vrot.lane.b32.xlu0 %v2017, 1
        %v2146 = vpop.permute.xlu0 %2145
        %2147 = vrot.lane.b32.xlu0 %v2019, 1
        %v2148 = vpop.permute.xlu0 %2147
        %2149 = vrot.lane.b32.xlu0 %v2021, 1
        %v2150 = vpop.permute.xlu0 %2149
        %2151 = vrot.lane.b32.xlu0 %v2023, 1
        %v2152 = vpop.permute.xlu0 %2151
        %2153 = vrot.lane.b32.xlu0 %v2018, 1
        %v2154 = vpop.permute.xlu0 %2153
        %2155 = vrot.lane.b32.xlu0 %v2020, 1
        %v2156 = vpop.permute.xlu0 %2155
        %2157 = vrot.lane.b32.xlu0 %v2022, 1
        %v2158 = vpop.permute.xlu0 %2157
        %2159 = vrot.lane.b32.xlu0 %v2024, 1
        %v2160 = vpop.permute.xlu0 %2159
        %v2161 = vsel %vm522, %v2146, %v2154
        %v2162 = vsel %vm522, %v2148, %v2156
        %v2163 = vsel %vm522, %v2150, %v2158
        %v2164 = vsel %vm522, %v2152, %v2160
        %v2165 = vsel %vm522, %v2154, %v2146
        %v2166 = vsel %vm522, %v2156, %v2148
        %v2167 = vsel %vm522, %v2158, %v2150
        %v2168 = vsel %vm522, %v2160, %v2152
        %v2169 = vsel %vm538, %v2165, 0.0
        %v2170 = vsel %vm539, %v2161, 0.0
        %v2171 = vsel %vm538, %v2166, 0.0
        %v2172 = vsel %vm539, %v2162, 0.0
        %v2173 = vsel %vm538, %v2167, 0.0
        %v2174 = vsel %vm539, %v2163, 0.0
        %v2175 = vsel %vm538, %v2168, 0.0
        %v2176 = vsel %vm539, %v2164, 0.0
        %v2177 = vpack.c.bf16 %v2170, %v2169
        %v2178 = vpack.c.bf16 %v2172, %v2171
        %v2179 = vpack.c.bf16 %v2174, %v2173
        %v2180 = vpack.c.bf16 %v2176, %v2175
        %2181 = vst [vmem:[#allocation3 + $0x60] sm:$0xff] %v2177
        %2182 = vst [vmem:[#allocation3 + $0x68] sm:$0xff] %v2178
        %2183 = vst [vmem:[#allocation3 + $0x70] sm:$0xff] %v2179
        %2184 = vst [vmem:[#allocation3 + $0x78] sm:$0xff] %v2180
        %v2185 = vpack.c.bf16 %v2018, %v2017
        %v2186 = vpack.c.bf16 %v2020, %v2019
        %v2187 = vpack.c.bf16 %v2022, %v2021
        %v2188 = vpack.c.bf16 %v2024, %v2023
        %2189 = vst [vmem:[#allocation3 + $0x80] sm:$0xff] %v2185
        %2190 = vst [vmem:[#allocation3 + $0x88] sm:$0xff] %v2186
        %2191 = vst [vmem:[#allocation3 + $0x90] sm:$0xff] %v2187
        %2192 = vst [vmem:[#allocation3 + $0x98] sm:$0xff] %v2188
        %2193 = vrot.lane.b32.xlu0 %v2017, 127
        %v2194 = vpop.permute.xlu0 %2193
        %2195 = vrot.lane.b32.xlu0 %v2019, 127
        %v2196 = vpop.permute.xlu0 %2195
        %2197 = vrot.lane.b32.xlu0 %v2021, 127
        %v2198 = vpop.permute.xlu0 %2197
        %2199 = vrot.lane.b32.xlu0 %v2023, 127
        %v2200 = vpop.permute.xlu0 %2199
        %2201 = vrot.lane.b32.xlu0 %v2018, 127
        %v2202 = vpop.permute.xlu0 %2201
        %2203 = vrot.lane.b32.xlu0 %v2020, 127
        %v2204 = vpop.permute.xlu0 %2203
        %2205 = vrot.lane.b32.xlu0 %v2022, 127
        %v2206 = vpop.permute.xlu0 %2205
        %2207 = vrot.lane.b32.xlu0 %v2024, 127
        %v2208 = vpop.permute.xlu0 %2207
        %v2209 = vsel %vm600, %v2194, %v2202
        %v2210 = vsel %vm600, %v2196, %v2204
        %v2211 = vsel %vm600, %v2198, %v2206
        %v2212 = vsel %vm600, %v2200, %v2208
        %v2213 = vsel %vm600, %v2202, %v2194
        %v2214 = vsel %vm600, %v2204, %v2196
        %v2215 = vsel %vm600, %v2206, %v2198
        %v2216 = vsel %vm600, %v2208, %v2200
        %v2217 = vsel %vm616, %v2209, 0.0
        %v2218 = vsel %vm617, %v2213, 0.0
        %v2219 = vsel %vm616, %v2210, 0.0
        %v2220 = vsel %vm617, %v2214, 0.0
        %v2221 = vsel %vm616, %v2211, 0.0
        %v2222 = vsel %vm617, %v2215, 0.0
        %v2223 = vsel %vm616, %v2212, 0.0
        %v2224 = vsel %vm617, %v2216, 0.0
        %v2225 = vpack.c.bf16 %v2218, %v2217
        %v2226 = vpack.c.bf16 %v2220, %v2219
        %v2227 = vpack.c.bf16 %v2222, %v2221
        %v2228 = vpack.c.bf16 %v2224, %v2223
        %2229 = vst [vmem:[#allocation3 + $0xa0] sm:$0xff] %v2225
        %2230 = vst [vmem:[#allocation3 + $0xa8] sm:$0xff] %v2226
        %2231 = vst [vmem:[#allocation3 + $0xb0] sm:$0xff] %v2227
        %2232 = vst [vmem:[#allocation3 + $0xb8] sm:$0xff] %v2228
        %2233 = vrot.lane.b32.xlu0 %v2017, 113
        %v2234 = vpop.permute.xlu0 %2233
        %2235 = vrot.lane.b32.xlu0 %v2019, 113
        %v2236 = vpop.permute.xlu0 %2235
        %2237 = vrot.lane.b32.xlu0 %v2021, 113
        %v2238 = vpop.permute.xlu0 %2237
        %2239 = vrot.lane.b32.xlu0 %v2023, 113
        %v2240 = vpop.permute.xlu0 %2239
        %2241 = vrot.lane.b32.xlu0 %v2018, 113
        %v2242 = vpop.permute.xlu0 %2241
        %2243 = vrot.lane.b32.xlu0 %v2020, 113
        %v2244 = vpop.permute.xlu0 %2243
        %2245 = vrot.lane.b32.xlu0 %v2022, 113
        %v2246 = vpop.permute.xlu0 %2245
        %2247 = vrot.lane.b32.xlu0 %v2024, 113
        %v2248 = vpop.permute.xlu0 %2247
        %v2249 = vsel %vm666, %v2234, %v2242
        %v2250 = vsel %vm666, %v2236, %v2244
        %v2251 = vsel %vm666, %v2238, %v2246
        %v2252 = vsel %vm666, %v2240, %v2248
        %v2253 = vsel %vm666, %v2242, %v2234
        %v2254 = vsel %vm666, %v2244, %v2236
        %v2255 = vsel %vm666, %v2246, %v2238
        %v2256 = vsel %vm666, %v2248, %v2240
        %v2257 = vsel %vm682, %v2249, 0.0
        %v2258 = vsel %vm683, %v2253, 0.0
        %v2259 = vsel %vm682, %v2250, 0.0
        %v2260 = vsel %vm683, %v2254, 0.0
        %v2261 = vsel %vm682, %v2251, 0.0
        %v2262 = vsel %vm683, %v2255, 0.0
        %v2263 = vsel %vm682, %v2252, 0.0
        %v2264 = vsel %vm683, %v2256, 0.0
        %v2265 = vpack.c.bf16 %v2258, %v2257
        %v2266 = vpack.c.bf16 %v2260, %v2259
        %v2267 = vpack.c.bf16 %v2262, %v2261
        %v2268 = vpack.c.bf16 %v2264, %v2263
        %2269 = vst [vmem:[#allocation3 + $0xc0] sm:$0xff] %v2265
        %2270 = vst [vmem:[#allocation3 + $0xc8] sm:$0xff] %v2266
        %2271 = vst [vmem:[#allocation3 + $0xd0] sm:$0xff] %v2267
        %2272 = vst [vmem:[#allocation3 + $0xd8] sm:$0xff] %v2268
        %2273 = vrot.lane.b32.xlu0 %v2017, 112
        %v2274 = vpop.permute.xlu0 %2273
        %2275 = vrot.lane.b32.xlu0 %v2019, 112
        %v2276 = vpop.permute.xlu0 %2275
        %2277 = vrot.lane.b32.xlu0 %v2021, 112
        %v2278 = vpop.permute.xlu0 %2277
        %2279 = vrot.lane.b32.xlu0 %v2023, 112
        %v2280 = vpop.permute.xlu0 %2279
        %2281 = vrot.lane.b32.xlu0 %v2018, 112
        %v2282 = vpop.permute.xlu0 %2281
        %2283 = vrot.lane.b32.xlu0 %v2020, 112
        %v2284 = vpop.permute.xlu0 %2283
        %2285 = vrot.lane.b32.xlu0 %v2022, 112
        %v2286 = vpop.permute.xlu0 %2285
        %2287 = vrot.lane.b32.xlu0 %v2024, 112
        %v2288 = vpop.permute.xlu0 %2287
        %v2289 = vsel %vm732, %v2274, %v2282
        %v2290 = vsel %vm732, %v2276, %v2284
        %v2291 = vsel %vm732, %v2278, %v2286
        %v2292 = vsel %vm732, %v2280, %v2288
        %v2293 = vsel %vm732, %v2282, %v2274
        %v2294 = vsel %vm732, %v2284, %v2276
        %v2295 = vsel %vm732, %v2286, %v2278
        %v2296 = vsel %vm732, %v2288, %v2280
        %v2297 = vsel %vm748, %v2289, 0.0
        %v2298 = vsel %vm749, %v2293, 0.0
        %v2299 = vsel %vm748, %v2290, 0.0
        %v2300 = vsel %vm749, %v2294, 0.0
        %v2301 = vsel %vm748, %v2291, 0.0
        %v2302 = vsel %vm749, %v2295, 0.0
        %v2303 = vsel %vm748, %v2292, 0.0
        %v2304 = vsel %vm749, %v2296, 0.0
        %v2305 = vpack.c.bf16 %v2298, %v2297
        %v2306 = vpack.c.bf16 %v2300, %v2299
        %v2307 = vpack.c.bf16 %v2302, %v2301
        %v2308 = vpack.c.bf16 %v2304, %v2303
        %2309 = vst [vmem:[#allocation3 + $0xe0] sm:$0xff] %v2305
        %2310 = vst [vmem:[#allocation3 + $0xe8] sm:$0xff] %v2306
        %2311 = vst [vmem:[#allocation3 + $0xf0] sm:$0xff] %v2307
        %2312 = vst [vmem:[#allocation3 + $0xf8] sm:$0xff] %v2308
        %2313 = vrot.lane.b32.xlu0 %v2017, 111
        %v2314 = vpop.permute.xlu0 %2313
        %2315 = vrot.lane.b32.xlu0 %v2019, 111
        %v2316 = vpop.permute.xlu0 %2315
        %2317 = vrot.lane.b32.xlu0 %v2021, 111
        %v2318 = vpop.permute.xlu0 %2317
        %2319 = vrot.lane.b32.xlu0 %v2023, 111
        %v2320 = vpop.permute.xlu0 %2319
        %2321 = vrot.lane.b32.xlu0 %v2018, 111
        %v2322 = vpop.permute.xlu0 %2321
        %2323 = vrot.lane.b32.xlu0 %v2020, 111
        %v2324 = vpop.permute.xlu0 %2323
        %2325 = vrot.lane.b32.xlu0 %v2022, 111
        %v2326 = vpop.permute.xlu0 %2325
        %2327 = vrot.lane.b32.xlu0 %v2024, 111
        %v2328 = vpop.permute.xlu0 %2327
        %v2329 = vsel %vm798, %v2314, %v2322
        %v2330 = vsel %vm798, %v2316, %v2324
        %v2331 = vsel %vm798, %v2318, %v2326
        %v2332 = vsel %vm798, %v2320, %v2328
        %v2333 = vsel %vm798, %v2322, %v2314
        %v2334 = vsel %vm798, %v2324, %v2316
        %v2335 = vsel %vm798, %v2326, %v2318
        %v2336 = vsel %vm798, %v2328, %v2320
        %v2337 = vsel %vm814, %v2329, 0.0
        %v2338 = vsel %vm815, %v2333, 0.0
        %v2339 = vsel %vm814, %v2330, 0.0
        %v2340 = vsel %vm815, %v2334, 0.0
        %v2341 = vsel %vm814, %v2331, 0.0
        %v2342 = vsel %vm815, %v2335, 0.0
        %v2343 = vsel %vm814, %v2332, 0.0
        %v2344 = vsel %vm815, %v2336, 0.0
        %v2345 = vpack.c.bf16 %v2338, %v2337
        %v2346 = vpack.c.bf16 %v2340, %v2339
        %v2347 = vpack.c.bf16 %v2342, %v2341
        %v2348 = vpack.c.bf16 %v2344, %v2343
        %2349 = vst [vmem:[#allocation3 + $0x100] sm:$0xff] %v2345
        %2350 = vst [vmem:[#allocation3 + $0x108] sm:$0xff] %v2346
        %2351 = vst [vmem:[#allocation3 + $0x110] sm:$0xff] %v2347
        %2352 = vst [vmem:[#allocation3 + $0x118] sm:$0xff] %v2348
        %v2353 = vld [vmem:[%s2] sm:$0xff]
        %v2354 = vld [vmem:[%s2 + $0x8] sm:$0xf]
        %v2355 = vld [vmem:[%s2 + $0xc] sm:$0xff]
        %v2356 = vld [vmem:[%s2 + $0x14] sm:$0xf]
        %v2357 = vld [vmem:[%s2 + $0x18] sm:$0xff]
        %v2358 = vld [vmem:[%s2 + $0x20] sm:$0xf]
        %v2359 = vld [vmem:[%s2 + $0x24] sm:$0xff]
        %v2360 = vld [vmem:[%s2 + $0x2c] sm:$0xf]
        %v2361 = vld [vmem:[#allocation3] sm:$0xff]
        %v2362 = vld [vmem:[#allocation3 + $0x8] sm:$0xff]
        %v2363 = vld [vmem:[#allocation3 + $0x10] sm:$0xff]
        %v2364 = vld [vmem:[#allocation3 + $0x18] sm:$0xff]
        %v2365 = vld [vmem:[#allocation3 + $0x20] sm:$0xff]
        %v2366 = vld [vmem:[#allocation3 + $0x28] sm:$0xff]
        %v2367 = vld [vmem:[#allocation3 + $0x30] sm:$0xff]
        %v2368 = vld [vmem:[#allocation3 + $0x38] sm:$0xff]
        %v2369 = vld [vmem:[#allocation3 + $0x40] sm:$0xff]
        %v2370 = vld [vmem:[#allocation3 + $0x48] sm:$0xff]
        %v2371 = vld [vmem:[#allocation3 + $0x50] sm:$0xff]
        %v2372 = vld [vmem:[#allocation3 + $0x58] sm:$0xff]
        %v2373 = vld [vmem:[#allocation3 + $0x60] sm:$0xff]
        %v2374 = vld [vmem:[#allocation3 + $0x68] sm:$0xff]
        %v2375 = vld [vmem:[#allocation3 + $0x70] sm:$0xff]
        %v2376 = vld [vmem:[#allocation3 + $0x78] sm:$0xff]
        %v2377 = vld [vmem:[#allocation3 + $0x80] sm:$0xff]
        %v2378 = vld [vmem:[#allocation3 + $0x88] sm:$0xff]
        %v2379 = vld [vmem:[#allocation3 + $0x90] sm:$0xff]
        %v2380 = vld [vmem:[#allocation3 + $0x98] sm:$0xff]
        %v2381 = vld [vmem:[#allocation3 + $0xa0] sm:$0xff]
        %v2382 = vld [vmem:[#allocation3 + $0xa8] sm:$0xff]
        %v2383 = vld [vmem:[#allocation3 + $0xb0] sm:$0xff]
        %v2384 = vld [vmem:[#allocation3 + $0xb8] sm:$0xff]
        %v2385 = vld [vmem:[#allocation3 + $0xc0] sm:$0xff]
        %v2386 = vld [vmem:[#allocation3 + $0xc8] sm:$0xff]
        %v2387 = vld [vmem:[#allocation3 + $0xd0] sm:$0xff]
        %v2388 = vld [vmem:[#allocation3 + $0xd8] sm:$0xff]
        %v2389 = vld [vmem:[#allocation3 + $0xe0] sm:$0xff]
        %v2390 = vld [vmem:[#allocation3 + $0xe8] sm:$0xff]
        %v2391 = vld [vmem:[#allocation3 + $0xf0] sm:$0xff]
        %v2392 = vld [vmem:[#allocation3 + $0xf8] sm:$0xff]
        %v2393 = vld [vmem:[#allocation3 + $0x100] sm:$0xff]
        %v2394 = vld [vmem:[#allocation3 + $0x108] sm:$0xff]
        %v2395 = vld [vmem:[#allocation3 + $0x110] sm:$0xff]
        %v2396 = vld [vmem:[#allocation3 + $0x118] sm:$0xff]
        %v2405 = vunpack.c.l.b16 %v2353
        %v2406 = vunpack.c.h.b16 %v2353
        %v2407 = vunpack.c.l.b16 %v2354
        %v2408 = vunpack.c.l.b16 %v2355
        %v2409 = vunpack.c.h.b16 %v2355
        %v2410 = vunpack.c.l.b16 %v2356
        %v2411 = vunpack.c.l.b16 %v2357
        %v2412 = vunpack.c.h.b16 %v2357
        %v2413 = vunpack.c.l.b16 %v2358
        %v2414 = vunpack.c.l.b16 %v2359
        %v2415 = vunpack.c.h.b16 %v2359
        %v2416 = vunpack.c.l.b16 %v2360
        %v2417 = vpack.c.b16 %v2408, %v2405
        %v2418 = vpack.c.b16 %v2409, %v2406
        %v2419 = vpack.c.b16 %v2410, %v2407
        %v2420 = vpack.c.b16 %v2414, %v2411
        %v2421 = vpack.c.b16 %v2415, %v2412
        %v2422 = vpack.c.b16 %v2416, %v2413
        %v2463 = vunpack.c.l.b16 %v2361
        %v2464 = vunpack.c.h.b16 %v2361
        %v2465 = vunpack.c.l.b16 %v2362
        %v2466 = vunpack.c.h.b16 %v2362
        %v2467 = vunpack.c.l.b16 %v2363
        %v2468 = vunpack.c.h.b16 %v2363
        %v2469 = vunpack.c.l.b16 %v2364
        %v2470 = vunpack.c.h.b16 %v2364
        %v2471 = vunpack.c.l.b16 %v2365
        %v2472 = vunpack.c.h.b16 %v2365
        %v2473 = vunpack.c.l.b16 %v2366
        %v2474 = vunpack.c.h.b16 %v2366
        %v2475 = vunpack.c.l.b16 %v2367
        %v2476 = vunpack.c.h.b16 %v2367
        %v2477 = vunpack.c.l.b16 %v2368
        %v2478 = vunpack.c.h.b16 %v2368
        %v2479 = vunpack.c.l.b16 %v2369
        %v2480 = vunpack.c.h.b16 %v2369
        %v2481 = vunpack.c.l.b16 %v2370
        %v2482 = vunpack.c.h.b16 %v2370
        %v2483 = vunpack.c.l.b16 %v2371
        %v2484 = vunpack.c.h.b16 %v2371
        %v2485 = vunpack.c.l.b16 %v2372
        %v2486 = vunpack.c.h.b16 %v2372
        %v2487 = vunpack.c.l.b16 %v2373
        %v2488 = vunpack.c.h.b16 %v2373
        %v2489 = vunpack.c.l.b16 %v2374
        %v2490 = vunpack.c.h.b16 %v2374
        %v2491 = vunpack.c.l.b16 %v2375
        %v2492 = vunpack.c.h.b16 %v2375
        %v2493 = vunpack.c.l.b16 %v2376
        %v2494 = vunpack.c.h.b16 %v2376
        %v2495 = vunpack.c.l.b16 %v2377
        %v2496 = vunpack.c.h.b16 %v2377
        %v2497 = vunpack.c.l.b16 %v2378
        %v2498 = vunpack.c.h.b16 %v2378
        %v2499 = vunpack.c.l.b16 %v2379
        %v2500 = vunpack.c.h.b16 %v2379
        %v2501 = vunpack.c.l.b16 %v2380
        %v2502 = vunpack.c.h.b16 %v2380
        %v2503 = vunpack.c.l.b16 %v2381
        %v2504 = vunpack.c.h.b16 %v2381
        %v2505 = vunpack.c.l.b16 %v2382
        %v2506 = vunpack.c.h.b16 %v2382
        %v2507 = vunpack.c.l.b16 %v2383
        %v2508 = vunpack.c.h.b16 %v2383
        %v2509 = vunpack.c.l.b16 %v2384
        %v2510 = vunpack.c.h.b16 %v2384
        %v2511 = vunpack.c.l.b16 %v2385
        %v2512 = vunpack.c.h.b16 %v2385
        %v2513 = vunpack.c.l.b16 %v2386
        %v2514 = vunpack.c.h.b16 %v2386
        %v2515 = vunpack.c.l.b16 %v2387
        %v2516 = vunpack.c.h.b16 %v2387
        %v2517 = vunpack.c.l.b16 %v2388
        %v2518 = vunpack.c.h.b16 %v2388
        %v2519 = vunpack.c.l.b16 %v2389
        %v2520 = vunpack.c.h.b16 %v2389
        %v2521 = vunpack.c.l.b16 %v2390
        %v2522 = vunpack.c.h.b16 %v2390
        %v2523 = vunpack.c.l.b16 %v2391
        %v2524 = vunpack.c.h.b16 %v2391
        %v2525 = vunpack.c.l.b16 %v2392
        %v2526 = vunpack.c.h.b16 %v2392
        %v2527 = vunpack.c.l.b16 %v2393
        %v2528 = vunpack.c.h.b16 %v2393
        %v2529 = vunpack.c.l.b16 %v2394
        %v2530 = vunpack.c.h.b16 %v2394
        %v2531 = vunpack.c.l.b16 %v2395
        %v2532 = vunpack.c.h.b16 %v2395
        %v2533 = vunpack.c.l.b16 %v2396
        %v2534 = vunpack.c.h.b16 %v2396
        %v2535 = vpack.c.b16 %v2465, %v2463
        %v2536 = vpack.c.b16 %v2466, %v2464
        %v2537 = vpack.c.b16 %v2469, %v2467
        %v2538 = vpack.c.b16 %v2470, %v2468
        %v2539 = vpack.c.b16 %v2473, %v2471
        %v2540 = vpack.c.b16 %v2474, %v2472
        %v2541 = vpack.c.b16 %v2477, %v2475
        %v2542 = vpack.c.b16 %v2478, %v2476
        %v2543 = vpack.c.b16 %v2481, %v2479
        %v2544 = vpack.c.b16 %v2482, %v2480
        %v2545 = vpack.c.b16 %v2485, %v2483
        %v2546 = vpack.c.b16 %v2486, %v2484
        %v2547 = vpack.c.b16 %v2489, %v2487
        %v2548 = vpack.c.b16 %v2490, %v2488
        %v2549 = vpack.c.b16 %v2493, %v2491
        %v2550 = vpack.c.b16 %v2494, %v2492
        %v2551 = vpack.c.b16 %v2497, %v2495
        %v2552 = vpack.c.b16 %v2498, %v2496
        %v2553 = vpack.c.b16 %v2501, %v2499
        %v2554 = vpack.c.b16 %v2502, %v2500
        %v2555 = vpack.c.b16 %v2505, %v2503
        %v2556 = vpack.c.b16 %v2506, %v2504
        %v2557 = vpack.c.b16 %v2509, %v2507
        %v2558 = vpack.c.b16 %v2510, %v2508
        %v2559 = vpack.c.b16 %v2513, %v2511
        %v2560 = vpack.c.b16 %v2514, %v2512
        %v2561 = vpack.c.b16 %v2517, %v2515
        %v2562 = vpack.c.b16 %v2518, %v2516
        %v2563 = vpack.c.b16 %v2521, %v2519
        %v2564 = vpack.c.b16 %v2522, %v2520
        %v2565 = vpack.c.b16 %v2525, %v2523
        %v2566 = vpack.c.b16 %v2526, %v2524
        %v2567 = vpack.c.b16 %v2529, %v2527
        %v2568 = vpack.c.b16 %v2530, %v2528
        %v2569 = vpack.c.b16 %v2533, %v2531
        %v2570 = vpack.c.b16 %v2534, %v2532
        %vm2607 = vcmask 261120
        %v2609 = vsel %vm2607, %v2419, 0
        %v2612 = vsel %vm2607, %v2422, 0
        %2614 = vmatpush.bf16.msra.mxu0 %v2549
        %2615 = vmatpush.bf16.msra.mxu0 %v2547
        %2616 = vmatpush.bf16.msra.mxu0 %v2545
        %2617 = vmatpush.bf16.msra.mxu0 %v2543
        %2618 = vmatpush.bf16.msra.mxu0 %v2541
        %2619 = vmatpush.bf16.msra.mxu0 %v2539
        %2620 = vmatpush.bf16.msra.mxu0 %v2537
        %2621 = vmatpush.bf16.msra.mxu0 %v2535
        %2622 = vmatmul.bf16.gmra.mxu0 %v2417
        %v2623 = vpop.f32.mrf.mxu0
        %v2624 = vadd.f32 0.0, %v2623
        %v2625 = vpop.f32.mrf.mxu0
        %v2626 = vadd.f32 0.0, %v2625
        %2627 = vmatmul.bf16.gmra.mxu0 %v2420
        %v2628 = vpop.f32.mrf.mxu0
        %v2629 = vadd.f32 0.0, %v2628
        %v2630 = vpop.f32.mrf.mxu0
        %v2631 = vadd.f32 0.0, %v2630
        %2632 = vdwg.mxu0
        %2633 = vmatpush.bf16.msra.mxu0 %v2565
        %2634 = vmatpush.bf16.msra.mxu0 %v2563
        %2635 = vmatpush.bf16.msra.mxu0 %v2561
        %2636 = vmatpush.bf16.msra.mxu0 %v2559
        %2637 = vmatpush.bf16.msra.mxu0 %v2557
        %2638 = vmatpush.bf16.msra.mxu0 %v2555
        %2639 = vmatpush.bf16.msra.mxu0 %v2553
        %2640 = vmatpush.bf16.msra.mxu0 %v2551
        %2641 = vmatmul.bf16.gmra.mxu0 %v2418
        %v2642 = vpop.f32.mrf.mxu0
        %v2643 = vadd.f32 %v2624, %v2642
        %v2644 = vpop.f32.mrf.mxu0
        %v2645 = vadd.f32 %v2626, %v2644
        %2646 = vmatmul.bf16.gmra.mxu0 %v2421
        %v2647 = vpop.f32.mrf.mxu0
        %v2648 = vadd.f32 %v2629, %v2647
        %v2649 = vpop.f32.mrf.mxu0
        %v2650 = vadd.f32 %v2631, %v2649
        %2651 = vdwg.mxu0
        %2652 = vmatpush.bf16.msra.mxu0 0
        %2653 = vmatpush.bf16.msra.mxu0 0
        %2654 = vmatpush.bf16.msra.mxu0 0
        %2655 = vmatpush.bf16.msra.mxu0 0
        %2656 = vmatpush.bf16.msra.mxu0 0
        %2657 = vmatpush.bf16.msra.mxu0 0
        %2658 = vmatpush.bf16.msra.mxu0 %v2569
        %2659 = vmatpush.bf16.msra.mxu0 %v2567
        %2660 = vmatmul.bf16.gmra.mxu0 %v2609
        %v2661 = vpop.f32.mrf.mxu0
        %v2662 = vadd.f32 %v2643, %v2661
        %v2663 = vpop.f32.mrf.mxu0
        %v2664 = vadd.f32 %v2645, %v2663
        %2665 = vmatmul.bf16.gmra.mxu0 %v2612
        %v2666 = vpop.f32.mrf.mxu0
        %v2667 = vadd.f32 %v2648, %v2666
        %v2668 = vpop.f32.mrf.mxu0
        %v2669 = vadd.f32 %v2650, %v2668
        %2670 = vdwg.mxu0
        %2671 = vmatpush.bf16.msra.mxu0 %v2550
        %2672 = vmatpush.bf16.msra.mxu0 %v2548
        %2673 = vmatpush.bf16.msra.mxu0 %v2546
        %2674 = vmatpush.bf16.msra.mxu0 %v2544
        %2675 = vmatpush.bf16.msra.mxu0 %v2542
        %2676 = vmatpush.bf16.msra.mxu0 %v2540
        %2677 = vmatpush.bf16.msra.mxu0 %v2538
        %2678 = vmatpush.bf16.msra.mxu0 %v2536
        %2679 = vmatmul.bf16.gmra.mxu0 %v2417
        %v2680 = vpop.f32.mrf.mxu0
        %v2681 = vadd.f32 0.0, %v2680
        %v2682 = vpop.f32.mrf.mxu0
        %v2683 = vadd.f32 0.0, %v2682
        %2684 = vmatmul.bf16.gmra.mxu0 %v2420
        %v2685 = vpop.f32.mrf.mxu0
        %v2686 = vadd.f32 0.0, %v2685
        %v2687 = vpop.f32.mrf.mxu0
        %v2688 = vadd.f32 0.0, %v2687
        %2689 = vdwg.mxu0
        %2690 = vmatpush.bf16.msra.mxu0 %v2566
        %2691 = vmatpush.bf16.msra.mxu0 %v2564
        %2692 = vmatpush.bf16.msra.mxu0 %v2562
        %2693 = vmatpush.bf16.msra.mxu0 %v2560
        %2694 = vmatpush.bf16.msra.mxu0 %v2558
        %2695 = vmatpush.bf16.msra.mxu0 %v2556
        %2696 = vmatpush.bf16.msra.mxu0 %v2554
        %2697 = vmatpush.bf16.msra.mxu0 %v2552
        %2698 = vmatmul.bf16.gmra.mxu0 %v2418
        %v2699 = vpop.f32.mrf.mxu0
        %v2700 = vadd.f32 %v2681, %v2699
        %v2701 = vpop.f32.mrf.mxu0
        %v2702 = vadd.f32 %v2683, %v2701
        %2703 = vmatmul.bf16.gmra.mxu0 %v2421
        %v2704 = vpop.f32.mrf.mxu0
        %v2705 = vadd.f32 %v2686, %v2704
        %v2706 = vpop.f32.mrf.mxu0
        %v2707 = vadd.f32 %v2688, %v2706
        %2708 = vdwg.mxu0
        %2709 = vmatpush.bf16.msra.mxu0 0
        %2710 = vmatpush.bf16.msra.mxu0 0
        %2711 = vmatpush.bf16.msra.mxu0 0
        %2712 = vmatpush.bf16.msra.mxu0 0
        %2713 = vmatpush.bf16.msra.mxu0 0
        %2714 = vmatpush.bf16.msra.mxu0 0
        %2715 = vmatpush.bf16.msra.mxu0 %v2570
        %2716 = vmatpush.bf16.msra.mxu0 %v2568
        %2717 = vmatmul.bf16.gmra.mxu0 %v2609
        %v2718 = vpop.f32.mrf.mxu0
        %v2719 = vadd.f32 %v2700, %v2718
        %v2720 = vpop.f32.mrf.mxu0
        %v2721 = vadd.f32 %v2702, %v2720
        %2722 = vmatmul.bf16.gmra.mxu0 %v2612
        %v2723 = vpop.f32.mrf.mxu0
        %v2724 = vadd.f32 %v2705, %v2723
        %v2725 = vpop.f32.mrf.mxu0
        %v2726 = vadd.f32 %v2707, %v2725
        %2727 = vdwg.mxu0
        %v2728 = vadd.f32 %v1540, %v2662
        %v2729 = vadd.f32 %v1696, %v2719
        %v2730 = vadd.f32 %v1542, %v2664
        %v2731 = vadd.f32 %v1698, %v2721
        %v2732 = vadd.f32 %v1545, %v2667
        %v2733 = vadd.f32 %v1701, %v2724
        %v2734 = vadd.f32 %v1547, %v2669
        %v2735 = vadd.f32 %v1703, %v2726
        %v2736 = vtanh.pop %v2728
        %v2737 = vtanh.pop %v2729
        %v2738 = vtanh.pop %v2730
        %v2739 = vtanh.pop %v2731
        %v2740 = vtanh.pop %v2732
        %v2741 = vtanh.pop %v2733
        %v2742 = vtanh.pop %v2734
        %v2743 = vtanh.pop %v2735
        %v2744 = vld [vmem:[%s229] sm:$0xff]
        %v2745 = vld [vmem:[%s229 + $0x8] sm:$0xff]
        %v2746 = vld [vmem:[%s229 + $0x10] sm:$0xff]
        %v2747 = vld [vmem:[%s229 + $0x18] sm:$0xff]
        %v2748 = vld [vmem:[%s229 + $0x20] sm:$0xff]
        %v2749 = vld [vmem:[%s229 + $0x28] sm:$0xff]
        %v2750 = vld [vmem:[%s229 + $0x30] sm:$0xff]
        %v2751 = vld [vmem:[%s229 + $0x38] sm:$0xff]
        %v2752 = vsub.f32 1.0, %v1751
        %v2753 = vsub.f32 1.0, %v1766
        %v2754 = vsub.f32 1.0, %v1781
        %v2755 = vsub.f32 1.0, %v1796
        %v2756 = vsub.f32 1.0, %v1811
        %v2757 = vsub.f32 1.0, %v1826
        %v2758 = vsub.f32 1.0, %v1841
        %v2759 = vsub.f32 1.0, %v1856
        %v2760 = vmul.f32 %v2744, %v2752
        %v2761 = vmul.f32 %v2745, %v2753
        %v2762 = vmul.f32 %v2746, %v2754
        %v2763 = vmul.f32 %v2747, %v2755
        %v2764 = vmul.f32 %v2748, %v2756
        %v2765 = vmul.f32 %v2749, %v2757
        %v2766 = vmul.f32 %v2750, %v2758
        %v2767 = vmul.f32 %v2751, %v2759
        %v2768 = vmul.f32 %v2736, %v1751
        %v2769 = vmul.f32 %v2737, %v1766
        %v2770 = vmul.f32 %v2738, %v1781
        %v2771 = vmul.f32 %v2739, %v1796
        %v2772 = vmul.f32 %v2740, %v1811
        %v2773 = vmul.f32 %v2741, %v1826
        %v2774 = vmul.f32 %v2742, %v1841
        %v2775 = vmul.f32 %v2743, %v1856
        %v2776 = vadd.f32 %v2760, %v2768
        %v2777 = vadd.f32 %v2761, %v2769
        %v2778 = vadd.f32 %v2762, %v2770
        %v2779 = vadd.f32 %v2763, %v2771
        %v2780 = vadd.f32 %v2764, %v2772
        %v2781 = vadd.f32 %v2765, %v2773
        %v2782 = vadd.f32 %v2766, %v2774
        %v2783 = vadd.f32 %v2767, %v2775
        %2784 = vst [vmem:[%s261] sm:$0xff] %v2776
        %2785 = vst [vmem:[%s261 + $0x8] sm:$0xff] %v2777
        %2786 = vst [vmem:[%s261 + $0x10] sm:$0xff] %v2778
        %2787 = vst [vmem:[%s261 + $0x18] sm:$0xff] %v2779
        %2788 = vst [vmem:[%s261 + $0x20] sm:$0xff] %v2780
        %2789 = vst [vmem:[%s261 + $0x28] sm:$0xff] %v2781
        %2790 = vst [vmem:[%s261 + $0x30] sm:$0xff] %v2782
        %2791 = vst [vmem:[%s261 + $0x38] sm:$0xff] %v2783
        %s2792 = sand.u32 %s141, 1
        %s2793 = scalar_lea.sflag [#allocation6], %s2792
        %s2794 = sand.u32 %s141, 1
        %s2795 = smul.addr %s2794, 64
        %s2796 = scalar_lea.vmem [#allocation9], %s2795
        // Predicated region
        $region49: #{tpu_custom_call.1} parent=39 // pred_check
          %p2797 = pneg %p151
        $region50: #{tpu_custom_call.1} parent=39 // pred_check_branch
          %2799 = sbr.rel (%p2797) target = $region52
        $region51: #{tpu_custom_call.1} parent=39 // pred_region
          %2801 = vsyncadd %s2793, 0
          %s2802 = smul.addr %s23, 8
          %s2803 = smul.addr %s2802, 8
          %s2804 = scalar_lea.hbm %s5, %s2803
          %s2805 = sshll.u32 %s2796, 4
          %s2806 = int_to_ptr.vmem [resolvable:$true] %s2805
          %s2807 = sshll.u32 %s2804, 4
          %s2808 = int_to_ptr.hbm [resolvable:$true] %s2807
          %2813 = dma.vmem_to_hbm [thread:$0]  %s2806, 1024, %s2808, %s2793, 256, 256, 16
        $region52: #{tpu_custom_call.1} parent=39 // pred_fallthru
          _
      $region40: #{tpu_custom_call.1} parent=5 // pred_fallthru
        _
      %p2814 = scmp.le.s32.totalorder 2, %s18
      // Predicated region
      $region53: #{tpu_custom_call.1} parent=5 // pred_check
        %p2815 = pneg %p2814
      $region54: #{tpu_custom_call.1} parent=5 // pred_check_branch
        %2817 = sbr.rel (%p2815) target = $region56
      $region55: #{tpu_custom_call.1} parent=5 // pred_region
        %s2818 = ssub.s32 %s18, 2
        // Predicated region
        $region57: #{tpu_custom_call.1} parent=55 // pred_check
          %p2819 = pneg %p157
        $region58: #{tpu_custom_call.1} parent=55 // pred_check_branch
          %2821 = sbr.rel (%p2819) target = $region60
        $region59: #{tpu_custom_call.1} parent=55 // pred_region
          %s2822 = sand.u32 %s142, 1
          %s2823 = scalar_lea.sflag [#allocation6], %s2822
          %s2824 = sand.u32 %s142, 1
          %s2825 = smul.addr %s2824, 64
          %s2826 = scalar_lea.vmem [#allocation9], %s2825
          %2828 = dma.done %s2823, 1024
        $region60: #{tpu_custom_call.1} parent=55 // pred_fallthru
          _
      $region56: #{tpu_custom_call.1} parent=5 // pred_fallthru
        _
    $region6: #{tpu_custom_call.1} parent=1 // loop_footer
      %s22 = sadd.s32 1, %s18
    $region7: #{tpu_custom_call.1} parent=1 // loop_footer_branch
      %17 = sbr.rel target = $region3
    $region8: #{tpu_custom_call.1} parent=1 // loop_exit
      _
    %2829 = vsyncpa [#allocation5], 1
    %s2830 = scalar_lea.sflag [#allocation5], 1
    %2831 = vsyncpa %s2830, 1
    %2832 = vsyncpa [#allocation8], 1
    %2833 = vsyncpa [#allocation6], 1
    %s2834 = scalar_lea.sflag [#allocation6], 1
    %2835 = vsyncpa %s2834, 1

</llo_original>
